<compile_context>
chip_gen: v7x
topology: tpu7x:2x2x1
jax: 0.10.0
libtpu: 0.0.40
codegen_flags: <defaults>
</compile_context>

<pallas_src>
import functools
import math

import jax
import jax.numpy as jnp
from jax import lax
from jax.experimental import pallas as pl
from jax.experimental.pallas import tpu as pltpu

TEACHER_DIM = 512
HIDDEN_DIM = 2 * TEACHER_DIM
LOSS_LANES = 128  # lane-dense packed scalar-loss output width


# ----------------------------------------------------------------------------
# Kernel helpers (shared by all kernel variants)
# ----------------------------------------------------------------------------

def _vmem_spec():
    return pl.BlockSpec(memory_space=pltpu.MemorySpace.VMEM)


def _l2norm(x):
    # F.normalize(x, p=2, dim=-1): x / max(||x||, 1e-12).  Single EUP rsqrt.
    sumsq = jnp.sum(x * x, axis=-1, keepdims=True)
    return x * lax.rsqrt(jnp.maximum(sumsq, 1e-24))


def _mlp(x_ref, w1_ref, b1_ref, w2_ref, b2_ref):
    """Linear -> ReLU -> (Dropout: eval identity) -> Linear.

    x_ref and weights are bf16 (MXU-native); biases / accumulation are f32.
    """
    h = jnp.dot(x_ref[...], w1_ref[...], preferred_element_type=jnp.float32)
    h = jnp.maximum(h + b1_ref[...], 0.0)
    o = jnp.dot(h.astype(jnp.bfloat16), w2_ref[...],
                preferred_element_type=jnp.float32)
    return o + b2_ref[...]


def _student_projections(s_img_ref, s_txt_ref,
                         iw1, ib1, iw2, ib2, tw1, tb1, tw2, tb2):
    si = _mlp(s_img_ref, iw1, ib1, iw2, ib2)
    st = _mlp(s_txt_ref, tw1, tb1, tw2, tb2)
    return si, st


def _feature_losses(si_n, st_n, t_img, t_txt):
    ti_n = _l2norm(t_img)
    tt_n = _l2norm(t_txt)
    img_loss = jnp.mean(jnp.square(si_n - ti_n))
    txt_loss = jnp.mean(jnp.square(st_n - tt_n))
    return img_loss, txt_loss


def _response_loss(si_n, st_n, t_logits, temp, batch):
    # student_logits = (si_n @ st_n.T) * 100; both sides divided by temp =>
    # fold 100/temp into one scale.  Contract on the last dim of both operands
    # so no explicit transpose is materialized.
    scale = 100.0 / temp
    s = lax.dot_general(si_n, st_n, (((1,), (1,)), ((), ())),
                        preferred_element_type=jnp.float32) * scale
    t = t_logits * (1.0 / temp)

    s_shift = s - jnp.max(s, axis=-1, keepdims=True)
    s_logsm = s_shift - jnp.log(jnp.sum(jnp.exp(s_shift), axis=-1, keepdims=True))
    t_shift = t - jnp.max(t, axis=-1, keepdims=True)
    t_logsm = t_shift - jnp.log(jnp.sum(jnp.exp(t_shift), axis=-1, keepdims=True))
    t_sm = jnp.exp(t_logsm)

    # F.kl_div(log_softmax(s/T), softmax(t/T), 'batchmean') * T**2
    return jnp.sum(t_sm * (t_logsm - s_logsm)) * (temp * temp / batch)


def _pack_losses(losses_ref, img_loss, txt_loss, kl):
    lane = lax.broadcasted_iota(jnp.int32, (1, LOSS_LANES), 1)
    losses_ref[...] = (jnp.where(lane == 0, img_loss, 0.0)
                       + jnp.where(lane == 1, txt_loss, 0.0)
                       + jnp.where(lane == 2, kl, 0.0))


# ----------------------------------------------------------------------------
# Pallas kernels
# ----------------------------------------------------------------------------

def align_mlp_kernel(x_ref, w1_ref, b1_ref, w2_ref, b2_ref, o_ref):
    """Standalone align head (API parity with nn.Sequential img_align/txt_align).

    Prefer the fused path's img_proj/txt_proj outputs — calling these
    separately re-DMAs ~1.25 MB of weights per dispatch for a tiny output.
    """
    o_ref[...] = _mlp(x_ref, w1_ref, b1_ref, w2_ref, b2_ref)


def fused_kd_kernel(s_img_ref, s_txt_ref,
                    iw1, ib1, iw2, ib2, tw1, tb1, tw2, tb2,
                    t_img_ref, t_txt_ref, t_logits_ref,
                    img_proj_ref, txt_proj_ref, losses_ref, *, temp):
    """Both align MLPs + feature-KD MSE losses + response-KD KL in one call."""
    si, st = _student_projections(s_img_ref, s_txt_ref,
                                  iw1, ib1, iw2, ib2, tw1, tb1, tw2, tb2)
    img_proj_ref[...] = si
    txt_proj_ref[...] = st

    si_n = _l2norm(si)
    st_n = _l2norm(st)

    img_loss, txt_loss = _feature_losses(si_n, st_n, t_img_ref[...], t_txt_ref[...])
    kl = _response_loss(si_n, st_n, t_logits_ref[...], temp, s_img_ref.shape[0])
    _pack_losses(losses_ref, img_loss, txt_loss, kl)


def feature_kd_kernel(s_img_ref, s_txt_ref,
                      iw1, ib1, iw2, ib2, tw1, tb1, tw2, tb2,
                      t_img_ref, t_txt_ref, losses_ref):
    """Slim variant: align MLPs + MSE feature-distillation losses only."""
    si, st = _student_projections(s_img_ref, s_txt_ref,
                                  iw1, ib1, iw2, ib2, tw1, tb1, tw2, tb2)
    si_n = _l2norm(si)
    st_n = _l2norm(st)
    img_loss, txt_loss = _feature_losses(si_n, st_n, t_img_ref[...], t_txt_ref[...])
    _pack_losses(losses_ref, img_loss, txt_loss, 0.0)


def response_kd_kernel(s_img_ref, s_txt_ref,
                       iw1, ib1, iw2, ib2, tw1, tb1, tw2, tb2,
                       t_logits_ref, losses_ref, *, temp):
    """Slim variant: align MLPs + response-distillation KL only."""
    si, st = _student_projections(s_img_ref, s_txt_ref,
                                  iw1, ib1, iw2, ib2, tw1, tb1, tw2, tb2)
    si_n = _l2norm(si)
    st_n = _l2norm(st)
    kl = _response_loss(si_n, st_n, t_logits_ref[...], temp, s_img_ref.shape[0])
    _pack_losses(losses_ref, 0.0, 0.0, kl)


# ----------------------------------------------------------------------------
# Wrappers (each is a single pallas_call; all are jitted by the class below)
# ----------------------------------------------------------------------------

def align_mlp(x, w1, b1, w2, b2):
    b_sz = x.shape[0]
    d_out = w2.shape[1]
    return pl.pallas_call(
        align_mlp_kernel,
        out_shape=jax.ShapeDtypeStruct((b_sz, d_out), jnp.float32),
        in_specs=[_vmem_spec()] * 5,
        out_specs=_vmem_spec(),
    )(x.astype(jnp.bfloat16), w1, b1, w2, b2)


def fused_kd_losses(s_img, s_txt, params, t_img, t_txt, t_logits, *, temp):
    b_sz = s_img.shape[0]
    img_proj, txt_proj, losses = pl.pallas_call(
        functools.partial(fused_kd_kernel, temp=float(temp)),
        out_shape=(
            jax.ShapeDtypeStruct((b_sz, TEACHER_DIM), jnp.float32),
            jax.ShapeDtypeStruct((b_sz, TEACHER_DIM), jnp.float32),
            jax.ShapeDtypeStruct((1, LOSS_LANES), jnp.float32),
        ),
        in_specs=[_vmem_spec()] * 13,
        out_specs=(_vmem_spec(), _vmem_spec(), _vmem_spec()),
    )(s_img.astype(jnp.bfloat16), s_txt.astype(jnp.bfloat16), *params,
      t_img, t_txt, t_logits)
    return img_proj, txt_proj, losses[0, 0], losses[0, 1], losses[0, 2]


def feature_kd_losses(s_img, s_txt, params, t_img, t_txt):
    losses = pl.pallas_call(
        feature_kd_kernel,
        out_shape=jax.ShapeDtypeStruct((1, LOSS_LANES), jnp.float32),
        in_specs=[_vmem_spec()] * 12,
        out_specs=_vmem_spec(),
    )(s_img.astype(jnp.bfloat16), s_txt.astype(jnp.bfloat16), *params,
      t_img, t_txt)
    return losses[0, 0], losses[0, 1]


def response_kd_loss(s_img, s_txt, params, t_logits, *, temp):
    losses = pl.pallas_call(
        functools.partial(response_kd_kernel, temp=float(temp)),
        out_shape=jax.ShapeDtypeStruct((1, LOSS_LANES), jnp.float32),
        in_specs=[_vmem_spec()] * 11,
        out_specs=_vmem_spec(),
    )(s_img.astype(jnp.bfloat16), s_txt.astype(jnp.bfloat16), *params,
      t_logits)
    return losses[0, 2]


class MobileCLIPWithKDPallas:
    """JAX/Pallas port of MobileCLIPWithKD's KD heads and distillation losses."""

    TEACHER_DIM = TEACHER_DIM  # hard-coded in the PyTorch module

    def __init__(self, student_dim, distill_temperature=4.0, seed=0):
        self.student_dim = student_dim
        self.distill_temperature = float(distill_temperature)
        hidden = HIDDEN_DIM
        key = jax.random.PRNGKey(seed)
        ks = jax.random.split(key, 4)

        # kaiming_normal_(mode='fan_out', nonlinearity='relu') => std = sqrt(2/out_features)
        # Stored (in, out) row-major for x @ W; bf16 to halve weight DMA & use
        # the bf16 MXU.  Biases (and all accumulation / loss math) stay f32.
        def kaiming(k, d_in, d_out):
            w = jax.random.normal(k, (d_in, d_out), jnp.float32) * math.sqrt(2.0 / d_out)
            return w.astype(jnp.bfloat16)

        self.img_w1 = kaiming(ks[0], student_dim, hidden)
        self.img_b1 = jnp.zeros((1, hidden), jnp.float32)
        self.img_w2 = kaiming(ks[1], hidden, self.TEACHER_DIM)
        self.img_b2 = jnp.zeros((1, self.TEACHER_DIM), jnp.float32)
        self.txt_w1 = kaiming(ks[2], student_dim, hidden)
        self.txt_b1 = jnp.zeros((1, hidden), jnp.float32)
        self.txt_w2 = kaiming(ks[3], hidden, self.TEACHER_DIM)
        self.txt_b2 = jnp.zeros((1, self.TEACHER_DIM), jnp.float32)

        # Jitted dispatchers: the pallas_call + tiny scalar slices fuse into a
        # single executable (dominant wall-time lever at small B).
        t = self.distill_temperature
        self._fused_jit = jax.jit(functools.partial(fused_kd_losses, temp=t))
        self._feature_jit = jax.jit(feature_kd_losses)
        self._response_jit = jax.jit(functools.partial(response_kd_loss, temp=t))
        self._align_jit = jax.jit(align_mlp)

    def _params(self):
        return (self.img_w1, self.img_b1, self.img_w2, self.img_b2,
                self.txt_w1, self.txt_b1, self.txt_w2, self.txt_b2)

    # ---- standalone heads (API parity; prefer the fused path's projections) ----
    def img_align(self, x):
        return self._align_jit(x, self.img_w1, self.img_b1, self.img_w2, self.img_b2)

    def txt_align(self, x):
        return self._align_jit(x, self.txt_w1, self.txt_b1, self.txt_w2, self.txt_b2)

    # ---- primary fused path: one pallas_call for both MLPs and all losses ----
    def distillation_losses(self, s_img, s_txt, t_img, t_txt, teacher_logits):
        return self._fused_jit(s_img, s_txt, self._params(),
                               t_img, t_txt, teacher_logits)

    # ---- slim specialized paths (match PyTorch method signatures exactly) ----
    def feature_distillation_loss(self, s_img, s_txt, t_img, t_txt):
        return self._feature_jit(s_img, s_txt, self._params(), t_img, t_txt)

    def response_distillation_loss(self, s_img, s_txt, teacher_logits):
        return self._response_jit(s_img, s_txt, self._params(), teacher_logits)


# ----------------------------------------------------------------------------
# Main
# ----------------------------------------------------------------------------

if __name__ == "__main__":
    B = 4               # batch
    STUDENT_DIM = 128   # student_config['clip_model']['proj_dim']

    key = jax.random.PRNGKey(0)
    k1, k2, k3, k4 = jax.random.split(key, 4)

    # Synthetic student / teacher embeddings (backbones are external, see TODOs).
    student_image_embeds = jax.random.normal(k1, (B, STUDENT_DIM), jnp.float32)
    student_text_embeds = jax.random.normal(k2, (B, STUDENT_DIM), jnp.float32)
    teacher_image_embeds = jax.random.normal(k3, (B, TEACHER_DIM), jnp.float32)
    teacher_text_embeds = jax.random.normal(k4, (B, TEACHER_DIM), jnp.float32)

    # Teacher logits as the module builds them when shapes mismatch:
    # normalize(img) @ normalize(txt).T * 100
    t_img_n = teacher_image_embeds / jnp.maximum(
        jnp.linalg.norm(teacher_image_embeds, axis=-1, keepdims=True), 1e-12)
    t_txt_n = teacher_text_embeds / jnp.maximum(
        jnp.linalg.norm(teacher_text_embeds, axis=-1, keepdims=True), 1e-12)
    teacher_logits = t_img_n @ t_txt_n.T * 100.0

    model = MobileCLIPWithKDPallas(STUDENT_DIM, distill_temperature=4.0, seed=0)

    # Single fused call: projections computed once, feature + response KD together.
    img_proj, txt_proj, img_loss, txt_loss, kl_loss = model.distillation_losses(
        student_image_embeds, student_text_embeds,
        teacher_image_embeds, teacher_text_embeds, teacher_logits)
    jax.block_until_ready((img_proj, txt_proj, img_loss, txt_loss, kl_loss))

    # Slim specialized paths (PyTorch-signature parity, no dummy-input waste).
    f_img_loss, f_txt_loss = model.feature_distillation_loss(
        student_image_embeds, student_text_embeds,
        teacher_image_embeds, teacher_text_embeds)
    r_kl_loss = model.response_distillation_loss(
        student_image_embeds, student_text_embeds, teacher_logits)
    jax.block_until_ready((f_img_loss, f_txt_loss, r_kl_loss))

    # ---- pure-JAX reference (same bf16 weights) for a sanity check ----
    def ref_mlp(x, w1, b1, w2, b2):
        h = jnp.maximum(jnp.dot(x.astype(jnp.bfloat16), w1,
                                preferred_element_type=jnp.float32) + b1, 0.0)
        return jnp.dot(h.astype(jnp.bfloat16), w2,
                       preferred_element_type=jnp.float32) + b2

    def ref_norm(x):
        return x / jnp.maximum(jnp.linalg.norm(x, axis=-1, keepdims=True), 1e-12)

    ref_ip = ref_mlp(student_image_embeds, model.img_w1, model.img_b1,
                     model.img_w2, model.img_b2)
    ref_tp = ref_mlp(student_text_embeds, model.txt_w1, model.txt_b1,
                     model.txt_w2, model.txt_b2)
    si_n, st_n = ref_norm(ref_ip), ref_norm(ref_tp)
    ti_n, tt_n = ref_norm(teacher_image_embeds), ref_norm(teacher_text_embeds)
    ref_img_loss = jnp.mean((si_n - ti_n) ** 2)
    ref_txt_loss = jnp.mean((st_n - tt_n) ** 2)
    T = 4.0
    s_logsm = jax.nn.log_softmax(si_n @ st_n.T * 100.0 / T, axis=-1)
    t_logsm = jax.nn.log_softmax(teacher_logits / T, axis=-1)
    ref_kl = jnp.sum(jnp.exp(t_logsm) * (t_logsm - s_logsm)) / B * T * T

    assert img_proj.shape == (B, TEACHER_DIM) and txt_proj.shape == (B, TEACHER_DIM)
    assert img_loss.shape == () and txt_loss.shape == () and kl_loss.shape == ()
    assert bool(jnp.all(jnp.isfinite(img_proj))) and bool(jnp.all(jnp.isfinite(txt_proj)))
    for got, want in ((img_loss, ref_img_loss),
                      (txt_loss, ref_txt_loss),
                      (kl_loss, ref_kl),
                      (f_img_loss, ref_img_loss),
                      (f_txt_loss, ref_txt_loss),
                      (r_kl_loss, ref_kl)):
        assert bool(jnp.isfinite(got))
        assert abs(float(got) - float(want)) <= 1e-3 + 5e-2 * abs(float(want)), (got, want)
    assert bool(jnp.allclose(img_proj, ref_ip, rtol=2e-2, atol=1e-2))
    assert bool(jnp.allclose(txt_proj, ref_tp, rtol=2e-2, atol=1e-2))

    print("KERNEL_OK")
</pallas_src>

<mosaic_0001>
module attributes {stable_mosaic.version = 11 : i64} {
  func.func @fused_kd_kernel(%arg0: memref<4x128xbf16, #tpu.memory_space<vmem>>, %arg1: memref<4x128xbf16, #tpu.memory_space<vmem>>, %arg2: memref<128x1024xbf16, #tpu.memory_space<vmem>>, %arg3: memref<1x1024xf32, #tpu.memory_space<vmem>>, %arg4: memref<1024x512xbf16, #tpu.memory_space<vmem>>, %arg5: memref<1x512xf32, #tpu.memory_space<vmem>>, %arg6: memref<128x1024xbf16, #tpu.memory_space<vmem>>, %arg7: memref<1x1024xf32, #tpu.memory_space<vmem>>, %arg8: memref<1024x512xbf16, #tpu.memory_space<vmem>>, %arg9: memref<1x512xf32, #tpu.memory_space<vmem>>, %arg10: memref<4x512xf32, #tpu.memory_space<vmem>>, %arg11: memref<4x512xf32, #tpu.memory_space<vmem>>, %arg12: memref<4x4xf32, #tpu.memory_space<vmem>>, %arg13: memref<4x512xf32, #tpu.memory_space<vmem>>, %arg14: memref<4x512xf32, #tpu.memory_space<vmem>>, %arg15: memref<1x128xf32, #tpu.memory_space<vmem>>) attributes {dimension_semantics = [], scalar_prefetch = 0 : i64, scratch_operands = 0 : i64, tpu.core_type = #tpu.core_type<tc>} {
    %c0 = arith.constant 0 : index
    %c0_0 = arith.constant 0 : index
    %0 = vector.load %arg0[%c0, %c0_0] : memref<4x128xbf16, #tpu.memory_space<vmem>>, vector<4x128xbf16>
    %c0_1 = arith.constant 0 : index
    %c0_2 = arith.constant 0 : index
    %1 = vector.load %arg2[%c0_1, %c0_2] : memref<128x1024xbf16, #tpu.memory_space<vmem>>, vector<128x1024xbf16>
    %cst = arith.constant dense<0.000000e+00> : vector<4x1024xf32>
    %2 = tpu.matmul %0, %1, %cst {dimension_numbers = #tpu.dot_dimension_numbers<[1], [0], [0], [1], [0, 0, 1, 1], [], []>} : vector<4x128xbf16>, vector<128x1024xbf16>, vector<4x1024xf32> -> vector<4x1024xf32>
    %c0_3 = arith.constant 0 : index
    %c0_4 = arith.constant 0 : index
    %3 = vector.load %arg3[%c0_3, %c0_4] : memref<1x1024xf32, #tpu.memory_space<vmem>>, vector<1x1024xf32>
    %4 = vector.broadcast %3 : vector<1x1024xf32> to vector<4x1024xf32>
    %5 = arith.addf %2, %4 : vector<4x1024xf32>
    %cst_5 = arith.constant 0.000000e+00 : f32
    %6 = vector.broadcast %cst_5 : f32 to vector<4x1024xf32>
    %7 = arith.maximumf %5, %6 : vector<4x1024xf32>
    %8 = arith.truncf %7 : vector<4x1024xf32> to vector<4x1024xbf16>
    %c0_6 = arith.constant 0 : index
    %c0_7 = arith.constant 0 : index
    %9 = vector.load %arg4[%c0_6, %c0_7] : memref<1024x512xbf16, #tpu.memory_space<vmem>>, vector<1024x512xbf16>
    %cst_8 = arith.constant dense<0.000000e+00> : vector<4x512xf32>
    %10 = tpu.matmul %8, %9, %cst_8 {dimension_numbers = #tpu.dot_dimension_numbers<[1], [0], [0], [1], [0, 0, 1, 1], [], []>} : vector<4x1024xbf16>, vector<1024x512xbf16>, vector<4x512xf32> -> vector<4x512xf32>
    %c0_9 = arith.constant 0 : index
    %c0_10 = arith.constant 0 : index
    %11 = vector.load %arg5[%c0_9, %c0_10] : memref<1x512xf32, #tpu.memory_space<vmem>>, vector<1x512xf32>
    %12 = vector.broadcast %11 : vector<1x512xf32> to vector<4x512xf32>
    %13 = arith.addf %10, %12 : vector<4x512xf32>
    %c0_11 = arith.constant 0 : index
    %c0_12 = arith.constant 0 : index
    %14 = vector.load %arg1[%c0_11, %c0_12] : memref<4x128xbf16, #tpu.memory_space<vmem>>, vector<4x128xbf16>
    %c0_13 = arith.constant 0 : index
    %c0_14 = arith.constant 0 : index
    %15 = vector.load %arg6[%c0_13, %c0_14] : memref<128x1024xbf16, #tpu.memory_space<vmem>>, vector<128x1024xbf16>
    %cst_15 = arith.constant dense<0.000000e+00> : vector<4x1024xf32>
    %16 = tpu.matmul %14, %15, %cst_15 {dimension_numbers = #tpu.dot_dimension_numbers<[1], [0], [0], [1], [0, 0, 1, 1], [], []>} : vector<4x128xbf16>, vector<128x1024xbf16>, vector<4x1024xf32> -> vector<4x1024xf32>
    %c0_16 = arith.constant 0 : index
    %c0_17 = arith.constant 0 : index
    %17 = vector.load %arg7[%c0_16, %c0_17] : memref<1x1024xf32, #tpu.memory_space<vmem>>, vector<1x1024xf32>
    %18 = vector.broadcast %17 : vector<1x1024xf32> to vector<4x1024xf32>
    %19 = arith.addf %16, %18 : vector<4x1024xf32>
    %cst_18 = arith.constant 0.000000e+00 : f32
    %20 = vector.broadcast %cst_18 : f32 to vector<4x1024xf32>
    %21 = arith.maximumf %19, %20 : vector<4x1024xf32>
    %22 = arith.truncf %21 : vector<4x1024xf32> to vector<4x1024xbf16>
    %c0_19 = arith.constant 0 : index
    %c0_20 = arith.constant 0 : index
    %23 = vector.load %arg8[%c0_19, %c0_20] : memref<1024x512xbf16, #tpu.memory_space<vmem>>, vector<1024x512xbf16>
    %cst_21 = arith.constant dense<0.000000e+00> : vector<4x512xf32>
    %24 = tpu.matmul %22, %23, %cst_21 {dimension_numbers = #tpu.dot_dimension_numbers<[1], [0], [0], [1], [0, 0, 1, 1], [], []>} : vector<4x1024xbf16>, vector<1024x512xbf16>, vector<4x512xf32> -> vector<4x512xf32>
    %c0_22 = arith.constant 0 : index
    %c0_23 = arith.constant 0 : index
    %25 = vector.load %arg9[%c0_22, %c0_23] : memref<1x512xf32, #tpu.memory_space<vmem>>, vector<1x512xf32>
    %26 = vector.broadcast %25 : vector<1x512xf32> to vector<4x512xf32>
    %27 = arith.addf %24, %26 : vector<4x512xf32>
    %c0_24 = arith.constant 0 : index
    %c0_25 = arith.constant 0 : index
    %28 = vector.load %arg13[%c0_24, %c0_25] : memref<4x512xf32, #tpu.memory_space<vmem>>, vector<4x512xf32>
    tpu.vector_store %arg13[%c0_24, %c0_25], %13 {strides = array<i32>} : memref<4x512xf32, #tpu.memory_space<vmem>>, vector<4x512xf32>,
    %c0_26 = arith.constant 0 : index
    %c0_27 = arith.constant 0 : index
    %29 = vector.load %arg14[%c0_26, %c0_27] : memref<4x512xf32, #tpu.memory_space<vmem>>, vector<4x512xf32>
    tpu.vector_store %arg14[%c0_26, %c0_27], %27 {strides = array<i32>} : memref<4x512xf32, #tpu.memory_space<vmem>>, vector<4x512xf32>,
    %30 = arith.mulf %13, %13 : vector<4x512xf32>
    %cst_28 = arith.constant dense<0.000000e+00> : vector<4xf32>
    %31 = vector.multi_reduction <add>, %30, %cst_28 [1] : vector<4x512xf32> to vector<4xf32>
    %32 = vector.shape_cast %31 : vector<4xf32> to vector<4x1xf32>
    %cst_29 = arith.constant 1.000000e-24 : f32
    %33 = vector.broadcast %cst_29 : f32 to vector<4x1xf32>
    %34 = arith.maximumf %32, %33 : vector<4x1xf32>
    %35 = math.rsqrt %34 : vector<4x1xf32>
    %36 = vector.broadcast %35 : vector<4x1xf32> to vector<4x512xf32>
    %37 = arith.mulf %13, %36 : vector<4x512xf32>
    %38 = arith.mulf %27, %27 : vector<4x512xf32>
    %cst_30 = arith.constant dense<0.000000e+00> : vector<4xf32>
    %39 = vector.multi_reduction <add>, %38, %cst_30 [1] : vector<4x512xf32> to vector<4xf32>
    %40 = vector.shape_cast %39 : vector<4xf32> to vector<4x1xf32>
    %cst_31 = arith.constant 1.000000e-24 : f32
    %41 = vector.broadcast %cst_31 : f32 to vector<4x1xf32>
    %42 = arith.maximumf %40, %41 : vector<4x1xf32>
    %43 = math.rsqrt %42 : vector<4x1xf32>
    %44 = vector.broadcast %43 : vector<4x1xf32> to vector<4x512xf32>
    %45 = arith.mulf %27, %44 : vector<4x512xf32>
    %c0_32 = arith.constant 0 : index
    %c0_33 = arith.constant 0 : index
    %46 = vector.load %arg10[%c0_32, %c0_33] : memref<4x512xf32, #tpu.memory_space<vmem>>, vector<4x512xf32>
    %c0_34 = arith.constant 0 : index
    %c0_35 = arith.constant 0 : index
    %47 = vector.load %arg11[%c0_34, %c0_35] : memref<4x512xf32, #tpu.memory_space<vmem>>, vector<4x512xf32>
    %48 = arith.mulf %46, %46 : vector<4x512xf32>
    %cst_36 = arith.constant dense<0.000000e+00> : vector<4xf32>
    %49 = vector.multi_reduction <add>, %48, %cst_36 [1] : vector<4x512xf32> to vector<4xf32>
    %50 = vector.shape_cast %49 : vector<4xf32> to vector<4x1xf32>
    %cst_37 = arith.constant 1.000000e-24 : f32
    %51 = vector.broadcast %cst_37 : f32 to vector<4x1xf32>
    %52 = arith.maximumf %50, %51 : vector<4x1xf32>
    %53 = math.rsqrt %52 : vector<4x1xf32>
    %54 = vector.broadcast %53 : vector<4x1xf32> to vector<4x512xf32>
    %55 = arith.mulf %46, %54 : vector<4x512xf32>
    %56 = arith.mulf %47, %47 : vector<4x512xf32>
    %cst_38 = arith.constant dense<0.000000e+00> : vector<4xf32>
    %57 = vector.multi_reduction <add>, %56, %cst_38 [1] : vector<4x512xf32> to vector<4xf32>
    %58 = vector.shape_cast %57 : vector<4xf32> to vector<4x1xf32>
    %cst_39 = arith.constant 1.000000e-24 : f32
    %59 = vector.broadcast %cst_39 : f32 to vector<4x1xf32>
    %60 = arith.maximumf %58, %59 : vector<4x1xf32>
    %61 = math.rsqrt %60 : vector<4x1xf32>
    %62 = vector.broadcast %61 : vector<4x1xf32> to vector<4x512xf32>
    %63 = arith.mulf %47, %62 : vector<4x512xf32>
    %64 = arith.subf %37, %55 : vector<4x512xf32>
    %65 = arith.mulf %64, %64 : vector<4x512xf32>
    %66 = vector.shape_cast %65 : vector<4x512xf32> to vector<1x4x512xf32>
    %cst_40 = arith.constant dense<0.000000e+00> : vector<1xf32>
    %67 = vector.multi_reduction <add>, %66, %cst_40 [1, 2] : vector<1x4x512xf32> to vector<1xf32>
    %68 = vector.shape_cast %67 : vector<1xf32> to vector<1x1x1xf32>
    %69 = vector.extract %68[0, 0, 0] : f32 from vector<1x1x1xf32>
    %cst_41 = arith.constant 2.048000e+03 : f32
    %70 = arith.divf %69, %cst_41 : f32
    %71 = arith.subf %45, %63 : vector<4x512xf32>
    %72 = arith.mulf %71, %71 : vector<4x512xf32>
    %73 = vector.shape_cast %72 : vector<4x512xf32> to vector<1x4x512xf32>
    %cst_42 = arith.constant dense<0.000000e+00> : vector<1xf32>
    %74 = vector.multi_reduction <add>, %73, %cst_42 [1, 2] : vector<1x4x512xf32> to vector<1xf32>
    %75 = vector.shape_cast %74 : vector<1xf32> to vector<1x1x1xf32>
    %76 = vector.extract %75[0, 0, 0] : f32 from vector<1x1x1xf32>
    %cst_43 = arith.constant 2.048000e+03 : f32
    %77 = arith.divf %76, %cst_43 : f32
    %c0_44 = arith.constant 0 : index
    %c0_45 = arith.constant 0 : index
    %78 = vector.load %arg12[%c0_44, %c0_45] : memref<4x4xf32, #tpu.memory_space<vmem>>, vector<4x4xf32>
    %cst_46 = arith.constant dense<0.000000e+00> : vector<4x4xf32>
    %79 = tpu.matmul %37, %45, %cst_46 {dimension_numbers = #tpu.dot_dimension_numbers<[1], [1], [0], [0], [0, 0, 1, 0], [], []>} : vector<4x512xf32>, vector<4x512xf32>, vector<4x4xf32> -> vector<4x4xf32>
    %cst_47 = arith.constant 2.500000e+01 : f32
    %80 = vector.broadcast %cst_47 : f32 to vector<4x4xf32>
    %81 = arith.mulf %79, %80 : vector<4x4xf32>
    %cst_48 = arith.constant 2.500000e-01 : f32
    %82 = vector.broadcast %cst_48 : f32 to vector<4x4xf32>
    %83 = arith.mulf %78, %82 : vector<4x4xf32>
    %cst_49 = arith.constant dense<0xFF800000> : vector<4xf32>
    %84 = vector.multi_reduction <maximumf>, %81, %cst_49 [1] : vector<4x4xf32> to vector<4xf32>
    %85 = vector.shape_cast %84 : vector<4xf32> to vector<4x1xf32>
    %86 = vector.broadcast %85 : vector<4x1xf32> to vector<4x4xf32>
    %87 = arith.subf %81, %86 : vector<4x4xf32>
    %88 = math.exp %87 : vector<4x4xf32>
    %cst_50 = arith.constant dense<0.000000e+00> : vector<4xf32>
    %89 = vector.multi_reduction <add>, %88, %cst_50 [1] : vector<4x4xf32> to vector<4xf32>
    %90 = vector.shape_cast %89 : vector<4xf32> to vector<4x1xf32>
    %91 = math.log %90 : vector<4x1xf32>
    %92 = vector.broadcast %91 : vector<4x1xf32> to vector<4x4xf32>
    %93 = arith.subf %87, %92 : vector<4x4xf32>
    %cst_51 = arith.constant dense<0xFF800000> : vector<4xf32>
    %94 = vector.multi_reduction <maximumf>, %83, %cst_51 [1] : vector<4x4xf32> to vector<4xf32>
    %95 = vector.shape_cast %94 : vector<4xf32> to vector<4x1xf32>
    %96 = vector.broadcast %95 : vector<4x1xf32> to vector<4x4xf32>
    %97 = arith.subf %83, %96 : vector<4x4xf32>
    %98 = math.exp %97 : vector<4x4xf32>
    %cst_52 = arith.constant dense<0.000000e+00> : vector<4xf32>
    %99 = vector.multi_reduction <add>, %98, %cst_52 [1] : vector<4x4xf32> to vector<4xf32>
    %100 = vector.shape_cast %99 : vector<4xf32> to vector<4x1xf32>
    %101 = math.log %100 : vector<4x1xf32>
    %102 = vector.broadcast %101 : vector<4x1xf32> to vector<4x4xf32>
    %103 = arith.subf %97, %102 : vector<4x4xf32>
    %104 = math.exp %103 : vector<4x4xf32>
    %105 = arith.subf %103, %93 : vector<4x4xf32>
    %106 = arith.mulf %104, %105 : vector<4x4xf32>
    %107 = vector.shape_cast %106 : vector<4x4xf32> to vector<1x4x4xf32>
    %cst_53 = arith.constant dense<0.000000e+00> : vector<1xf32>
    %108 = vector.multi_reduction <add>, %107, %cst_53 [1, 2] : vector<1x4x4xf32> to vector<1xf32>
    %109 = vector.shape_cast %108 : vector<1xf32> to vector<1x1x1xf32>
    %110 = vector.extract %109[0, 0, 0] : f32 from vector<1x1x1xf32>
    %cst_54 = arith.constant 4.000000e+00 : f32
    %111 = arith.mulf %110, %cst_54 : f32
    %112 = tpu.iota {dimensions = array<i32: 1>} : vector<1x128xi32>
    %c0_i32 = arith.constant 0 : i32
    %113 = vector.broadcast %c0_i32 : i32 to vector<1x128xi32>
    %114 = arith.cmpi eq, %112, %113 : vector<1x128xi32>
    %cst_55 = arith.constant 0.000000e+00 : f32
    %115 = vector.broadcast %70 : f32 to vector<1x128xf32>
    %116 = vector.broadcast %cst_55 : f32 to vector<1x128xf32>
    %117 = arith.select %114, %115, %116 : vector<1x128xi1>, vector<1x128xf32>
    %c1_i32 = arith.constant 1 : i32
    %118 = vector.broadcast %c1_i32 : i32 to vector<1x128xi32>
    %119 = arith.cmpi eq, %112, %118 : vector<1x128xi32>
    %cst_56 = arith.constant 0.000000e+00 : f32
    %120 = vector.broadcast %77 : f32 to vector<1x128xf32>
    %121 = vector.broadcast %cst_56 : f32 to vector<1x128xf32>
    %122 = arith.select %119, %120, %121 : vector<1x128xi1>, vector<1x128xf32>
    %123 = arith.addf %117, %122 : vector<1x128xf32>
    %c2_i32 = arith.constant 2 : i32
    %124 = vector.broadcast %c2_i32 : i32 to vector<1x128xi32>
    %125 = arith.cmpi eq, %112, %124 : vector<1x128xi32>
    %cst_57 = arith.constant 0.000000e+00 : f32
    %126 = vector.broadcast %111 : f32 to vector<1x128xf32>
    %127 = vector.broadcast %cst_57 : f32 to vector<1x128xf32>
    %128 = arith.select %125, %126, %127 : vector<1x128xi1>, vector<1x128xf32>
    %129 = arith.addf %123, %128 : vector<1x128xf32>
    %c0_58 = arith.constant 0 : index
    %c0_59 = arith.constant 0 : index
    %130 = vector.load %arg15[%c0_58, %c0_59] : memref<1x128xf32, #tpu.memory_space<vmem>>, vector<1x128xf32>
    tpu.vector_store %arg15[%c0_58, %c0_59], %129 {strides = array<i32>} : memref<1x128xf32, #tpu.memory_space<vmem>>, vector<1x128xf32>,
    return
  }
}

</mosaic_0001>

<llo_original>
// kernel: fused_kd_losses.1
$region0: #{fused_kd_losses.1}
  #allocation0 [shape = 'u32[]', space=smem, size = 0x4, offset = 0x4, fixed_abs, tag = 'smem constant byte address 0x4 - core index']
  #allocation1 [shape = 'u32[144,128]{1,0:T(1,128)}', space=vmem, size = 0x12000, scoped, tag = 'internal scratch']
  %s0 = inlined_call_operand.vmem [shape: bf16[4,128], index: 0, kind: input, shape index: {}]
  %s1 = inlined_call_operand.vmem [shape: bf16[4,128], index: 1, kind: input, shape index: {}]
  %s2 = inlined_call_operand.hbm [shape: bf16[128,1024], index: 2, kind: input, shape index: {}]
  %s3 = inlined_call_operand.hbm [shape: f32[1,1024], index: 3, kind: input, shape index: {}]
  %s4 = inlined_call_operand.hbm [shape: bf16[1024,512], index: 4, kind: input, shape index: {}]
  %s5 = inlined_call_operand.hbm [shape: f32[1,512], index: 5, kind: input, shape index: {}]
  %s6 = inlined_call_operand.hbm [shape: bf16[128,1024], index: 6, kind: input, shape index: {}]
  %s7 = inlined_call_operand.hbm [shape: f32[1,1024], index: 7, kind: input, shape index: {}]
  %s8 = inlined_call_operand.hbm [shape: bf16[1024,512], index: 8, kind: input, shape index: {}]
  %s9 = inlined_call_operand.vmem [shape: f32[1,512], index: 9, kind: input, shape index: {}]
  %s10 = inlined_call_operand.vmem [shape: f32[4,512], index: 10, kind: input, shape index: {}]
  %s11 = inlined_call_operand.vmem [shape: f32[4,512], index: 11, kind: input, shape index: {}]
  %s12 = inlined_call_operand.vmem [shape: f32[4,4], index: 12, kind: input, shape index: {}]
  %s13 = inlined_call_operand.hbm [shape: f32[4,512], index: 13, kind: output, shape index: {0}]
  %s14 = inlined_call_operand.hbm [shape: f32[4,512], index: 14, kind: output, shape index: {1}]
  %s15 = inlined_call_operand.vmem [shape: f32[1,128], index: 15, kind: output, shape index: {2}]
  %16 = xla_tuple %s13, %s14, %s15
  %s17 = sld [smem:[#allocation0]]
  $region106: #{fused_kd_losses.1} parent=0
    _
  %s19 = ssub.s32 1, %s17
  %s20 = scalar_select 0, %s19, %s17
  $region1: #{fused_kd_losses.1} parent=0
    #allocation2 [shape = 'u8[262144]{0}', space=vmem, size = 0x40000, scoped, tag = 'input window, operand 2, single buffered']
    #allocation3 [shape = 's32[1]{0}', space=sflag, size = 0x4, scoped, tag = 'scoped memory for fused_kd_losses.1']
    #allocation4 [shape = 's32[1]{0}', space=sflag, size = 0x4, scoped, tag = 'scoped memory for fused_kd_losses.1']
    #allocation5 [shape = 'u8[4096]{0}', space=vmem, size = 0x1000, scoped, tag = 'input window, operand 3, single buffered']
    #allocation6 [shape = 's32[1]{0}', space=sflag, size = 0x4, scoped, tag = 'scoped memory for fused_kd_losses.1']
    #allocation7 [shape = 'u8[1048576]{0}', space=vmem, size = 0x100000, scoped, tag = 'input window, operand 4, single buffered']
    #allocation8 [shape = 'u8[2048]{0}', space=vmem, size = 0x800, scoped, tag = 'input window, operand 5, single buffered']
    #allocation9 [shape = 's32[1]{0}', space=sflag, size = 0x4, scoped, tag = 'scoped memory for fused_kd_losses.1']
    #allocation10 [shape = 'u8[262144]{0}', space=vmem, size = 0x40000, scoped, tag = 'input window, operand 6, single buffered']
    #allocation11 [shape = 'u8[4096]{0}', space=vmem, size = 0x1000, scoped, tag = 'input window, operand 7, single buffered']
    #allocation12 [shape = 's32[1]{0}', space=sflag, size = 0x4, scoped, tag = 'scoped memory for fused_kd_losses.1']
    #allocation13 [shape = 'u8[1048576]{0}', space=vmem, size = 0x100000, scoped, tag = 'input window, operand 8, single buffered']
    #allocation14 [shape = 'u8[8192]{0}', space=vmem, size = 0x2000, scoped, tag = 'output window, operand 0, single buffered']
    #allocation15 [shape = 'u8[8192]{0}', space=vmem, size = 0x2000, scoped, tag = 'output window, operand 1, single buffered']
    #allocation16 [shape = 's32[1]{0}', space=sflag, size = 0x4, scoped, tag = 'scoped memory for fused_kd_losses.1']
    %21 = vsyncpa [#allocation3], 0
    %22 = vsyncpa [#allocation6], 0
    %23 = vsyncpa [#allocation9], 0
    %24 = vsyncpa [#allocation12], 0
    %25 = vsyncpa [#allocation4], 0
    %26 = vsyncpa [#allocation16], 0
    // Predicated region
    $region2: #{fused_kd_losses.1} parent=1 // pred_check
      _
    $region3: #{fused_kd_losses.1} parent=1 // pred_check_branch
      %28 = sbr.rel (0) target = $region5
    $region4: #{fused_kd_losses.1} parent=1 // pred_region
      _
    $region5: #{fused_kd_losses.1} parent=1 // pred_fallthru
      _
    // Predicated region
    $region6: #{fused_kd_losses.1} parent=1 // pred_check
      _
    $region7: #{fused_kd_losses.1} parent=1 // pred_check_branch
      %30 = sbr.rel (0) target = $region9
    $region8: #{fused_kd_losses.1} parent=1 // pred_region
      _
    $region9: #{fused_kd_losses.1} parent=1 // pred_fallthru
      _
    // Predicated region
    $region10: #{fused_kd_losses.1} parent=1 // pred_check
      _
    $region11: #{fused_kd_losses.1} parent=1 // pred_check_branch
      %32 = sbr.rel (0) target = $region13
    $region12: #{fused_kd_losses.1} parent=1 // pred_region
      %s34 = ssub.s32 8192, 8192
      %35 = vsyncadd [#allocation3], %s34
      %s36 = sshll.u32 [#allocation2], 4
      %s37 = int_to_ptr.vmem [resolvable:$true] %s36
      %42 = dma.hbm_to_vmem [thread:$0]  %s2, 8192, %s37, [#allocation3], 512, 512, 32
    $region13: #{fused_kd_losses.1} parent=1 // pred_fallthru
      _
    // Predicated region
    $region14: #{fused_kd_losses.1} parent=1 // pred_check
      _
    $region15: #{fused_kd_losses.1} parent=1 // pred_check_branch
      %44 = sbr.rel (0) target = $region17
    $region16: #{fused_kd_losses.1} parent=1 // pred_region
      %s46 = ssub.s32 128, 128
      %47 = vsyncadd [#allocation6], %s46
      %s49 = sshll.u32 [#allocation5], 4
      %s50 = int_to_ptr.vmem [resolvable:$true] %s49
      %52 = dma.hbm_to_vmem [thread:$0]  %s3, 128, %s50, [#allocation6]
    $region17: #{fused_kd_losses.1} parent=1 // pred_fallthru
      _
    // Predicated region
    $region18: #{fused_kd_losses.1} parent=1 // pred_check
      _
    $region19: #{fused_kd_losses.1} parent=1 // pred_check_branch
      %54 = sbr.rel (0) target = $region21
    $region20: #{fused_kd_losses.1} parent=1 // pred_region
      %s56 = ssub.s32 32768, 32768
      %57 = vsyncadd [#allocation6], %s56
      %s58 = sshll.u32 [#allocation7], 4
      %s59 = int_to_ptr.vmem [resolvable:$true] %s58
      %64 = dma.hbm_to_vmem [thread:$0]  %s4, 32768, %s59, [#allocation6], 256, 256, 16
    $region21: #{fused_kd_losses.1} parent=1 // pred_fallthru
      _
    // Predicated region
    $region22: #{fused_kd_losses.1} parent=1 // pred_check
      _
    $region23: #{fused_kd_losses.1} parent=1 // pred_check_branch
      %66 = sbr.rel (0) target = $region25
    $region24: #{fused_kd_losses.1} parent=1 // pred_region
      %s68 = ssub.s32 64, 64
      %69 = vsyncadd [#allocation9], %s68
      %s71 = sshll.u32 [#allocation8], 4
      %s72 = int_to_ptr.vmem [resolvable:$true] %s71
      %74 = dma.hbm_to_vmem [thread:$0]  %s5, 64, %s72, [#allocation9]
    $region25: #{fused_kd_losses.1} parent=1 // pred_fallthru
      _
    // Predicated region
    $region26: #{fused_kd_losses.1} parent=1 // pred_check
      _
    $region27: #{fused_kd_losses.1} parent=1 // pred_check_branch
      %76 = sbr.rel (0) target = $region29
    $region28: #{fused_kd_losses.1} parent=1 // pred_region
      %s78 = ssub.s32 8192, 8192
      %79 = vsyncadd [#allocation9], %s78
      %s80 = sshll.u32 [#allocation10], 4
      %s81 = int_to_ptr.vmem [resolvable:$true] %s80
      %86 = dma.hbm_to_vmem [thread:$0]  %s6, 8192, %s81, [#allocation9], 512, 512, 32
    $region29: #{fused_kd_losses.1} parent=1 // pred_fallthru
      _
    // Predicated region
    $region30: #{fused_kd_losses.1} parent=1 // pred_check
      _
    $region31: #{fused_kd_losses.1} parent=1 // pred_check_branch
      %88 = sbr.rel (0) target = $region33
    $region32: #{fused_kd_losses.1} parent=1 // pred_region
      %s90 = ssub.s32 128, 128
      %91 = vsyncadd [#allocation12], %s90
      %s93 = sshll.u32 [#allocation11], 4
      %s94 = int_to_ptr.vmem [resolvable:$true] %s93
      %96 = dma.hbm_to_vmem [thread:$0]  %s7, 128, %s94, [#allocation12]
    $region33: #{fused_kd_losses.1} parent=1 // pred_fallthru
      _
    // Predicated region
    $region34: #{fused_kd_losses.1} parent=1 // pred_check
      _
    $region35: #{fused_kd_losses.1} parent=1 // pred_check_branch
      %98 = sbr.rel (0) target = $region37
    $region36: #{fused_kd_losses.1} parent=1 // pred_region
      %s100 = ssub.s32 32768, 32768
      %101 = vsyncadd [#allocation12], %s100
      %s102 = sshll.u32 [#allocation13], 4
      %s103 = int_to_ptr.vmem [resolvable:$true] %s102
      %108 = dma.hbm_to_vmem [thread:$0]  %s8, 32768, %s103, [#allocation12], 256, 256, 16
    $region37: #{fused_kd_losses.1} parent=1 // pred_fallthru
      _
    // Predicated region
    $region38: #{fused_kd_losses.1} parent=1 // pred_check
      _
    $region39: #{fused_kd_losses.1} parent=1 // pred_check_branch
      %110 = sbr.rel (0) target = $region41
    $region40: #{fused_kd_losses.1} parent=1 // pred_region
      _
    $region41: #{fused_kd_losses.1} parent=1 // pred_fallthru
      _
    // Predicated region
    $region42: #{fused_kd_losses.1} parent=1 // pred_check
      _
    $region43: #{fused_kd_losses.1} parent=1 // pred_check_branch
      %112 = sbr.rel (0) target = $region45
    $region44: #{fused_kd_losses.1} parent=1 // pred_region
      _
    $region45: #{fused_kd_losses.1} parent=1 // pred_fallthru
      _
    // Predicated region
    $region46: #{fused_kd_losses.1} parent=1 // pred_check
      _
    $region47: #{fused_kd_losses.1} parent=1 // pred_check_branch
      %114 = sbr.rel (0) target = $region49
    $region48: #{fused_kd_losses.1} parent=1 // pred_region
      _
    $region49: #{fused_kd_losses.1} parent=1 // pred_fallthru
      _
    // Predicated region
    $region50: #{fused_kd_losses.1} parent=1 // pred_check
      _
    $region51: #{fused_kd_losses.1} parent=1 // pred_check_branch
      %116 = sbr.rel (0) target = $region53
    $region52: #{fused_kd_losses.1} parent=1 // pred_region
      _
    $region53: #{fused_kd_losses.1} parent=1 // pred_fallthru
      _
    // Predicated region
    $region54: #{fused_kd_losses.1} parent=1 // pred_check
      _
    $region55: #{fused_kd_losses.1} parent=1 // pred_check_branch
      %118 = sbr.rel (0) target = $region57
    $region56: #{fused_kd_losses.1} parent=1 // pred_region
      %119 = dma.done [#allocation3], 8192
    $region57: #{fused_kd_losses.1} parent=1 // pred_fallthru
      _
    // Predicated region
    $region58: #{fused_kd_losses.1} parent=1 // pred_check
      _
    $region59: #{fused_kd_losses.1} parent=1 // pred_check_branch
      %121 = sbr.rel (0) target = $region61
    $region60: #{fused_kd_losses.1} parent=1 // pred_region
      %122 = dma.done [#allocation6], 128
    $region61: #{fused_kd_losses.1} parent=1 // pred_fallthru
      _
    // Predicated region
    $region62: #{fused_kd_losses.1} parent=1 // pred_check
      _
    $region63: #{fused_kd_losses.1} parent=1 // pred_check_branch
      %124 = sbr.rel (0) target = $region65
    $region64: #{fused_kd_losses.1} parent=1 // pred_region
      %125 = dma.done [#allocation6], 32768
    $region65: #{fused_kd_losses.1} parent=1 // pred_fallthru
      _
    // Predicated region
    $region66: #{fused_kd_losses.1} parent=1 // pred_check
      _
    $region67: #{fused_kd_losses.1} parent=1 // pred_check_branch
      %127 = sbr.rel (0) target = $region69
    $region68: #{fused_kd_losses.1} parent=1 // pred_region
      %128 = dma.done [#allocation9], 64
    $region69: #{fused_kd_losses.1} parent=1 // pred_fallthru
      _
    // Predicated region
    $region70: #{fused_kd_losses.1} parent=1 // pred_check
      _
    $region71: #{fused_kd_losses.1} parent=1 // pred_check_branch
      %130 = sbr.rel (0) target = $region73
    $region72: #{fused_kd_losses.1} parent=1 // pred_region
      %131 = dma.done [#allocation9], 8192
    $region73: #{fused_kd_losses.1} parent=1 // pred_fallthru
      _
    // Predicated region
    $region74: #{fused_kd_losses.1} parent=1 // pred_check
      _
    $region75: #{fused_kd_losses.1} parent=1 // pred_check_branch
      %133 = sbr.rel (0) target = $region77
    $region76: #{fused_kd_losses.1} parent=1 // pred_region
      %134 = dma.done [#allocation12], 128
    $region77: #{fused_kd_losses.1} parent=1 // pred_fallthru
      _
    // Predicated region
    $region78: #{fused_kd_losses.1} parent=1 // pred_check
      _
    $region79: #{fused_kd_losses.1} parent=1 // pred_check_branch
      %136 = sbr.rel (0) target = $region81
    $region80: #{fused_kd_losses.1} parent=1 // pred_region
      %137 = dma.done [#allocation12], 32768
    $region81: #{fused_kd_losses.1} parent=1 // pred_fallthru
      _
    %v139 = vld [vmem:[%s0] sm:$0x3]
    %v140 = vld [vmem:[#allocation2] sm:$0xff]
    %v141 = vld [vmem:[#allocation2 + $0x8] sm:$0xff]
    %v142 = vld [vmem:[#allocation2 + $0x10] sm:$0xff]
    %v143 = vld [vmem:[#allocation2 + $0x18] sm:$0xff]
    %v144 = vld [vmem:[#allocation2 + $0x20] sm:$0xff]
    %v145 = vld [vmem:[#allocation2 + $0x28] sm:$0xff]
    %v146 = vld [vmem:[#allocation2 + $0x30] sm:$0xff]
    %v147 = vld [vmem:[#allocation2 + $0x38] sm:$0xff]
    %v148 = vld [vmem:[#allocation2 + $0x40] sm:$0xff]
    %v149 = vld [vmem:[#allocation2 + $0x48] sm:$0xff]
    %v150 = vld [vmem:[#allocation2 + $0x50] sm:$0xff]
    %v151 = vld [vmem:[#allocation2 + $0x58] sm:$0xff]
    %v152 = vld [vmem:[#allocation2 + $0x60] sm:$0xff]
    %v153 = vld [vmem:[#allocation2 + $0x68] sm:$0xff]
    %v154 = vld [vmem:[#allocation2 + $0x70] sm:$0xff]
    %v155 = vld [vmem:[#allocation2 + $0x78] sm:$0xff]
    %v156 = vld [vmem:[#allocation2 + $0x80] sm:$0xff]
    %v157 = vld [vmem:[#allocation2 + $0x88] sm:$0xff]
    %v158 = vld [vmem:[#allocation2 + $0x90] sm:$0xff]
    %v159 = vld [vmem:[#allocation2 + $0x98] sm:$0xff]
    %v160 = vld [vmem:[#allocation2 + $0xa0] sm:$0xff]
    %v161 = vld [vmem:[#allocation2 + $0xa8] sm:$0xff]
    %v162 = vld [vmem:[#allocation2 + $0xb0] sm:$0xff]
    %v163 = vld [vmem:[#allocation2 + $0xb8] sm:$0xff]
    %v164 = vld [vmem:[#allocation2 + $0xc0] sm:$0xff]
    %v165 = vld [vmem:[#allocation2 + $0xc8] sm:$0xff]
    %v166 = vld [vmem:[#allocation2 + $0xd0] sm:$0xff]
    %v167 = vld [vmem:[#allocation2 + $0xd8] sm:$0xff]
    %v168 = vld [vmem:[#allocation2 + $0xe0] sm:$0xff]
    %v169 = vld [vmem:[#allocation2 + $0xe8] sm:$0xff]
    %v170 = vld [vmem:[#allocation2 + $0xf0] sm:$0xff]
    %v171 = vld [vmem:[#allocation2 + $0xf8] sm:$0xff]
    %v172 = vld [vmem:[#allocation2 + $0x100] sm:$0xff]
    %v173 = vld [vmem:[#allocation2 + $0x108] sm:$0xff]
    %v174 = vld [vmem:[#allocation2 + $0x110] sm:$0xff]
    %v175 = vld [vmem:[#allocation2 + $0x118] sm:$0xff]
    %v176 = vld [vmem:[#allocation2 + $0x120] sm:$0xff]
    %v177 = vld [vmem:[#allocation2 + $0x128] sm:$0xff]
    %v178 = vld [vmem:[#allocation2 + $0x130] sm:$0xff]
    %v179 = vld [vmem:[#allocation2 + $0x138] sm:$0xff]
    %v180 = vld [vmem:[#allocation2 + $0x140] sm:$0xff]
    %v181 = vld [vmem:[#allocation2 + $0x148] sm:$0xff]
    %v182 = vld [vmem:[#allocation2 + $0x150] sm:$0xff]
    %v183 = vld [vmem:[#allocation2 + $0x158] sm:$0xff]
    %v184 = vld [vmem:[#allocation2 + $0x160] sm:$0xff]
    %v185 = vld [vmem:[#allocation2 + $0x168] sm:$0xff]
    %v186 = vld [vmem:[#allocation2 + $0x170] sm:$0xff]
    %v187 = vld [vmem:[#allocation2 + $0x178] sm:$0xff]
    %v188 = vld [vmem:[#allocation2 + $0x180] sm:$0xff]
    %v189 = vld [vmem:[#allocation2 + $0x188] sm:$0xff]
    %v190 = vld [vmem:[#allocation2 + $0x190] sm:$0xff]
    %v191 = vld [vmem:[#allocation2 + $0x198] sm:$0xff]
    %v192 = vld [vmem:[#allocation2 + $0x1a0] sm:$0xff]
    %v193 = vld [vmem:[#allocation2 + $0x1a8] sm:$0xff]
    %v194 = vld [vmem:[#allocation2 + $0x1b0] sm:$0xff]
    %v195 = vld [vmem:[#allocation2 + $0x1b8] sm:$0xff]
    %v196 = vld [vmem:[#allocation2 + $0x1c0] sm:$0xff]
    %v197 = vld [vmem:[#allocation2 + $0x1c8] sm:$0xff]
    %v198 = vld [vmem:[#allocation2 + $0x1d0] sm:$0xff]
    %v199 = vld [vmem:[#allocation2 + $0x1d8] sm:$0xff]
    %v200 = vld [vmem:[#allocation2 + $0x1e0] sm:$0xff]
    %v201 = vld [vmem:[#allocation2 + $0x1e8] sm:$0xff]
    %v202 = vld [vmem:[#allocation2 + $0x1f0] sm:$0xff]
    %v203 = vld [vmem:[#allocation2 + $0x1f8] sm:$0xff]
    %v204 = vld [vmem:[#allocation5] sm:$0xff]
    %v206 = vlaneseq
    %v207 = vshrl.u32 %v206, 7
    %v208 = vsub.s32 0, %v207
    %v209 = vrot.slane %v204, %v208
    %v210 = vlaneseq
    %v211 = vshrl.u32 %v210, 7
    %v212 = vsub.s32 1, %v211
    %v213 = vrot.slane %v204, %v212
    %v214 = vlaneseq
    %v215 = vshrl.u32 %v214, 7
    %v216 = vsub.s32 2, %v215
    %v217 = vrot.slane %v204, %v216
    %v218 = vlaneseq
    %v219 = vshrl.u32 %v218, 7
    %v220 = vsub.s32 3, %v219
    %v221 = vrot.slane %v204, %v220
    %v222 = vlaneseq
    %v223 = vshrl.u32 %v222, 7
    %v224 = vsub.s32 4, %v223
    %v225 = vrot.slane %v204, %v224
    %v226 = vlaneseq
    %v227 = vshrl.u32 %v226, 7
    %v228 = vsub.s32 5, %v227
    %v229 = vrot.slane %v204, %v228
    %v230 = vlaneseq
    %v231 = vshrl.u32 %v230, 7
    %v232 = vsub.s32 6, %v231
    %v233 = vrot.slane %v204, %v232
    %v234 = vlaneseq
    %v235 = vshrl.u32 %v234, 7
    %v236 = vsub.s32 7, %v235
    %v237 = vrot.slane %v204, %v236
    %v310 = vunpack.c.l.b16 %v140
    %v311 = vunpack.c.h.b16 %v140
    %v312 = vunpack.c.l.b16 %v141
    %v313 = vunpack.c.h.b16 %v141
    %v314 = vunpack.c.l.b16 %v142
    %v315 = vunpack.c.h.b16 %v142
    %v316 = vunpack.c.l.b16 %v143
    %v317 = vunpack.c.h.b16 %v143
    %v318 = vunpack.c.l.b16 %v144
    %v319 = vunpack.c.h.b16 %v144
    %v320 = vunpack.c.l.b16 %v145
    %v321 = vunpack.c.h.b16 %v145
    %v322 = vunpack.c.l.b16 %v146
    %v323 = vunpack.c.h.b16 %v146
    %v324 = vunpack.c.l.b16 %v147
    %v325 = vunpack.c.h.b16 %v147
    %v326 = vunpack.c.l.b16 %v148
    %v327 = vunpack.c.h.b16 %v148
    %v328 = vunpack.c.l.b16 %v149
    %v329 = vunpack.c.h.b16 %v149
    %v330 = vunpack.c.l.b16 %v150
    %v331 = vunpack.c.h.b16 %v150
    %v332 = vunpack.c.l.b16 %v151
    %v333 = vunpack.c.h.b16 %v151
    %v334 = vunpack.c.l.b16 %v152
    %v335 = vunpack.c.h.b16 %v152
    %v336 = vunpack.c.l.b16 %v153
    %v337 = vunpack.c.h.b16 %v153
    %v338 = vunpack.c.l.b16 %v154
    %v339 = vunpack.c.h.b16 %v154
    %v340 = vunpack.c.l.b16 %v155
    %v341 = vunpack.c.h.b16 %v155
    %v342 = vunpack.c.l.b16 %v156
    %v343 = vunpack.c.h.b16 %v156
    %v344 = vunpack.c.l.b16 %v157
    %v345 = vunpack.c.h.b16 %v157
    %v346 = vunpack.c.l.b16 %v158
    %v347 = vunpack.c.h.b16 %v158
    %v348 = vunpack.c.l.b16 %v159
    %v349 = vunpack.c.h.b16 %v159
    %v350 = vunpack.c.l.b16 %v160
    %v351 = vunpack.c.h.b16 %v160
    %v352 = vunpack.c.l.b16 %v161
    %v353 = vunpack.c.h.b16 %v161
    %v354 = vunpack.c.l.b16 %v162
    %v355 = vunpack.c.h.b16 %v162
    %v356 = vunpack.c.l.b16 %v163
    %v357 = vunpack.c.h.b16 %v163
    %v358 = vunpack.c.l.b16 %v164
    %v359 = vunpack.c.h.b16 %v164
    %v360 = vunpack.c.l.b16 %v165
    %v361 = vunpack.c.h.b16 %v165
    %v362 = vunpack.c.l.b16 %v166
    %v363 = vunpack.c.h.b16 %v166
    %v364 = vunpack.c.l.b16 %v167
    %v365 = vunpack.c.h.b16 %v167
    %v366 = vunpack.c.l.b16 %v168
    %v367 = vunpack.c.h.b16 %v168
    %v368 = vunpack.c.l.b16 %v169
    %v369 = vunpack.c.h.b16 %v169
    %v370 = vunpack.c.l.b16 %v170
    %v371 = vunpack.c.h.b16 %v170
    %v372 = vunpack.c.l.b16 %v171
    %v373 = vunpack.c.h.b16 %v171
    %v374 = vunpack.c.l.b16 %v172
    %v375 = vunpack.c.h.b16 %v172
    %v376 = vunpack.c.l.b16 %v173
    %v377 = vunpack.c.h.b16 %v173
    %v378 = vunpack.c.l.b16 %v174
    %v379 = vunpack.c.h.b16 %v174
    %v380 = vunpack.c.l.b16 %v175
    %v381 = vunpack.c.h.b16 %v175
    %v382 = vunpack.c.l.b16 %v176
    %v383 = vunpack.c.h.b16 %v176
    %v384 = vunpack.c.l.b16 %v177
    %v385 = vunpack.c.h.b16 %v177
    %v386 = vunpack.c.l.b16 %v178
    %v387 = vunpack.c.h.b16 %v178
    %v388 = vunpack.c.l.b16 %v179
    %v389 = vunpack.c.h.b16 %v179
    %v390 = vunpack.c.l.b16 %v180
    %v391 = vunpack.c.h.b16 %v180
    %v392 = vunpack.c.l.b16 %v181
    %v393 = vunpack.c.h.b16 %v181
    %v394 = vunpack.c.l.b16 %v182
    %v395 = vunpack.c.h.b16 %v182
    %v396 = vunpack.c.l.b16 %v183
    %v397 = vunpack.c.h.b16 %v183
    %v398 = vunpack.c.l.b16 %v184
    %v399 = vunpack.c.h.b16 %v184
    %v400 = vunpack.c.l.b16 %v185
    %v401 = vunpack.c.h.b16 %v185
    %v402 = vunpack.c.l.b16 %v186
    %v403 = vunpack.c.h.b16 %v186
    %v404 = vunpack.c.l.b16 %v187
    %v405 = vunpack.c.h.b16 %v187
    %v406 = vunpack.c.l.b16 %v188
    %v407 = vunpack.c.h.b16 %v188
    %v408 = vunpack.c.l.b16 %v189
    %v409 = vunpack.c.h.b16 %v189
    %v410 = vunpack.c.l.b16 %v190
    %v411 = vunpack.c.h.b16 %v190
    %v412 = vunpack.c.l.b16 %v191
    %v413 = vunpack.c.h.b16 %v191
    %v414 = vunpack.c.l.b16 %v192
    %v415 = vunpack.c.h.b16 %v192
    %v416 = vunpack.c.l.b16 %v193
    %v417 = vunpack.c.h.b16 %v193
    %v418 = vunpack.c.l.b16 %v194
    %v419 = vunpack.c.h.b16 %v194
    %v420 = vunpack.c.l.b16 %v195
    %v421 = vunpack.c.h.b16 %v195
    %v422 = vunpack.c.l.b16 %v196
    %v423 = vunpack.c.h.b16 %v196
    %v424 = vunpack.c.l.b16 %v197
    %v425 = vunpack.c.h.b16 %v197
    %v426 = vunpack.c.l.b16 %v198
    %v427 = vunpack.c.h.b16 %v198
    %v428 = vunpack.c.l.b16 %v199
    %v429 = vunpack.c.h.b16 %v199
    %v430 = vunpack.c.l.b16 %v200
    %v431 = vunpack.c.h.b16 %v200
    %v432 = vunpack.c.l.b16 %v201
    %v433 = vunpack.c.h.b16 %v201
    %v434 = vunpack.c.l.b16 %v202
    %v435 = vunpack.c.h.b16 %v202
    %v436 = vunpack.c.l.b16 %v203
    %v437 = vunpack.c.h.b16 %v203
    %v438 = vpack.c.b16 %v318, %v310
    %v439 = vpack.c.b16 %v319, %v311
    %v440 = vpack.c.b16 %v320, %v312
    %v441 = vpack.c.b16 %v321, %v313
    %v442 = vpack.c.b16 %v322, %v314
    %v443 = vpack.c.b16 %v323, %v315
    %v444 = vpack.c.b16 %v324, %v316
    %v445 = vpack.c.b16 %v325, %v317
    %v446 = vpack.c.b16 %v334, %v326
    %v447 = vpack.c.b16 %v335, %v327
    %v448 = vpack.c.b16 %v336, %v328
    %v449 = vpack.c.b16 %v337, %v329
    %v450 = vpack.c.b16 %v338, %v330
    %v451 = vpack.c.b16 %v339, %v331
    %v452 = vpack.c.b16 %v340, %v332
    %v453 = vpack.c.b16 %v341, %v333
    %v454 = vpack.c.b16 %v350, %v342
    %v455 = vpack.c.b16 %v351, %v343
    %v456 = vpack.c.b16 %v352, %v344
    %v457 = vpack.c.b16 %v353, %v345
    %v458 = vpack.c.b16 %v354, %v346
    %v459 = vpack.c.b16 %v355, %v347
    %v460 = vpack.c.b16 %v356, %v348
    %v461 = vpack.c.b16 %v357, %v349
    %v462 = vpack.c.b16 %v366, %v358
    %v463 = vpack.c.b16 %v367, %v359
    %v464 = vpack.c.b16 %v368, %v360
    %v465 = vpack.c.b16 %v369, %v361
    %v466 = vpack.c.b16 %v370, %v362
    %v467 = vpack.c.b16 %v371, %v363
    %v468 = vpack.c.b16 %v372, %v364
    %v469 = vpack.c.b16 %v373, %v365
    %v470 = vpack.c.b16 %v382, %v374
    %v471 = vpack.c.b16 %v383, %v375
    %v472 = vpack.c.b16 %v384, %v376
    %v473 = vpack.c.b16 %v385, %v377
    %v474 = vpack.c.b16 %v386, %v378
    %v475 = vpack.c.b16 %v387, %v379
    %v476 = vpack.c.b16 %v388, %v380
    %v477 = vpack.c.b16 %v389, %v381
    %v478 = vpack.c.b16 %v398, %v390
    %v479 = vpack.c.b16 %v399, %v391
    %v480 = vpack.c.b16 %v400, %v392
    %v481 = vpack.c.b16 %v401, %v393
    %v482 = vpack.c.b16 %v402, %v394
    %v483 = vpack.c.b16 %v403, %v395
    %v484 = vpack.c.b16 %v404, %v396
    %v485 = vpack.c.b16 %v405, %v397
    %v486 = vpack.c.b16 %v414, %v406
    %v487 = vpack.c.b16 %v415, %v407
    %v488 = vpack.c.b16 %v416, %v408
    %v489 = vpack.c.b16 %v417, %v409
    %v490 = vpack.c.b16 %v418, %v410
    %v491 = vpack.c.b16 %v419, %v411
    %v492 = vpack.c.b16 %v420, %v412
    %v493 = vpack.c.b16 %v421, %v413
    %v494 = vpack.c.b16 %v430, %v422
    %v495 = vpack.c.b16 %v431, %v423
    %v496 = vpack.c.b16 %v432, %v424
    %v497 = vpack.c.b16 %v433, %v425
    %v498 = vpack.c.b16 %v434, %v426
    %v499 = vpack.c.b16 %v435, %v427
    %v500 = vpack.c.b16 %v436, %v428
    %v501 = vpack.c.b16 %v437, %v429
    %566 = vmatprep.subr.bf16.mxu0 %v439
    %567 = vmatpush1.bf16.msra.mxu0 %v438
    %568 = vmatprep.subr.bf16.mxu0 %v447
    %569 = vmatpush1.bf16.msra.mxu0 %v446
    %570 = vmatprep.subr.bf16.mxu0 %v455
    %571 = vmatpush1.bf16.msra.mxu0 %v454
    %572 = vmatprep.subr.bf16.mxu0 %v463
    %573 = vmatpush1.bf16.msra.mxu0 %v462
    %574 = vmatprep.subr.bf16.mxu0 %v471
    %575 = vmatpush1.bf16.msra.mxu0 %v470
    %576 = vmatprep.subr.bf16.mxu0 %v479
    %577 = vmatpush1.bf16.msra.mxu0 %v478
    %578 = vmatprep.subr.bf16.mxu0 %v487
    %579 = vmatpush1.bf16.msra.mxu0 %v486
    %580 = vmatprep.subr.bf16.mxu0 %v495
    %581 = vmatpush1.bf16.msra.mxu0 %v494
    %582 = vmatprep.subr.bf16.mxu0 0
    %583 = vmatpush1.bf16.msra.mxu0 0
    %584 = vmatprep.subr.bf16.mxu0 0
    %585 = vmatpush1.bf16.msra.mxu0 0
    %586 = vmatprep.subr.bf16.mxu0 0
    %587 = vmatpush1.bf16.msra.mxu0 0
    %588 = vmatprep.subr.bf16.mxu0 0
    %589 = vmatpush1.bf16.msra.mxu0 0
    %590 = vmatprep.subr.bf16.mxu0 0
    %591 = vmatpush1.bf16.msra.mxu0 0
    %592 = vmatprep.subr.bf16.mxu0 0
    %593 = vmatpush1.bf16.msra.mxu0 0
    %594 = vmatprep.subr.bf16.mxu0 0
    %595 = vmatpush1.bf16.msra.mxu0 0
    %596 = vmatprep.subr.bf16.mxu0 0
    %597 = vmatpush1.bf16.msra.mxu0 0
    %598 = vmatprep.mubr.bf16.mxu0 0
    %599 = vmatmul.mubr.bf16.gmra.mrb[0].mxu0 %v139
    %v600 = vpop.f32.mrb[0].mxu0
    %v601 = vadd.f32 %v209, %v600
    %v602 = vpop.f32.mrb[0].mxu0
    %v603 = vadd.f32 %v213, %v602
    %v604 = vpop.f32.mrb[0].mxu0
    %v605 = vpop.f32.mrb[0].mxu0
    %606 = vdwg.mxu0
    %607 = vmatprep.subr.bf16.mxu0 %v441
    %608 = vmatpush1.bf16.msra.mxu0 %v440
    %609 = vmatprep.subr.bf16.mxu0 %v449
    %610 = vmatpush1.bf16.msra.mxu0 %v448
    %611 = vmatprep.subr.bf16.mxu0 %v457
    %612 = vmatpush1.bf16.msra.mxu0 %v456
    %613 = vmatprep.subr.bf16.mxu0 %v465
    %614 = vmatpush1.bf16.msra.mxu0 %v464
    %615 = vmatprep.subr.bf16.mxu0 %v473
    %616 = vmatpush1.bf16.msra.mxu0 %v472
    %617 = vmatprep.subr.bf16.mxu0 %v481
    %618 = vmatpush1.bf16.msra.mxu0 %v480
    %619 = vmatprep.subr.bf16.mxu0 %v489
    %620 = vmatpush1.bf16.msra.mxu0 %v488
    %621 = vmatprep.subr.bf16.mxu0 %v497
    %622 = vmatpush1.bf16.msra.mxu0 %v496
    %623 = vmatprep.subr.bf16.mxu0 0
    %624 = vmatpush1.bf16.msra.mxu0 0
    %625 = vmatprep.subr.bf16.mxu0 0
    %626 = vmatpush1.bf16.msra.mxu0 0
    %627 = vmatprep.subr.bf16.mxu0 0
    %628 = vmatpush1.bf16.msra.mxu0 0
    %629 = vmatprep.subr.bf16.mxu0 0
    %630 = vmatpush1.bf16.msra.mxu0 0
    %631 = vmatprep.subr.bf16.mxu0 0
    %632 = vmatpush1.bf16.msra.mxu0 0
    %633 = vmatprep.subr.bf16.mxu0 0
    %634 = vmatpush1.bf16.msra.mxu0 0
    %635 = vmatprep.subr.bf16.mxu0 0
    %636 = vmatpush1.bf16.msra.mxu0 0
    %637 = vmatprep.subr.bf16.mxu0 0
    %638 = vmatpush1.bf16.msra.mxu0 0
    %639 = vmatprep.mubr.bf16.mxu0 0
    %640 = vmatmul.mubr.bf16.gmra.mrb[0].mxu0 %v139
    %v641 = vpop.f32.mrb[0].mxu0
    %v642 = vadd.f32 %v217, %v641
    %v643 = vpop.f32.mrb[0].mxu0
    %v644 = vadd.f32 %v221, %v643
    %v645 = vpop.f32.mrb[0].mxu0
    %v646 = vpop.f32.mrb[0].mxu0
    %647 = vdwg.mxu0
    %648 = vmatprep.subr.bf16.mxu0 %v443
    %649 = vmatpush1.bf16.msra.mxu0 %v442
    %650 = vmatprep.subr.bf16.mxu0 %v451
    %651 = vmatpush1.bf16.msra.mxu0 %v450
    %652 = vmatprep.subr.bf16.mxu0 %v459
    %653 = vmatpush1.bf16.msra.mxu0 %v458
    %654 = vmatprep.subr.bf16.mxu0 %v467
    %655 = vmatpush1.bf16.msra.mxu0 %v466
    %656 = vmatprep.subr.bf16.mxu0 %v475
    %657 = vmatpush1.bf16.msra.mxu0 %v474
    %658 = vmatprep.subr.bf16.mxu0 %v483
    %659 = vmatpush1.bf16.msra.mxu0 %v482
    %660 = vmatprep.subr.bf16.mxu0 %v491
    %661 = vmatpush1.bf16.msra.mxu0 %v490
    %662 = vmatprep.subr.bf16.mxu0 %v499
    %663 = vmatpush1.bf16.msra.mxu0 %v498
    %664 = vmatprep.subr.bf16.mxu0 0
    %665 = vmatpush1.bf16.msra.mxu0 0
    %666 = vmatprep.subr.bf16.mxu0 0
    %667 = vmatpush1.bf16.msra.mxu0 0
    %668 = vmatprep.subr.bf16.mxu0 0
    %669 = vmatpush1.bf16.msra.mxu0 0
    %670 = vmatprep.subr.bf16.mxu0 0
    %671 = vmatpush1.bf16.msra.mxu0 0
    %672 = vmatprep.subr.bf16.mxu0 0
    %673 = vmatpush1.bf16.msra.mxu0 0
    %674 = vmatprep.subr.bf16.mxu0 0
    %675 = vmatpush1.bf16.msra.mxu0 0
    %676 = vmatprep.subr.bf16.mxu0 0
    %677 = vmatpush1.bf16.msra.mxu0 0
    %678 = vmatprep.subr.bf16.mxu0 0
    %679 = vmatpush1.bf16.msra.mxu0 0
    %680 = vmatprep.mubr.bf16.mxu0 0
    %681 = vmatmul.mubr.bf16.gmra.mrb[0].mxu0 %v139
    %v682 = vpop.f32.mrb[0].mxu0
    %v683 = vadd.f32 %v225, %v682
    %v684 = vpop.f32.mrb[0].mxu0
    %v685 = vadd.f32 %v229, %v684
    %v686 = vpop.f32.mrb[0].mxu0
    %v687 = vpop.f32.mrb[0].mxu0
    %688 = vdwg.mxu0
    %689 = vmatprep.subr.bf16.mxu0 %v445
    %690 = vmatpush1.bf16.msra.mxu0 %v444
    %691 = vmatprep.subr.bf16.mxu0 %v453
    %692 = vmatpush1.bf16.msra.mxu0 %v452
    %693 = vmatprep.subr.bf16.mxu0 %v461
    %694 = vmatpush1.bf16.msra.mxu0 %v460
    %695 = vmatprep.subr.bf16.mxu0 %v469
    %696 = vmatpush1.bf16.msra.mxu0 %v468
    %697 = vmatprep.subr.bf16.mxu0 %v477
    %698 = vmatpush1.bf16.msra.mxu0 %v476
    %699 = vmatprep.subr.bf16.mxu0 %v485
    %700 = vmatpush1.bf16.msra.mxu0 %v484
    %701 = vmatprep.subr.bf16.mxu0 %v493
    %702 = vmatpush1.bf16.msra.mxu0 %v492
    %703 = vmatprep.subr.bf16.mxu0 %v501
    %704 = vmatpush1.bf16.msra.mxu0 %v500
    %705 = vmatprep.subr.bf16.mxu0 0
    %706 = vmatpush1.bf16.msra.mxu0 0
    %707 = vmatprep.subr.bf16.mxu0 0
    %708 = vmatpush1.bf16.msra.mxu0 0
    %709 = vmatprep.subr.bf16.mxu0 0
    %710 = vmatpush1.bf16.msra.mxu0 0
    %711 = vmatprep.subr.bf16.mxu0 0
    %712 = vmatpush1.bf16.msra.mxu0 0
    %713 = vmatprep.subr.bf16.mxu0 0
    %714 = vmatpush1.bf16.msra.mxu0 0
    %715 = vmatprep.subr.bf16.mxu0 0
    %716 = vmatpush1.bf16.msra.mxu0 0
    %717 = vmatprep.subr.bf16.mxu0 0
    %718 = vmatpush1.bf16.msra.mxu0 0
    %719 = vmatprep.subr.bf16.mxu0 0
    %720 = vmatpush1.bf16.msra.mxu0 0
    %721 = vmatprep.mubr.bf16.mxu0 0
    %722 = vmatmul.mubr.bf16.gmra.mrb[0].mxu0 %v139
    %v723 = vpop.f32.mrb[0].mxu0
    %v724 = vadd.f32 %v233, %v723
    %v725 = vpop.f32.mrb[0].mxu0
    %v726 = vadd.f32 %v237, %v725
    %v727 = vpop.f32.mrb[0].mxu0
    %v728 = vpop.f32.mrb[0].mxu0
    %729 = vdwg.mxu0
    %v730 = vmax.f32 %v601, 0.0
    %v731 = vmax.f32 %v603, 0.0
    %v732 = vmax.f32 %v642, 0.0
    %v733 = vmax.f32 %v644, 0.0
    %v734 = vmax.f32 %v683, 0.0
    %v735 = vmax.f32 %v685, 0.0
    %v736 = vmax.f32 %v724, 0.0
    %v737 = vmax.f32 %v726, 0.0
    %v738 = vpack.c.bf16 %v730, %v730
    %v739 = vpack.c.bf16 %v731, %v731
    %v740 = vpack.c.bf16 %v732, %v732
    %v741 = vpack.c.bf16 %v733, %v733
    %v742 = vpack.c.bf16 %v734, %v734
    %v743 = vpack.c.bf16 %v735, %v735
    %v744 = vpack.c.bf16 %v736, %v736
    %v745 = vpack.c.bf16 %v737, %v737
    %v746 = vld [vmem:[#allocation7] sm:$0xff]
    %v747 = vld [vmem:[#allocation7 + $0x8] sm:$0xff]
    %v748 = vld [vmem:[#allocation7 + $0x10] sm:$0xff]
    %v749 = vld [vmem:[#allocation7 + $0x18] sm:$0xff]
    %v750 = vld [vmem:[#allocation7 + $0x20] sm:$0xff]
    %v751 = vld [vmem:[#allocation7 + $0x28] sm:$0xff]
    %v752 = vld [vmem:[#allocation7 + $0x30] sm:$0xff]
    %v753 = vld [vmem:[#allocation7 + $0x38] sm:$0xff]
    %v754 = vld [vmem:[#allocation7 + $0x40] sm:$0xff]
    %v755 = vld [vmem:[#allocation7 + $0x48] sm:$0xff]
    %v756 = vld [vmem:[#allocation7 + $0x50] sm:$0xff]
    %v757 = vld [vmem:[#allocation7 + $0x58] sm:$0xff]
    %v758 = vld [vmem:[#allocation7 + $0x60] sm:$0xff]
    %v759 = vld [vmem:[#allocation7 + $0x68] sm:$0xff]
    %v760 = vld [vmem:[#allocation7 + $0x70] sm:$0xff]
    %v761 = vld [vmem:[#allocation7 + $0x78] sm:$0xff]
    %v762 = vld [vmem:[#allocation7 + $0x80] sm:$0xff]
    %v763 = vld [vmem:[#allocation7 + $0x88] sm:$0xff]
    %v764 = vld [vmem:[#allocation7 + $0x90] sm:$0xff]
    %v765 = vld [vmem:[#allocation7 + $0x98] sm:$0xff]
    %v766 = vld [vmem:[#allocation7 + $0xa0] sm:$0xff]
    %v767 = vld [vmem:[#allocation7 + $0xa8] sm:$0xff]
    %v768 = vld [vmem:[#allocation7 + $0xb0] sm:$0xff]
    %v769 = vld [vmem:[#allocation7 + $0xb8] sm:$0xff]
    %v770 = vld [vmem:[#allocation7 + $0xc0] sm:$0xff]
    %v771 = vld [vmem:[#allocation7 + $0xc8] sm:$0xff]
    %v772 = vld [vmem:[#allocation7 + $0xd0] sm:$0xff]
    %v773 = vld [vmem:[#allocation7 + $0xd8] sm:$0xff]
    %v774 = vld [vmem:[#allocation7 + $0xe0] sm:$0xff]
    %v775 = vld [vmem:[#allocation7 + $0xe8] sm:$0xff]
    %v776 = vld [vmem:[#allocation7 + $0xf0] sm:$0xff]
    %v777 = vld [vmem:[#allocation7 + $0xf8] sm:$0xff]
    %v778 = vld [vmem:[#allocation7 + $0x100] sm:$0xff]
    %v779 = vld [vmem:[#allocation7 + $0x108] sm:$0xff]
    %v780 = vld [vmem:[#allocation7 + $0x110] sm:$0xff]
    %v781 = vld [vmem:[#allocation7 + $0x118] sm:$0xff]
    %v782 = vld [vmem:[#allocation7 + $0x120] sm:$0xff]
    %v783 = vld [vmem:[#allocation7 + $0x128] sm:$0xff]
    %v784 = vld [vmem:[#allocation7 + $0x130] sm:$0xff]
    %v785 = vld [vmem:[#allocation7 + $0x138] sm:$0xff]
    %v786 = vld [vmem:[#allocation7 + $0x140] sm:$0xff]
    %v787 = vld [vmem:[#allocation7 + $0x148] sm:$0xff]
    %v788 = vld [vmem:[#allocation7 + $0x150] sm:$0xff]
    %v789 = vld [vmem:[#allocation7 + $0x158] sm:$0xff]
    %v790 = vld [vmem:[#allocation7 + $0x160] sm:$0xff]
    %v791 = vld [vmem:[#allocation7 + $0x168] sm:$0xff]
    %v792 = vld [vmem:[#allocation7 + $0x170] sm:$0xff]
    %v793 = vld [vmem:[#allocation7 + $0x178] sm:$0xff]
    %v794 = vld [vmem:[#allocation7 + $0x180] sm:$0xff]
    %v795 = vld [vmem:[#allocation7 + $0x188] sm:$0xff]
    %v796 = vld [vmem:[#allocation7 + $0x190] sm:$0xff]
    %v797 = vld [vmem:[#allocation7 + $0x198] sm:$0xff]
    %v798 = vld [vmem:[#allocation7 + $0x1a0] sm:$0xff]
    %v799 = vld [vmem:[#allocation7 + $0x1a8] sm:$0xff]
    %v800 = vld [vmem:[#allocation7 + $0x1b0] sm:$0xff]
    %v801 = vld [vmem:[#allocation7 + $0x1b8] sm:$0xff]
    %v802 = vld [vmem:[#allocation7 + $0x1c0] sm:$0xff]
    %v803 = vld [vmem:[#allocation7 + $0x1c8] sm:$0xff]
    %v804 = vld [vmem:[#allocation7 + $0x1d0] sm:$0xff]
    %v805 = vld [vmem:[#allocation7 + $0x1d8] sm:$0xff]
    %v806 = vld [vmem:[#allocation7 + $0x1e0] sm:$0xff]
    %v807 = vld [vmem:[#allocation7 + $0x1e8] sm:$0xff]
    %v808 = vld [vmem:[#allocation7 + $0x1f0] sm:$0xff]
    %v809 = vld [vmem:[#allocation7 + $0x1f8] sm:$0xff]
    %v810 = vld [vmem:[#allocation7 + $0x200] sm:$0xff]
    %v811 = vld [vmem:[#allocation7 + $0x208] sm:$0xff]
    %v812 = vld [vmem:[#allocation7 + $0x210] sm:$0xff]
    %v813 = vld [vmem:[#allocation7 + $0x218] sm:$0xff]
    %v814 = vld [vmem:[#allocation7 + $0x220] sm:$0xff]
    %v815 = vld [vmem:[#allocation7 + $0x228] sm:$0xff]
    %v816 = vld [vmem:[#allocation7 + $0x230] sm:$0xff]
    %v817 = vld [vmem:[#allocation7 + $0x238] sm:$0xff]
    %v818 = vld [vmem:[#allocation7 + $0x240] sm:$0xff]
    %v819 = vld [vmem:[#allocation7 + $0x248] sm:$0xff]
    %v820 = vld [vmem:[#allocation7 + $0x250] sm:$0xff]
    %v821 = vld [vmem:[#allocation7 + $0x258] sm:$0xff]
    %v822 = vld [vmem:[#allocation7 + $0x260] sm:$0xff]
    %v823 = vld [vmem:[#allocation7 + $0x268] sm:$0xff]
    %v824 = vld [vmem:[#allocation7 + $0x270] sm:$0xff]
    %v825 = vld [vmem:[#allocation7 + $0x278] sm:$0xff]
    %v826 = vld [vmem:[#allocation7 + $0x280] sm:$0xff]
    %v827 = vld [vmem:[#allocation7 + $0x288] sm:$0xff]
    %v828 = vld [vmem:[#allocation7 + $0x290] sm:$0xff]
    %v829 = vld [vmem:[#allocation7 + $0x298] sm:$0xff]
    %v830 = vld [vmem:[#allocation7 + $0x2a0] sm:$0xff]
    %v831 = vld [vmem:[#allocation7 + $0x2a8] sm:$0xff]
    %v832 = vld [vmem:[#allocation7 + $0x2b0] sm:$0xff]
    %v833 = vld [vmem:[#allocation7 + $0x2b8] sm:$0xff]
    %v834 = vld [vmem:[#allocation7 + $0x2c0] sm:$0xff]
    %v835 = vld [vmem:[#allocation7 + $0x2c8] sm:$0xff]
    %v836 = vld [vmem:[#allocation7 + $0x2d0] sm:$0xff]
    %v837 = vld [vmem:[#allocation7 + $0x2d8] sm:$0xff]
    %v838 = vld [vmem:[#allocation7 + $0x2e0] sm:$0xff]
    %v839 = vld [vmem:[#allocation7 + $0x2e8] sm:$0xff]
    %v840 = vld [vmem:[#allocation7 + $0x2f0] sm:$0xff]
    %v841 = vld [vmem:[#allocation7 + $0x2f8] sm:$0xff]
    %v842 = vld [vmem:[#allocation7 + $0x300] sm:$0xff]
    %v843 = vld [vmem:[#allocation7 + $0x308] sm:$0xff]
    %v844 = vld [vmem:[#allocation7 + $0x310] sm:$0xff]
    %v845 = vld [vmem:[#allocation7 + $0x318] sm:$0xff]
    %v846 = vld [vmem:[#allocation7 + $0x320] sm:$0xff]
    %v847 = vld [vmem:[#allocation7 + $0x328] sm:$0xff]
    %v848 = vld [vmem:[#allocation7 + $0x330] sm:$0xff]
    %v849 = vld [vmem:[#allocation7 + $0x338] sm:$0xff]
    %v850 = vld [vmem:[#allocation7 + $0x340] sm:$0xff]
    %v851 = vld [vmem:[#allocation7 + $0x348] sm:$0xff]
    %v852 = vld [vmem:[#allocation7 + $0x350] sm:$0xff]
    %v853 = vld [vmem:[#allocation7 + $0x358] sm:$0xff]
    %v854 = vld [vmem:[#allocation7 + $0x360] sm:$0xff]
    %v855 = vld [vmem:[#allocation7 + $0x368] sm:$0xff]
    %v856 = vld [vmem:[#allocation7 + $0x370] sm:$0xff]
    %v857 = vld [vmem:[#allocation7 + $0x378] sm:$0xff]
    %v858 = vld [vmem:[#allocation7 + $0x380] sm:$0xff]
    %v859 = vld [vmem:[#allocation7 + $0x388] sm:$0xff]
    %v860 = vld [vmem:[#allocation7 + $0x390] sm:$0xff]
    %v861 = vld [vmem:[#allocation7 + $0x398] sm:$0xff]
    %v862 = vld [vmem:[#allocation7 + $0x3a0] sm:$0xff]
    %v863 = vld [vmem:[#allocation7 + $0x3a8] sm:$0xff]
    %v864 = vld [vmem:[#allocation7 + $0x3b0] sm:$0xff]
    %v865 = vld [vmem:[#allocation7 + $0x3b8] sm:$0xff]
    %v866 = vld [vmem:[#allocation7 + $0x3c0] sm:$0xff]
    %v867 = vld [vmem:[#allocation7 + $0x3c8] sm:$0xff]
    %v868 = vld [vmem:[#allocation7 + $0x3d0] sm:$0xff]
    %v869 = vld [vmem:[#allocation7 + $0x3d8] sm:$0xff]
    %v870 = vld [vmem:[#allocation7 + $0x3e0] sm:$0xff]
    %v871 = vld [vmem:[#allocation7 + $0x3e8] sm:$0xff]
    %v872 = vld [vmem:[#allocation7 + $0x3f0] sm:$0xff]
    %v873 = vld [vmem:[#allocation7 + $0x3f8] sm:$0xff]
    %v874 = vld [vmem:[#allocation7 + $0x400] sm:$0xff]
    %v875 = vld [vmem:[#allocation7 + $0x408] sm:$0xff]
    %v876 = vld [vmem:[#allocation7 + $0x410] sm:$0xff]
    %v877 = vld [vmem:[#allocation7 + $0x418] sm:$0xff]
    %v878 = vld [vmem:[#allocation7 + $0x420] sm:$0xff]
    %v879 = vld [vmem:[#allocation7 + $0x428] sm:$0xff]
    %v880 = vld [vmem:[#allocation7 + $0x430] sm:$0xff]
    %v881 = vld [vmem:[#allocation7 + $0x438] sm:$0xff]
    %v882 = vld [vmem:[#allocation7 + $0x440] sm:$0xff]
    %v883 = vld [vmem:[#allocation7 + $0x448] sm:$0xff]
    %v884 = vld [vmem:[#allocation7 + $0x450] sm:$0xff]
    %v885 = vld [vmem:[#allocation7 + $0x458] sm:$0xff]
    %v886 = vld [vmem:[#allocation7 + $0x460] sm:$0xff]
    %v887 = vld [vmem:[#allocation7 + $0x468] sm:$0xff]
    %v888 = vld [vmem:[#allocation7 + $0x470] sm:$0xff]
    %v889 = vld [vmem:[#allocation7 + $0x478] sm:$0xff]
    %v890 = vld [vmem:[#allocation7 + $0x480] sm:$0xff]
    %v891 = vld [vmem:[#allocation7 + $0x488] sm:$0xff]
    %v892 = vld [vmem:[#allocation7 + $0x490] sm:$0xff]
    %v893 = vld [vmem:[#allocation7 + $0x498] sm:$0xff]
    %v894 = vld [vmem:[#allocation7 + $0x4a0] sm:$0xff]
    %v895 = vld [vmem:[#allocation7 + $0x4a8] sm:$0xff]
    %v896 = vld [vmem:[#allocation7 + $0x4b0] sm:$0xff]
    %v897 = vld [vmem:[#allocation7 + $0x4b8] sm:$0xff]
    %v898 = vld [vmem:[#allocation7 + $0x4c0] sm:$0xff]
    %v899 = vld [vmem:[#allocation7 + $0x4c8] sm:$0xff]
    %v900 = vld [vmem:[#allocation7 + $0x4d0] sm:$0xff]
    %v901 = vld [vmem:[#allocation7 + $0x4d8] sm:$0xff]
    %v902 = vld [vmem:[#allocation7 + $0x4e0] sm:$0xff]
    %v903 = vld [vmem:[#allocation7 + $0x4e8] sm:$0xff]
    %v904 = vld [vmem:[#allocation7 + $0x4f0] sm:$0xff]
    %v905 = vld [vmem:[#allocation7 + $0x4f8] sm:$0xff]
    %v906 = vld [vmem:[#allocation7 + $0x500] sm:$0xff]
    %v907 = vld [vmem:[#allocation7 + $0x508] sm:$0xff]
    %v908 = vld [vmem:[#allocation7 + $0x510] sm:$0xff]
    %v909 = vld [vmem:[#allocation7 + $0x518] sm:$0xff]
    %v910 = vld [vmem:[#allocation7 + $0x520] sm:$0xff]
    %v911 = vld [vmem:[#allocation7 + $0x528] sm:$0xff]
    %v912 = vld [vmem:[#allocation7 + $0x530] sm:$0xff]
    %v913 = vld [vmem:[#allocation7 + $0x538] sm:$0xff]
    %v914 = vld [vmem:[#allocation7 + $0x540] sm:$0xff]
    %v915 = vld [vmem:[#allocation7 + $0x548] sm:$0xff]
    %v916 = vld [vmem:[#allocation7 + $0x550] sm:$0xff]
    %v917 = vld [vmem:[#allocation7 + $0x558] sm:$0xff]
    %v918 = vld [vmem:[#allocation7 + $0x560] sm:$0xff]
    %v919 = vld [vmem:[#allocation7 + $0x568] sm:$0xff]
    %v920 = vld [vmem:[#allocation7 + $0x570] sm:$0xff]
    %v921 = vld [vmem:[#allocation7 + $0x578] sm:$0xff]
    %v922 = vld [vmem:[#allocation7 + $0x580] sm:$0xff]
    %v923 = vld [vmem:[#allocation7 + $0x588] sm:$0xff]
    %v924 = vld [vmem:[#allocation7 + $0x590] sm:$0xff]
    %v925 = vld [vmem:[#allocation7 + $0x598] sm:$0xff]
    %v926 = vld [vmem:[#allocation7 + $0x5a0] sm:$0xff]
    %v927 = vld [vmem:[#allocation7 + $0x5a8] sm:$0xff]
    %v928 = vld [vmem:[#allocation7 + $0x5b0] sm:$0xff]
    %v929 = vld [vmem:[#allocation7 + $0x5b8] sm:$0xff]
    %v930 = vld [vmem:[#allocation7 + $0x5c0] sm:$0xff]
    %v931 = vld [vmem:[#allocation7 + $0x5c8] sm:$0xff]
    %v932 = vld [vmem:[#allocation7 + $0x5d0] sm:$0xff]
    %v933 = vld [vmem:[#allocation7 + $0x5d8] sm:$0xff]
    %v934 = vld [vmem:[#allocation7 + $0x5e0] sm:$0xff]
    %v935 = vld [vmem:[#allocation7 + $0x5e8] sm:$0xff]
    %v936 = vld [vmem:[#allocation7 + $0x5f0] sm:$0xff]
    %v937 = vld [vmem:[#allocation7 + $0x5f8] sm:$0xff]
    %v938 = vld [vmem:[#allocation7 + $0x600] sm:$0xff]
    %v939 = vld [vmem:[#allocation7 + $0x608] sm:$0xff]
    %v940 = vld [vmem:[#allocation7 + $0x610] sm:$0xff]
    %v941 = vld [vmem:[#allocation7 + $0x618] sm:$0xff]
    %v942 = vld [vmem:[#allocation7 + $0x620] sm:$0xff]
    %v943 = vld [vmem:[#allocation7 + $0x628] sm:$0xff]
    %v944 = vld [vmem:[#allocation7 + $0x630] sm:$0xff]
    %v945 = vld [vmem:[#allocation7 + $0x638] sm:$0xff]
    %v946 = vld [vmem:[#allocation7 + $0x640] sm:$0xff]
    %v947 = vld [vmem:[#allocation7 + $0x648] sm:$0xff]
    %v948 = vld [vmem:[#allocation7 + $0x650] sm:$0xff]
    %v949 = vld [vmem:[#allocation7 + $0x658] sm:$0xff]
    %v950 = vld [vmem:[#allocation7 + $0x660] sm:$0xff]
    %v951 = vld [vmem:[#allocation7 + $0x668] sm:$0xff]
    %v952 = vld [vmem:[#allocation7 + $0x670] sm:$0xff]
    %v953 = vld [vmem:[#allocation7 + $0x678] sm:$0xff]
    %v954 = vld [vmem:[#allocation7 + $0x680] sm:$0xff]
    %v955 = vld [vmem:[#allocation7 + $0x688] sm:$0xff]
    %v956 = vld [vmem:[#allocation7 + $0x690] sm:$0xff]
    %v957 = vld [vmem:[#allocation7 + $0x698] sm:$0xff]
    %v958 = vld [vmem:[#allocation7 + $0x6a0] sm:$0xff]
    %v959 = vld [vmem:[#allocation7 + $0x6a8] sm:$0xff]
    %v960 = vld [vmem:[#allocation7 + $0x6b0] sm:$0xff]
    %v961 = vld [vmem:[#allocation7 + $0x6b8] sm:$0xff]
    %v962 = vld [vmem:[#allocation7 + $0x6c0] sm:$0xff]
    %v963 = vld [vmem:[#allocation7 + $0x6c8] sm:$0xff]
    %v964 = vld [vmem:[#allocation7 + $0x6d0] sm:$0xff]
    %v965 = vld [vmem:[#allocation7 + $0x6d8] sm:$0xff]
    %v966 = vld [vmem:[#allocation7 + $0x6e0] sm:$0xff]
    %v967 = vld [vmem:[#allocation7 + $0x6e8] sm:$0xff]
    %v968 = vld [vmem:[#allocation7 + $0x6f0] sm:$0xff]
    %v969 = vld [vmem:[#allocation7 + $0x6f8] sm:$0xff]
    %v970 = vld [vmem:[#allocation7 + $0x700] sm:$0xff]
    %v971 = vld [vmem:[#allocation7 + $0x708] sm:$0xff]
    %v972 = vld [vmem:[#allocation7 + $0x710] sm:$0xff]
    %v973 = vld [vmem:[#allocation7 + $0x718] sm:$0xff]
    %v974 = vld [vmem:[#allocation7 + $0x720] sm:$0xff]
    %v975 = vld [vmem:[#allocation7 + $0x728] sm:$0xff]
    %v976 = vld [vmem:[#allocation7 + $0x730] sm:$0xff]
    %v977 = vld [vmem:[#allocation7 + $0x738] sm:$0xff]
    %v978 = vld [vmem:[#allocation7 + $0x740] sm:$0xff]
    %v979 = vld [vmem:[#allocation7 + $0x748] sm:$0xff]
    %v980 = vld [vmem:[#allocation7 + $0x750] sm:$0xff]
    %v981 = vld [vmem:[#allocation7 + $0x758] sm:$0xff]
    %v982 = vld [vmem:[#allocation7 + $0x760] sm:$0xff]
    %v983 = vld [vmem:[#allocation7 + $0x768] sm:$0xff]
    %v984 = vld [vmem:[#allocation7 + $0x770] sm:$0xff]
    %v985 = vld [vmem:[#allocation7 + $0x778] sm:$0xff]
    %v986 = vld [vmem:[#allocation7 + $0x780] sm:$0xff]
    %v987 = vld [vmem:[#allocation7 + $0x788] sm:$0xff]
    %v988 = vld [vmem:[#allocation7 + $0x790] sm:$0xff]
    %v989 = vld [vmem:[#allocation7 + $0x798] sm:$0xff]
    %v990 = vld [vmem:[#allocation7 + $0x7a0] sm:$0xff]
    %v991 = vld [vmem:[#allocation7 + $0x7a8] sm:$0xff]
    %v992 = vld [vmem:[#allocation7 + $0x7b0] sm:$0xff]
    %v993 = vld [vmem:[#allocation7 + $0x7b8] sm:$0xff]
    %v994 = vld [vmem:[#allocation7 + $0x7c0] sm:$0xff]
    %v995 = vld [vmem:[#allocation7 + $0x7c8] sm:$0xff]
    %v996 = vld [vmem:[#allocation7 + $0x7d0] sm:$0xff]
    %v997 = vld [vmem:[#allocation7 + $0x7d8] sm:$0xff]
    %v998 = vld [vmem:[#allocation7 + $0x7e0] sm:$0xff]
    %v999 = vld [vmem:[#allocation7 + $0x7e8] sm:$0xff]
    %v1000 = vld [vmem:[#allocation7 + $0x7f0] sm:$0xff]
    %v1001 = vld [vmem:[#allocation7 + $0x7f8] sm:$0xff]
    %v1002 = vld [vmem:[#allocation8] sm:$0xf]
    %v1004 = vlaneseq
    %v1005 = vshrl.u32 %v1004, 7
    %v1006 = vsub.s32 0, %v1005
    %v1007 = vrot.slane %v1002, %v1006
    %v1008 = vlaneseq
    %v1009 = vshrl.u32 %v1008, 7
    %v1010 = vsub.s32 1, %v1009
    %v1011 = vrot.slane %v1002, %v1010
    %v1012 = vlaneseq
    %v1013 = vshrl.u32 %v1012, 7
    %v1014 = vsub.s32 2, %v1013
    %v1015 = vrot.slane %v1002, %v1014
    %v1016 = vlaneseq
    %v1017 = vshrl.u32 %v1016, 7
    %v1018 = vsub.s32 3, %v1017
    %v1019 = vrot.slane %v1002, %v1018
    %v1280 = vunpack.c.l.b16 %v746
    %v1281 = vunpack.c.h.b16 %v746
    %v1282 = vunpack.c.l.b16 %v747
    %v1283 = vunpack.c.h.b16 %v747
    %v1284 = vunpack.c.l.b16 %v748
    %v1285 = vunpack.c.h.b16 %v748
    %v1286 = vunpack.c.l.b16 %v749
    %v1287 = vunpack.c.h.b16 %v749
    %v1288 = vunpack.c.l.b16 %v750
    %v1289 = vunpack.c.h.b16 %v750
    %v1290 = vunpack.c.l.b16 %v751
    %v1291 = vunpack.c.h.b16 %v751
    %v1292 = vunpack.c.l.b16 %v752
    %v1293 = vunpack.c.h.b16 %v752
    %v1294 = vunpack.c.l.b16 %v753
    %v1295 = vunpack.c.h.b16 %v753
    %v1296 = vunpack.c.l.b16 %v754
    %v1297 = vunpack.c.h.b16 %v754
    %v1298 = vunpack.c.l.b16 %v755
    %v1299 = vunpack.c.h.b16 %v755
    %v1300 = vunpack.c.l.b16 %v756
    %v1301 = vunpack.c.h.b16 %v756
    %v1302 = vunpack.c.l.b16 %v757
    %v1303 = vunpack.c.h.b16 %v757
    %v1304 = vunpack.c.l.b16 %v758
    %v1305 = vunpack.c.h.b16 %v758
    %v1306 = vunpack.c.l.b16 %v759
    %v1307 = vunpack.c.h.b16 %v759
    %v1308 = vunpack.c.l.b16 %v760
    %v1309 = vunpack.c.h.b16 %v760
    %v1310 = vunpack.c.l.b16 %v761
    %v1311 = vunpack.c.h.b16 %v761
    %v1312 = vunpack.c.l.b16 %v762
    %v1313 = vunpack.c.h.b16 %v762
    %v1314 = vunpack.c.l.b16 %v763
    %v1315 = vunpack.c.h.b16 %v763
    %v1316 = vunpack.c.l.b16 %v764
    %v1317 = vunpack.c.h.b16 %v764
    %v1318 = vunpack.c.l.b16 %v765
    %v1319 = vunpack.c.h.b16 %v765
    %v1320 = vunpack.c.l.b16 %v766
    %v1321 = vunpack.c.h.b16 %v766
    %v1322 = vunpack.c.l.b16 %v767
    %v1323 = vunpack.c.h.b16 %v767
    %v1324 = vunpack.c.l.b16 %v768
    %v1325 = vunpack.c.h.b16 %v768
    %v1326 = vunpack.c.l.b16 %v769
    %v1327 = vunpack.c.h.b16 %v769
    %v1328 = vunpack.c.l.b16 %v770
    %v1329 = vunpack.c.h.b16 %v770
    %v1330 = vunpack.c.l.b16 %v771
    %v1331 = vunpack.c.h.b16 %v771
    %v1332 = vunpack.c.l.b16 %v772
    %v1333 = vunpack.c.h.b16 %v772
    %v1334 = vunpack.c.l.b16 %v773
    %v1335 = vunpack.c.h.b16 %v773
    %v1336 = vunpack.c.l.b16 %v774
    %v1337 = vunpack.c.h.b16 %v774
    %v1338 = vunpack.c.l.b16 %v775
    %v1339 = vunpack.c.h.b16 %v775
    %v1340 = vunpack.c.l.b16 %v776
    %v1341 = vunpack.c.h.b16 %v776
    %v1342 = vunpack.c.l.b16 %v777
    %v1343 = vunpack.c.h.b16 %v777
    %v1344 = vunpack.c.l.b16 %v778
    %v1345 = vunpack.c.h.b16 %v778
    %v1346 = vunpack.c.l.b16 %v779
    %v1347 = vunpack.c.h.b16 %v779
    %v1348 = vunpack.c.l.b16 %v780
    %v1349 = vunpack.c.h.b16 %v780
    %v1350 = vunpack.c.l.b16 %v781
    %v1351 = vunpack.c.h.b16 %v781
    %v1352 = vunpack.c.l.b16 %v782
    %v1353 = vunpack.c.h.b16 %v782
    %v1354 = vunpack.c.l.b16 %v783
    %v1355 = vunpack.c.h.b16 %v783
    %v1356 = vunpack.c.l.b16 %v784
    %v1357 = vunpack.c.h.b16 %v784
    %v1358 = vunpack.c.l.b16 %v785
    %v1359 = vunpack.c.h.b16 %v785
    %v1360 = vunpack.c.l.b16 %v786
    %v1361 = vunpack.c.h.b16 %v786
    %v1362 = vunpack.c.l.b16 %v787
    %v1363 = vunpack.c.h.b16 %v787
    %v1364 = vunpack.c.l.b16 %v788
    %v1365 = vunpack.c.h.b16 %v788
    %v1366 = vunpack.c.l.b16 %v789
    %v1367 = vunpack.c.h.b16 %v789
    %v1368 = vunpack.c.l.b16 %v790
    %v1369 = vunpack.c.h.b16 %v790
    %v1370 = vunpack.c.l.b16 %v791
    %v1371 = vunpack.c.h.b16 %v791
    %v1372 = vunpack.c.l.b16 %v792
    %v1373 = vunpack.c.h.b16 %v792
    %v1374 = vunpack.c.l.b16 %v793
    %v1375 = vunpack.c.h.b16 %v793
    %v1376 = vunpack.c.l.b16 %v794
    %v1377 = vunpack.c.h.b16 %v794
    %v1378 = vunpack.c.l.b16 %v795
    %v1379 = vunpack.c.h.b16 %v795
    %v1380 = vunpack.c.l.b16 %v796
    %v1381 = vunpack.c.h.b16 %v796
    %v1382 = vunpack.c.l.b16 %v797
    %v1383 = vunpack.c.h.b16 %v797
    %v1384 = vunpack.c.l.b16 %v798
    %v1385 = vunpack.c.h.b16 %v798
    %v1386 = vunpack.c.l.b16 %v799
    %v1387 = vunpack.c.h.b16 %v799
    %v1388 = vunpack.c.l.b16 %v800
    %v1389 = vunpack.c.h.b16 %v800
    %v1390 = vunpack.c.l.b16 %v801
    %v1391 = vunpack.c.h.b16 %v801
    %v1392 = vunpack.c.l.b16 %v802
    %v1393 = vunpack.c.h.b16 %v802
    %v1394 = vunpack.c.l.b16 %v803
    %v1395 = vunpack.c.h.b16 %v803
    %v1396 = vunpack.c.l.b16 %v804
    %v1397 = vunpack.c.h.b16 %v804
    %v1398 = vunpack.c.l.b16 %v805
    %v1399 = vunpack.c.h.b16 %v805
    %v1400 = vunpack.c.l.b16 %v806
    %v1401 = vunpack.c.h.b16 %v806
    %v1402 = vunpack.c.l.b16 %v807
    %v1403 = vunpack.c.h.b16 %v807
    %v1404 = vunpack.c.l.b16 %v808
    %v1405 = vunpack.c.h.b16 %v808
    %v1406 = vunpack.c.l.b16 %v809
    %v1407 = vunpack.c.h.b16 %v809
    %v1408 = vunpack.c.l.b16 %v810
    %v1409 = vunpack.c.h.b16 %v810
    %v1410 = vunpack.c.l.b16 %v811
    %v1411 = vunpack.c.h.b16 %v811
    %v1412 = vunpack.c.l.b16 %v812
    %v1413 = vunpack.c.h.b16 %v812
    %v1414 = vunpack.c.l.b16 %v813
    %v1415 = vunpack.c.h.b16 %v813
    %v1416 = vunpack.c.l.b16 %v814
    %v1417 = vunpack.c.h.b16 %v814
    %v1418 = vunpack.c.l.b16 %v815
    %v1419 = vunpack.c.h.b16 %v815
    %v1420 = vunpack.c.l.b16 %v816
    %v1421 = vunpack.c.h.b16 %v816
    %v1422 = vunpack.c.l.b16 %v817
    %v1423 = vunpack.c.h.b16 %v817
    %v1424 = vunpack.c.l.b16 %v818
    %v1425 = vunpack.c.h.b16 %v818
    %v1426 = vunpack.c.l.b16 %v819
    %v1427 = vunpack.c.h.b16 %v819
    %v1428 = vunpack.c.l.b16 %v820
    %v1429 = vunpack.c.h.b16 %v820
    %v1430 = vunpack.c.l.b16 %v821
    %v1431 = vunpack.c.h.b16 %v821
    %v1432 = vunpack.c.l.b16 %v822
    %v1433 = vunpack.c.h.b16 %v822
    %v1434 = vunpack.c.l.b16 %v823
    %v1435 = vunpack.c.h.b16 %v823
    %v1436 = vunpack.c.l.b16 %v824
    %v1437 = vunpack.c.h.b16 %v824
    %v1438 = vunpack.c.l.b16 %v825
    %v1439 = vunpack.c.h.b16 %v825
    %v1440 = vunpack.c.l.b16 %v826
    %v1441 = vunpack.c.h.b16 %v826
    %v1442 = vunpack.c.l.b16 %v827
    %v1443 = vunpack.c.h.b16 %v827
    %v1444 = vunpack.c.l.b16 %v828
    %v1445 = vunpack.c.h.b16 %v828
    %v1446 = vunpack.c.l.b16 %v829
    %v1447 = vunpack.c.h.b16 %v829
    %v1448 = vunpack.c.l.b16 %v830
    %v1449 = vunpack.c.h.b16 %v830
    %v1450 = vunpack.c.l.b16 %v831
    %v1451 = vunpack.c.h.b16 %v831
    %v1452 = vunpack.c.l.b16 %v832
    %v1453 = vunpack.c.h.b16 %v832
    %v1454 = vunpack.c.l.b16 %v833
    %v1455 = vunpack.c.h.b16 %v833
    %v1456 = vunpack.c.l.b16 %v834
    %v1457 = vunpack.c.h.b16 %v834
    %v1458 = vunpack.c.l.b16 %v835
    %v1459 = vunpack.c.h.b16 %v835
    %v1460 = vunpack.c.l.b16 %v836
    %v1461 = vunpack.c.h.b16 %v836
    %v1462 = vunpack.c.l.b16 %v837
    %v1463 = vunpack.c.h.b16 %v837
    %v1464 = vunpack.c.l.b16 %v838
    %v1465 = vunpack.c.h.b16 %v838
    %v1466 = vunpack.c.l.b16 %v839
    %v1467 = vunpack.c.h.b16 %v839
    %v1468 = vunpack.c.l.b16 %v840
    %v1469 = vunpack.c.h.b16 %v840
    %v1470 = vunpack.c.l.b16 %v841
    %v1471 = vunpack.c.h.b16 %v841
    %v1472 = vunpack.c.l.b16 %v842
    %v1473 = vunpack.c.h.b16 %v842
    %v1474 = vunpack.c.l.b16 %v843
    %v1475 = vunpack.c.h.b16 %v843
    %v1476 = vunpack.c.l.b16 %v844
    %v1477 = vunpack.c.h.b16 %v844
    %v1478 = vunpack.c.l.b16 %v845
    %v1479 = vunpack.c.h.b16 %v845
    %v1480 = vunpack.c.l.b16 %v846
    %v1481 = vunpack.c.h.b16 %v846
    %v1482 = vunpack.c.l.b16 %v847
    %v1483 = vunpack.c.h.b16 %v847
    %v1484 = vunpack.c.l.b16 %v848
    %v1485 = vunpack.c.h.b16 %v848
    %v1486 = vunpack.c.l.b16 %v849
    %v1487 = vunpack.c.h.b16 %v849
    %v1488 = vunpack.c.l.b16 %v850
    %v1489 = vunpack.c.h.b16 %v850
    %v1490 = vunpack.c.l.b16 %v851
    %v1491 = vunpack.c.h.b16 %v851
    %v1492 = vunpack.c.l.b16 %v852
    %v1493 = vunpack.c.h.b16 %v852
    %v1494 = vunpack.c.l.b16 %v853
    %v1495 = vunpack.c.h.b16 %v853
    %v1496 = vunpack.c.l.b16 %v854
    %v1497 = vunpack.c.h.b16 %v854
    %v1498 = vunpack.c.l.b16 %v855
    %v1499 = vunpack.c.h.b16 %v855
    %v1500 = vunpack.c.l.b16 %v856
    %v1501 = vunpack.c.h.b16 %v856
    %v1502 = vunpack.c.l.b16 %v857
    %v1503 = vunpack.c.h.b16 %v857
    %v1504 = vunpack.c.l.b16 %v858
    %v1505 = vunpack.c.h.b16 %v858
    %v1506 = vunpack.c.l.b16 %v859
    %v1507 = vunpack.c.h.b16 %v859
    %v1508 = vunpack.c.l.b16 %v860
    %v1509 = vunpack.c.h.b16 %v860
    %v1510 = vunpack.c.l.b16 %v861
    %v1511 = vunpack.c.h.b16 %v861
    %v1512 = vunpack.c.l.b16 %v862
    %v1513 = vunpack.c.h.b16 %v862
    %v1514 = vunpack.c.l.b16 %v863
    %v1515 = vunpack.c.h.b16 %v863
    %v1516 = vunpack.c.l.b16 %v864
    %v1517 = vunpack.c.h.b16 %v864
    %v1518 = vunpack.c.l.b16 %v865
    %v1519 = vunpack.c.h.b16 %v865
    %v1520 = vunpack.c.l.b16 %v866
    %v1521 = vunpack.c.h.b16 %v866
    %v1522 = vunpack.c.l.b16 %v867
    %v1523 = vunpack.c.h.b16 %v867
    %v1524 = vunpack.c.l.b16 %v868
    %v1525 = vunpack.c.h.b16 %v868
    %v1526 = vunpack.c.l.b16 %v869
    %v1527 = vunpack.c.h.b16 %v869
    %v1528 = vunpack.c.l.b16 %v870
    %v1529 = vunpack.c.h.b16 %v870
    %v1530 = vunpack.c.l.b16 %v871
    %v1531 = vunpack.c.h.b16 %v871
    %v1532 = vunpack.c.l.b16 %v872
    %v1533 = vunpack.c.h.b16 %v872
    %v1534 = vunpack.c.l.b16 %v873
    %v1535 = vunpack.c.h.b16 %v873
    %v1536 = vunpack.c.l.b16 %v874
    %v1537 = vunpack.c.h.b16 %v874
    %v1538 = vunpack.c.l.b16 %v875
    %v1539 = vunpack.c.h.b16 %v875
    %v1540 = vunpack.c.l.b16 %v876
    %v1541 = vunpack.c.h.b16 %v876
    %v1542 = vunpack.c.l.b16 %v877
    %v1543 = vunpack.c.h.b16 %v877
    %v1544 = vunpack.c.l.b16 %v878
    %v1545 = vunpack.c.h.b16 %v878
    %v1546 = vunpack.c.l.b16 %v879
    %v1547 = vunpack.c.h.b16 %v879
    %v1548 = vunpack.c.l.b16 %v880
    %v1549 = vunpack.c.h.b16 %v880
    %v1550 = vunpack.c.l.b16 %v881
    %v1551 = vunpack.c.h.b16 %v881
    %v1552 = vunpack.c.l.b16 %v882
    %v1553 = vunpack.c.h.b16 %v882
    %v1554 = vunpack.c.l.b16 %v883
    %v1555 = vunpack.c.h.b16 %v883
    %v1556 = vunpack.c.l.b16 %v884
    %v1557 = vunpack.c.h.b16 %v884
    %v1558 = vunpack.c.l.b16 %v885
    %v1559 = vunpack.c.h.b16 %v885
    %v1560 = vunpack.c.l.b16 %v886
    %v1561 = vunpack.c.h.b16 %v886
    %v1562 = vunpack.c.l.b16 %v887
    %v1563 = vunpack.c.h.b16 %v887
    %v1564 = vunpack.c.l.b16 %v888
    %v1565 = vunpack.c.h.b16 %v888
    %v1566 = vunpack.c.l.b16 %v889
    %v1567 = vunpack.c.h.b16 %v889
    %v1568 = vunpack.c.l.b16 %v890
    %v1569 = vunpack.c.h.b16 %v890
    %v1570 = vunpack.c.l.b16 %v891
    %v1571 = vunpack.c.h.b16 %v891
    %v1572 = vunpack.c.l.b16 %v892
    %v1573 = vunpack.c.h.b16 %v892
    %v1574 = vunpack.c.l.b16 %v893
    %v1575 = vunpack.c.h.b16 %v893
    %v1576 = vunpack.c.l.b16 %v894
    %v1577 = vunpack.c.h.b16 %v894
    %v1578 = vunpack.c.l.b16 %v895
    %v1579 = vunpack.c.h.b16 %v895
    %v1580 = vunpack.c.l.b16 %v896
    %v1581 = vunpack.c.h.b16 %v896
    %v1582 = vunpack.c.l.b16 %v897
    %v1583 = vunpack.c.h.b16 %v897
    %v1584 = vunpack.c.l.b16 %v898
    %v1585 = vunpack.c.h.b16 %v898
    %v1586 = vunpack.c.l.b16 %v899
    %v1587 = vunpack.c.h.b16 %v899
    %v1588 = vunpack.c.l.b16 %v900
    %v1589 = vunpack.c.h.b16 %v900
    %v1590 = vunpack.c.l.b16 %v901
    %v1591 = vunpack.c.h.b16 %v901
    %v1592 = vunpack.c.l.b16 %v902
    %v1593 = vunpack.c.h.b16 %v902
    %v1594 = vunpack.c.l.b16 %v903
    %v1595 = vunpack.c.h.b16 %v903
    %v1596 = vunpack.c.l.b16 %v904
    %v1597 = vunpack.c.h.b16 %v904
    %v1598 = vunpack.c.l.b16 %v905
    %v1599 = vunpack.c.h.b16 %v905
    %v1600 = vunpack.c.l.b16 %v906
    %v1601 = vunpack.c.h.b16 %v906
    %v1602 = vunpack.c.l.b16 %v907
    %v1603 = vunpack.c.h.b16 %v907
    %v1604 = vunpack.c.l.b16 %v908
    %v1605 = vunpack.c.h.b16 %v908
    %v1606 = vunpack.c.l.b16 %v909
    %v1607 = vunpack.c.h.b16 %v909
    %v1608 = vunpack.c.l.b16 %v910
    %v1609 = vunpack.c.h.b16 %v910
    %v1610 = vunpack.c.l.b16 %v911
    %v1611 = vunpack.c.h.b16 %v911
    %v1612 = vunpack.c.l.b16 %v912
    %v1613 = vunpack.c.h.b16 %v912
    %v1614 = vunpack.c.l.b16 %v913
    %v1615 = vunpack.c.h.b16 %v913
    %v1616 = vunpack.c.l.b16 %v914
    %v1617 = vunpack.c.h.b16 %v914
    %v1618 = vunpack.c.l.b16 %v915
    %v1619 = vunpack.c.h.b16 %v915
    %v1620 = vunpack.c.l.b16 %v916
    %v1621 = vunpack.c.h.b16 %v916
    %v1622 = vunpack.c.l.b16 %v917
    %v1623 = vunpack.c.h.b16 %v917
    %v1624 = vunpack.c.l.b16 %v918
    %v1625 = vunpack.c.h.b16 %v918
    %v1626 = vunpack.c.l.b16 %v919
    %v1627 = vunpack.c.h.b16 %v919
    %v1628 = vunpack.c.l.b16 %v920
    %v1629 = vunpack.c.h.b16 %v920
    %v1630 = vunpack.c.l.b16 %v921
    %v1631 = vunpack.c.h.b16 %v921
    %v1632 = vunpack.c.l.b16 %v922
    %v1633 = vunpack.c.h.b16 %v922
    %v1634 = vunpack.c.l.b16 %v923
    %v1635 = vunpack.c.h.b16 %v923
    %v1636 = vunpack.c.l.b16 %v924
    %v1637 = vunpack.c.h.b16 %v924
    %v1638 = vunpack.c.l.b16 %v925
    %v1639 = vunpack.c.h.b16 %v925
    %v1640 = vunpack.c.l.b16 %v926
    %v1641 = vunpack.c.h.b16 %v926
    %v1642 = vunpack.c.l.b16 %v927
    %v1643 = vunpack.c.h.b16 %v927
    %v1644 = vunpack.c.l.b16 %v928
    %v1645 = vunpack.c.h.b16 %v928
    %v1646 = vunpack.c.l.b16 %v929
    %v1647 = vunpack.c.h.b16 %v929
    %v1648 = vunpack.c.l.b16 %v930
    %v1649 = vunpack.c.h.b16 %v930
    %v1650 = vunpack.c.l.b16 %v931
    %v1651 = vunpack.c.h.b16 %v931
    %v1652 = vunpack.c.l.b16 %v932
    %v1653 = vunpack.c.h.b16 %v932
    %v1654 = vunpack.c.l.b16 %v933
    %v1655 = vunpack.c.h.b16 %v933
    %v1656 = vunpack.c.l.b16 %v934
    %v1657 = vunpack.c.h.b16 %v934
    %v1658 = vunpack.c.l.b16 %v935
    %v1659 = vunpack.c.h.b16 %v935
    %v1660 = vunpack.c.l.b16 %v936
    %v1661 = vunpack.c.h.b16 %v936
    %v1662 = vunpack.c.l.b16 %v937
    %v1663 = vunpack.c.h.b16 %v937
    %v1664 = vunpack.c.l.b16 %v938
    %v1665 = vunpack.c.h.b16 %v938
    %v1666 = vunpack.c.l.b16 %v939
    %v1667 = vunpack.c.h.b16 %v939
    %v1668 = vunpack.c.l.b16 %v940
    %v1669 = vunpack.c.h.b16 %v940
    %v1670 = vunpack.c.l.b16 %v941
    %v1671 = vunpack.c.h.b16 %v941
    %v1672 = vunpack.c.l.b16 %v942
    %v1673 = vunpack.c.h.b16 %v942
    %v1674 = vunpack.c.l.b16 %v943
    %v1675 = vunpack.c.h.b16 %v943
    %v1676 = vunpack.c.l.b16 %v944
    %v1677 = vunpack.c.h.b16 %v944
    %v1678 = vunpack.c.l.b16 %v945
    %v1679 = vunpack.c.h.b16 %v945
    %v1680 = vunpack.c.l.b16 %v946
    %v1681 = vunpack.c.h.b16 %v946
    %v1682 = vunpack.c.l.b16 %v947
    %v1683 = vunpack.c.h.b16 %v947
    %v1684 = vunpack.c.l.b16 %v948
    %v1685 = vunpack.c.h.b16 %v948
    %v1686 = vunpack.c.l.b16 %v949
    %v1687 = vunpack.c.h.b16 %v949
    %v1688 = vunpack.c.l.b16 %v950
    %v1689 = vunpack.c.h.b16 %v950
    %v1690 = vunpack.c.l.b16 %v951
    %v1691 = vunpack.c.h.b16 %v951
    %v1692 = vunpack.c.l.b16 %v952
    %v1693 = vunpack.c.h.b16 %v952
    %v1694 = vunpack.c.l.b16 %v953
    %v1695 = vunpack.c.h.b16 %v953
    %v1696 = vunpack.c.l.b16 %v954
    %v1697 = vunpack.c.h.b16 %v954
    %v1698 = vunpack.c.l.b16 %v955
    %v1699 = vunpack.c.h.b16 %v955
    %v1700 = vunpack.c.l.b16 %v956
    %v1701 = vunpack.c.h.b16 %v956
    %v1702 = vunpack.c.l.b16 %v957
    %v1703 = vunpack.c.h.b16 %v957
    %v1704 = vunpack.c.l.b16 %v958
    %v1705 = vunpack.c.h.b16 %v958
    %v1706 = vunpack.c.l.b16 %v959
    %v1707 = vunpack.c.h.b16 %v959
    %v1708 = vunpack.c.l.b16 %v960
    %v1709 = vunpack.c.h.b16 %v960
    %v1710 = vunpack.c.l.b16 %v961
    %v1711 = vunpack.c.h.b16 %v961
    %v1712 = vunpack.c.l.b16 %v962
    %v1713 = vunpack.c.h.b16 %v962
    %v1714 = vunpack.c.l.b16 %v963
    %v1715 = vunpack.c.h.b16 %v963
    %v1716 = vunpack.c.l.b16 %v964
    %v1717 = vunpack.c.h.b16 %v964
    %v1718 = vunpack.c.l.b16 %v965
    %v1719 = vunpack.c.h.b16 %v965
    %v1720 = vunpack.c.l.b16 %v966
    %v1721 = vunpack.c.h.b16 %v966
    %v1722 = vunpack.c.l.b16 %v967
    %v1723 = vunpack.c.h.b16 %v967
    %v1724 = vunpack.c.l.b16 %v968
    %v1725 = vunpack.c.h.b16 %v968
    %v1726 = vunpack.c.l.b16 %v969
    %v1727 = vunpack.c.h.b16 %v969
    %v1728 = vunpack.c.l.b16 %v970
    %v1729 = vunpack.c.h.b16 %v970
    %v1730 = vunpack.c.l.b16 %v971
    %v1731 = vunpack.c.h.b16 %v971
    %v1732 = vunpack.c.l.b16 %v972
    %v1733 = vunpack.c.h.b16 %v972
    %v1734 = vunpack.c.l.b16 %v973
    %v1735 = vunpack.c.h.b16 %v973
    %v1736 = vunpack.c.l.b16 %v974
    %v1737 = vunpack.c.h.b16 %v974
    %v1738 = vunpack.c.l.b16 %v975
    %v1739 = vunpack.c.h.b16 %v975
    %v1740 = vunpack.c.l.b16 %v976
    %v1741 = vunpack.c.h.b16 %v976
    %v1742 = vunpack.c.l.b16 %v977
    %v1743 = vunpack.c.h.b16 %v977
    %v1744 = vunpack.c.l.b16 %v978
    %v1745 = vunpack.c.h.b16 %v978
    %v1746 = vunpack.c.l.b16 %v979
    %v1747 = vunpack.c.h.b16 %v979
    %v1748 = vunpack.c.l.b16 %v980
    %v1749 = vunpack.c.h.b16 %v980
    %v1750 = vunpack.c.l.b16 %v981
    %v1751 = vunpack.c.h.b16 %v981
    %v1752 = vunpack.c.l.b16 %v982
    %v1753 = vunpack.c.h.b16 %v982
    %v1754 = vunpack.c.l.b16 %v983
    %v1755 = vunpack.c.h.b16 %v983
    %v1756 = vunpack.c.l.b16 %v984
    %v1757 = vunpack.c.h.b16 %v984
    %v1758 = vunpack.c.l.b16 %v985
    %v1759 = vunpack.c.h.b16 %v985
    %v1760 = vunpack.c.l.b16 %v986
    %v1761 = vunpack.c.h.b16 %v986
    %v1762 = vunpack.c.l.b16 %v987
    %v1763 = vunpack.c.h.b16 %v987
    %v1764 = vunpack.c.l.b16 %v988
    %v1765 = vunpack.c.h.b16 %v988
    %v1766 = vunpack.c.l.b16 %v989
    %v1767 = vunpack.c.h.b16 %v989
    %v1768 = vunpack.c.l.b16 %v990
    %v1769 = vunpack.c.h.b16 %v990
    %v1770 = vunpack.c.l.b16 %v991
    %v1771 = vunpack.c.h.b16 %v991
    %v1772 = vunpack.c.l.b16 %v992
    %v1773 = vunpack.c.h.b16 %v992
    %v1774 = vunpack.c.l.b16 %v993
    %v1775 = vunpack.c.h.b16 %v993
    %v1776 = vunpack.c.l.b16 %v994
    %v1777 = vunpack.c.h.b16 %v994
    %v1778 = vunpack.c.l.b16 %v995
    %v1779 = vunpack.c.h.b16 %v995
    %v1780 = vunpack.c.l.b16 %v996
    %v1781 = vunpack.c.h.b16 %v996
    %v1782 = vunpack.c.l.b16 %v997
    %v1783 = vunpack.c.h.b16 %v997
    %v1784 = vunpack.c.l.b16 %v998
    %v1785 = vunpack.c.h.b16 %v998
    %v1786 = vunpack.c.l.b16 %v999
    %v1787 = vunpack.c.h.b16 %v999
    %v1788 = vunpack.c.l.b16 %v1000
    %v1789 = vunpack.c.h.b16 %v1000
    %v1790 = vunpack.c.l.b16 %v1001
    %v1791 = vunpack.c.h.b16 %v1001
    %v1792 = vpack.c.b16 %v1284, %v1280
    %v1793 = vpack.c.b16 %v1285, %v1281
    %v1794 = vpack.c.b16 %v1286, %v1282
    %v1795 = vpack.c.b16 %v1287, %v1283
    %v1796 = vpack.c.b16 %v1292, %v1288
    %v1797 = vpack.c.b16 %v1293, %v1289
    %v1798 = vpack.c.b16 %v1294, %v1290
    %v1799 = vpack.c.b16 %v1295, %v1291
    %v1800 = vpack.c.b16 %v1300, %v1296
    %v1801 = vpack.c.b16 %v1301, %v1297
    %v1802 = vpack.c.b16 %v1302, %v1298
    %v1803 = vpack.c.b16 %v1303, %v1299
    %v1804 = vpack.c.b16 %v1308, %v1304
    %v1805 = vpack.c.b16 %v1309, %v1305
    %v1806 = vpack.c.b16 %v1310, %v1306
    %v1807 = vpack.c.b16 %v1311, %v1307
    %v1808 = vpack.c.b16 %v1316, %v1312
    %v1809 = vpack.c.b16 %v1317, %v1313
    %v1810 = vpack.c.b16 %v1318, %v1314
    %v1811 = vpack.c.b16 %v1319, %v1315
    %v1812 = vpack.c.b16 %v1324, %v1320
    %v1813 = vpack.c.b16 %v1325, %v1321
    %v1814 = vpack.c.b16 %v1326, %v1322
    %v1815 = vpack.c.b16 %v1327, %v1323
    %v1816 = vpack.c.b16 %v1332, %v1328
    %v1817 = vpack.c.b16 %v1333, %v1329
    %v1818 = vpack.c.b16 %v1334, %v1330
    %v1819 = vpack.c.b16 %v1335, %v1331
    %v1820 = vpack.c.b16 %v1340, %v1336
    %v1821 = vpack.c.b16 %v1341, %v1337
    %v1822 = vpack.c.b16 %v1342, %v1338
    %v1823 = vpack.c.b16 %v1343, %v1339
    %v1824 = vpack.c.b16 %v1348, %v1344
    %v1825 = vpack.c.b16 %v1349, %v1345
    %v1826 = vpack.c.b16 %v1350, %v1346
    %v1827 = vpack.c.b16 %v1351, %v1347
    %v1828 = vpack.c.b16 %v1356, %v1352
    %v1829 = vpack.c.b16 %v1357, %v1353
    %v1830 = vpack.c.b16 %v1358, %v1354
    %v1831 = vpack.c.b16 %v1359, %v1355
    %v1832 = vpack.c.b16 %v1364, %v1360
    %v1833 = vpack.c.b16 %v1365, %v1361
    %v1834 = vpack.c.b16 %v1366, %v1362
    %v1835 = vpack.c.b16 %v1367, %v1363
    %v1836 = vpack.c.b16 %v1372, %v1368
    %v1837 = vpack.c.b16 %v1373, %v1369
    %v1838 = vpack.c.b16 %v1374, %v1370
    %v1839 = vpack.c.b16 %v1375, %v1371
    %v1840 = vpack.c.b16 %v1380, %v1376
    %v1841 = vpack.c.b16 %v1381, %v1377
    %v1842 = vpack.c.b16 %v1382, %v1378
    %v1843 = vpack.c.b16 %v1383, %v1379
    %v1844 = vpack.c.b16 %v1388, %v1384
    %v1845 = vpack.c.b16 %v1389, %v1385
    %v1846 = vpack.c.b16 %v1390, %v1386
    %v1847 = vpack.c.b16 %v1391, %v1387
    %v1848 = vpack.c.b16 %v1396, %v1392
    %v1849 = vpack.c.b16 %v1397, %v1393
    %v1850 = vpack.c.b16 %v1398, %v1394
    %v1851 = vpack.c.b16 %v1399, %v1395
    %v1852 = vpack.c.b16 %v1404, %v1400
    %v1853 = vpack.c.b16 %v1405, %v1401
    %v1854 = vpack.c.b16 %v1406, %v1402
    %v1855 = vpack.c.b16 %v1407, %v1403
    %v1856 = vpack.c.b16 %v1412, %v1408
    %v1857 = vpack.c.b16 %v1413, %v1409
    %v1858 = vpack.c.b16 %v1414, %v1410
    %v1859 = vpack.c.b16 %v1415, %v1411
    %v1860 = vpack.c.b16 %v1420, %v1416
    %v1861 = vpack.c.b16 %v1421, %v1417
    %v1862 = vpack.c.b16 %v1422, %v1418
    %v1863 = vpack.c.b16 %v1423, %v1419
    %v1864 = vpack.c.b16 %v1428, %v1424
    %v1865 = vpack.c.b16 %v1429, %v1425
    %v1866 = vpack.c.b16 %v1430, %v1426
    %v1867 = vpack.c.b16 %v1431, %v1427
    %v1868 = vpack.c.b16 %v1436, %v1432
    %v1869 = vpack.c.b16 %v1437, %v1433
    %v1870 = vpack.c.b16 %v1438, %v1434
    %v1871 = vpack.c.b16 %v1439, %v1435
    %v1872 = vpack.c.b16 %v1444, %v1440
    %v1873 = vpack.c.b16 %v1445, %v1441
    %v1874 = vpack.c.b16 %v1446, %v1442
    %v1875 = vpack.c.b16 %v1447, %v1443
    %v1876 = vpack.c.b16 %v1452, %v1448
    %v1877 = vpack.c.b16 %v1453, %v1449
    %v1878 = vpack.c.b16 %v1454, %v1450
    %v1879 = vpack.c.b16 %v1455, %v1451
    %v1880 = vpack.c.b16 %v1460, %v1456
    %v1881 = vpack.c.b16 %v1461, %v1457
    %v1882 = vpack.c.b16 %v1462, %v1458
    %v1883 = vpack.c.b16 %v1463, %v1459
    %v1884 = vpack.c.b16 %v1468, %v1464
    %v1885 = vpack.c.b16 %v1469, %v1465
    %v1886 = vpack.c.b16 %v1470, %v1466
    %v1887 = vpack.c.b16 %v1471, %v1467
    %v1888 = vpack.c.b16 %v1476, %v1472
    %v1889 = vpack.c.b16 %v1477, %v1473
    %v1890 = vpack.c.b16 %v1478, %v1474
    %v1891 = vpack.c.b16 %v1479, %v1475
    %v1892 = vpack.c.b16 %v1484, %v1480
    %v1893 = vpack.c.b16 %v1485, %v1481
    %v1894 = vpack.c.b16 %v1486, %v1482
    %v1895 = vpack.c.b16 %v1487, %v1483
    %v1896 = vpack.c.b16 %v1492, %v1488
    %v1897 = vpack.c.b16 %v1493, %v1489
    %v1898 = vpack.c.b16 %v1494, %v1490
    %v1899 = vpack.c.b16 %v1495, %v1491
    %v1900 = vpack.c.b16 %v1500, %v1496
    %v1901 = vpack.c.b16 %v1501, %v1497
    %v1902 = vpack.c.b16 %v1502, %v1498
    %v1903 = vpack.c.b16 %v1503, %v1499
    %v1904 = vpack.c.b16 %v1508, %v1504
    %v1905 = vpack.c.b16 %v1509, %v1505
    %v1906 = vpack.c.b16 %v1510, %v1506
    %v1907 = vpack.c.b16 %v1511, %v1507
    %v1908 = vpack.c.b16 %v1516, %v1512
    %v1909 = vpack.c.b16 %v1517, %v1513
    %v1910 = vpack.c.b16 %v1518, %v1514
    %v1911 = vpack.c.b16 %v1519, %v1515
    %v1912 = vpack.c.b16 %v1524, %v1520
    %v1913 = vpack.c.b16 %v1525, %v1521
    %v1914 = vpack.c.b16 %v1526, %v1522
    %v1915 = vpack.c.b16 %v1527, %v1523
    %v1916 = vpack.c.b16 %v1532, %v1528
    %v1917 = vpack.c.b16 %v1533, %v1529
    %v1918 = vpack.c.b16 %v1534, %v1530
    %v1919 = vpack.c.b16 %v1535, %v1531
    %v1920 = vpack.c.b16 %v1540, %v1536
    %v1921 = vpack.c.b16 %v1541, %v1537
    %v1922 = vpack.c.b16 %v1542, %v1538
    %v1923 = vpack.c.b16 %v1543, %v1539
    %v1924 = vpack.c.b16 %v1548, %v1544
    %v1925 = vpack.c.b16 %v1549, %v1545
    %v1926 = vpack.c.b16 %v1550, %v1546
    %v1927 = vpack.c.b16 %v1551, %v1547
    %v1928 = vpack.c.b16 %v1556, %v1552
    %v1929 = vpack.c.b16 %v1557, %v1553
    %v1930 = vpack.c.b16 %v1558, %v1554
    %v1931 = vpack.c.b16 %v1559, %v1555
    %v1932 = vpack.c.b16 %v1564, %v1560
    %v1933 = vpack.c.b16 %v1565, %v1561
    %v1934 = vpack.c.b16 %v1566, %v1562
    %v1935 = vpack.c.b16 %v1567, %v1563
    %v1936 = vpack.c.b16 %v1572, %v1568
    %v1937 = vpack.c.b16 %v1573, %v1569
    %v1938 = vpack.c.b16 %v1574, %v1570
    %v1939 = vpack.c.b16 %v1575, %v1571
    %v1940 = vpack.c.b16 %v1580, %v1576
    %v1941 = vpack.c.b16 %v1581, %v1577
    %v1942 = vpack.c.b16 %v1582, %v1578
    %v1943 = vpack.c.b16 %v1583, %v1579
    %v1944 = vpack.c.b16 %v1588, %v1584
    %v1945 = vpack.c.b16 %v1589, %v1585
    %v1946 = vpack.c.b16 %v1590, %v1586
    %v1947 = vpack.c.b16 %v1591, %v1587
    %v1948 = vpack.c.b16 %v1596, %v1592
    %v1949 = vpack.c.b16 %v1597, %v1593
    %v1950 = vpack.c.b16 %v1598, %v1594
    %v1951 = vpack.c.b16 %v1599, %v1595
    %v1952 = vpack.c.b16 %v1604, %v1600
    %v1953 = vpack.c.b16 %v1605, %v1601
    %v1954 = vpack.c.b16 %v1606, %v1602
    %v1955 = vpack.c.b16 %v1607, %v1603
    %v1956 = vpack.c.b16 %v1612, %v1608
    %v1957 = vpack.c.b16 %v1613, %v1609
    %v1958 = vpack.c.b16 %v1614, %v1610
    %v1959 = vpack.c.b16 %v1615, %v1611
    %v1960 = vpack.c.b16 %v1620, %v1616
    %v1961 = vpack.c.b16 %v1621, %v1617
    %v1962 = vpack.c.b16 %v1622, %v1618
    %v1963 = vpack.c.b16 %v1623, %v1619
    %v1964 = vpack.c.b16 %v1628, %v1624
    %v1965 = vpack.c.b16 %v1629, %v1625
    %v1966 = vpack.c.b16 %v1630, %v1626
    %v1967 = vpack.c.b16 %v1631, %v1627
    %v1968 = vpack.c.b16 %v1636, %v1632
    %v1969 = vpack.c.b16 %v1637, %v1633
    %v1970 = vpack.c.b16 %v1638, %v1634
    %v1971 = vpack.c.b16 %v1639, %v1635
    %v1972 = vpack.c.b16 %v1644, %v1640
    %v1973 = vpack.c.b16 %v1645, %v1641
    %v1974 = vpack.c.b16 %v1646, %v1642
    %v1975 = vpack.c.b16 %v1647, %v1643
    %v1976 = vpack.c.b16 %v1652, %v1648
    %v1977 = vpack.c.b16 %v1653, %v1649
    %v1978 = vpack.c.b16 %v1654, %v1650
    %v1979 = vpack.c.b16 %v1655, %v1651
    %v1980 = vpack.c.b16 %v1660, %v1656
    %v1981 = vpack.c.b16 %v1661, %v1657
    %v1982 = vpack.c.b16 %v1662, %v1658
    %v1983 = vpack.c.b16 %v1663, %v1659
    %v1984 = vpack.c.b16 %v1668, %v1664
    %v1985 = vpack.c.b16 %v1669, %v1665
    %v1986 = vpack.c.b16 %v1670, %v1666
    %v1987 = vpack.c.b16 %v1671, %v1667
    %v1988 = vpack.c.b16 %v1676, %v1672
    %v1989 = vpack.c.b16 %v1677, %v1673
    %v1990 = vpack.c.b16 %v1678, %v1674
    %v1991 = vpack.c.b16 %v1679, %v1675
    %v1992 = vpack.c.b16 %v1684, %v1680
    %v1993 = vpack.c.b16 %v1685, %v1681
    %v1994 = vpack.c.b16 %v1686, %v1682
    %v1995 = vpack.c.b16 %v1687, %v1683
    %v1996 = vpack.c.b16 %v1692, %v1688
    %v1997 = vpack.c.b16 %v1693, %v1689
    %v1998 = vpack.c.b16 %v1694, %v1690
    %v1999 = vpack.c.b16 %v1695, %v1691
    %v2000 = vpack.c.b16 %v1700, %v1696
    %v2001 = vpack.c.b16 %v1701, %v1697
    %v2002 = vpack.c.b16 %v1702, %v1698
    %v2003 = vpack.c.b16 %v1703, %v1699
    %v2004 = vpack.c.b16 %v1708, %v1704
    %v2005 = vpack.c.b16 %v1709, %v1705
    %v2006 = vpack.c.b16 %v1710, %v1706
    %v2007 = vpack.c.b16 %v1711, %v1707
    %v2008 = vpack.c.b16 %v1716, %v1712
    %v2009 = vpack.c.b16 %v1717, %v1713
    %v2010 = vpack.c.b16 %v1718, %v1714
    %v2011 = vpack.c.b16 %v1719, %v1715
    %v2012 = vpack.c.b16 %v1724, %v1720
    %v2013 = vpack.c.b16 %v1725, %v1721
    %v2014 = vpack.c.b16 %v1726, %v1722
    %v2015 = vpack.c.b16 %v1727, %v1723
    %v2016 = vpack.c.b16 %v1732, %v1728
    %v2017 = vpack.c.b16 %v1733, %v1729
    %v2018 = vpack.c.b16 %v1734, %v1730
    %v2019 = vpack.c.b16 %v1735, %v1731
    %v2020 = vpack.c.b16 %v1740, %v1736
    %v2021 = vpack.c.b16 %v1741, %v1737
    %v2022 = vpack.c.b16 %v1742, %v1738
    %v2023 = vpack.c.b16 %v1743, %v1739
    %v2024 = vpack.c.b16 %v1748, %v1744
    %v2025 = vpack.c.b16 %v1749, %v1745
    %v2026 = vpack.c.b16 %v1750, %v1746
    %v2027 = vpack.c.b16 %v1751, %v1747
    %v2028 = vpack.c.b16 %v1756, %v1752
    %v2029 = vpack.c.b16 %v1757, %v1753
    %v2030 = vpack.c.b16 %v1758, %v1754
    %v2031 = vpack.c.b16 %v1759, %v1755
    %v2032 = vpack.c.b16 %v1764, %v1760
    %v2033 = vpack.c.b16 %v1765, %v1761
    %v2034 = vpack.c.b16 %v1766, %v1762
    %v2035 = vpack.c.b16 %v1767, %v1763
    %v2036 = vpack.c.b16 %v1772, %v1768
    %v2037 = vpack.c.b16 %v1773, %v1769
    %v2038 = vpack.c.b16 %v1774, %v1770
    %v2039 = vpack.c.b16 %v1775, %v1771
    %v2040 = vpack.c.b16 %v1780, %v1776
    %v2041 = vpack.c.b16 %v1781, %v1777
    %v2042 = vpack.c.b16 %v1782, %v1778
    %v2043 = vpack.c.b16 %v1783, %v1779
    %v2044 = vpack.c.b16 %v1788, %v1784
    %v2045 = vpack.c.b16 %v1789, %v1785
    %v2046 = vpack.c.b16 %v1790, %v1786
    %v2047 = vpack.c.b16 %v1791, %v1787
    %2304 = vmatprep.subr.bf16.mxu0 %v1793
    %2305 = vmatpush1.bf16.msra.mxu0 %v1792
    %2306 = vmatprep.subr.bf16.mxu0 %v1797
    %2307 = vmatpush1.bf16.msra.mxu0 %v1796
    %2308 = vmatprep.subr.bf16.mxu0 %v1801
    %2309 = vmatpush1.bf16.msra.mxu0 %v1800
    %2310 = vmatprep.subr.bf16.mxu0 %v1805
    %2311 = vmatpush1.bf16.msra.mxu0 %v1804
    %2312 = vmatprep.subr.bf16.mxu0 %v1809
    %2313 = vmatpush1.bf16.msra.mxu0 %v1808
    %2314 = vmatprep.subr.bf16.mxu0 %v1813
    %2315 = vmatpush1.bf16.msra.mxu0 %v1812
    %2316 = vmatprep.subr.bf16.mxu0 %v1817
    %2317 = vmatpush1.bf16.msra.mxu0 %v1816
    %2318 = vmatprep.subr.bf16.mxu0 %v1821
    %2319 = vmatpush1.bf16.msra.mxu0 %v1820
    %2320 = vmatprep.subr.bf16.mxu0 %v1825
    %2321 = vmatpush1.bf16.msra.mxu0 %v1824
    %2322 = vmatprep.subr.bf16.mxu0 %v1829
    %2323 = vmatpush1.bf16.msra.mxu0 %v1828
    %2324 = vmatprep.subr.bf16.mxu0 %v1833
    %2325 = vmatpush1.bf16.msra.mxu0 %v1832
    %2326 = vmatprep.subr.bf16.mxu0 %v1837
    %2327 = vmatpush1.bf16.msra.mxu0 %v1836
    %2328 = vmatprep.subr.bf16.mxu0 %v1841
    %2329 = vmatpush1.bf16.msra.mxu0 %v1840
    %2330 = vmatprep.subr.bf16.mxu0 %v1845
    %2331 = vmatpush1.bf16.msra.mxu0 %v1844
    %2332 = vmatprep.subr.bf16.mxu0 %v1849
    %2333 = vmatpush1.bf16.msra.mxu0 %v1848
    %2334 = vmatprep.subr.bf16.mxu0 %v1853
    %2335 = vmatpush1.bf16.msra.mxu0 %v1852
    %2336 = vmatprep.mubr.bf16.mxu0 %v739
    %2337 = vmatmul.mubr.bf16.gmra.mrb[0].mxu0 %v738
    %v2338 = vpop.f32.mrb[0].mxu0
    %v2339 = vadd.f32 %v1007, %v2338
    %v2340 = vpop.f32.mrb[0].mxu0
    %v2341 = vadd.f32 %v1011, %v2340
    %v2342 = vpop.f32.mrb[0].mxu0
    %v2343 = vpop.f32.mrb[0].mxu0
    %2344 = vdwg.mxu0
    %2345 = vmatprep.subr.bf16.mxu0 %v1857
    %2346 = vmatpush1.bf16.msra.mxu0 %v1856
    %2347 = vmatprep.subr.bf16.mxu0 %v1861
    %2348 = vmatpush1.bf16.msra.mxu0 %v1860
    %2349 = vmatprep.subr.bf16.mxu0 %v1865
    %2350 = vmatpush1.bf16.msra.mxu0 %v1864
    %2351 = vmatprep.subr.bf16.mxu0 %v1869
    %2352 = vmatpush1.bf16.msra.mxu0 %v1868
    %2353 = vmatprep.subr.bf16.mxu0 %v1873
    %2354 = vmatpush1.bf16.msra.mxu0 %v1872
    %2355 = vmatprep.subr.bf16.mxu0 %v1877
    %2356 = vmatpush1.bf16.msra.mxu0 %v1876
    %2357 = vmatprep.subr.bf16.mxu0 %v1881
    %2358 = vmatpush1.bf16.msra.mxu0 %v1880
    %2359 = vmatprep.subr.bf16.mxu0 %v1885
    %2360 = vmatpush1.bf16.msra.mxu0 %v1884
    %2361 = vmatprep.subr.bf16.mxu0 %v1889
    %2362 = vmatpush1.bf16.msra.mxu0 %v1888
    %2363 = vmatprep.subr.bf16.mxu0 %v1893
    %2364 = vmatpush1.bf16.msra.mxu0 %v1892
    %2365 = vmatprep.subr.bf16.mxu0 %v1897
    %2366 = vmatpush1.bf16.msra.mxu0 %v1896
    %2367 = vmatprep.subr.bf16.mxu0 %v1901
    %2368 = vmatpush1.bf16.msra.mxu0 %v1900
    %2369 = vmatprep.subr.bf16.mxu0 %v1905
    %2370 = vmatpush1.bf16.msra.mxu0 %v1904
    %2371 = vmatprep.subr.bf16.mxu0 %v1909
    %2372 = vmatpush1.bf16.msra.mxu0 %v1908
    %2373 = vmatprep.subr.bf16.mxu0 %v1913
    %2374 = vmatpush1.bf16.msra.mxu0 %v1912
    %2375 = vmatprep.subr.bf16.mxu0 %v1917
    %2376 = vmatpush1.bf16.msra.mxu0 %v1916
    %2377 = vmatprep.mubr.bf16.mxu0 %v741
    %2378 = vmatmul.mubr.bf16.gmra.mrb[0].mxu0 %v740
    %v2379 = vpop.f32.mrb[0].mxu0
    %v2380 = vadd.f32 %v2339, %v2379
    %v2381 = vpop.f32.mrb[0].mxu0
    %v2382 = vadd.f32 %v2341, %v2381
    %v2383 = vpop.f32.mrb[0].mxu0
    %v2384 = vpop.f32.mrb[0].mxu0
    %2385 = vdwg.mxu0
    %2386 = vmatprep.subr.bf16.mxu0 %v1921
    %2387 = vmatpush1.bf16.msra.mxu0 %v1920
    %2388 = vmatprep.subr.bf16.mxu0 %v1925
    %2389 = vmatpush1.bf16.msra.mxu0 %v1924
    %2390 = vmatprep.subr.bf16.mxu0 %v1929
    %2391 = vmatpush1.bf16.msra.mxu0 %v1928
    %2392 = vmatprep.subr.bf16.mxu0 %v1933
    %2393 = vmatpush1.bf16.msra.mxu0 %v1932
    %2394 = vmatprep.subr.bf16.mxu0 %v1937
    %2395 = vmatpush1.bf16.msra.mxu0 %v1936
    %2396 = vmatprep.subr.bf16.mxu0 %v1941
    %2397 = vmatpush1.bf16.msra.mxu0 %v1940
    %2398 = vmatprep.subr.bf16.mxu0 %v1945
    %2399 = vmatpush1.bf16.msra.mxu0 %v1944
    %2400 = vmatprep.subr.bf16.mxu0 %v1949
    %2401 = vmatpush1.bf16.msra.mxu0 %v1948
    %2402 = vmatprep.subr.bf16.mxu0 %v1953
    %2403 = vmatpush1.bf16.msra.mxu0 %v1952
    %2404 = vmatprep.subr.bf16.mxu0 %v1957
    %2405 = vmatpush1.bf16.msra.mxu0 %v1956
    %2406 = vmatprep.subr.bf16.mxu0 %v1961
    %2407 = vmatpush1.bf16.msra.mxu0 %v1960
    %2408 = vmatprep.subr.bf16.mxu0 %v1965
    %2409 = vmatpush1.bf16.msra.mxu0 %v1964
    %2410 = vmatprep.subr.bf16.mxu0 %v1969
    %2411 = vmatpush1.bf16.msra.mxu0 %v1968
    %2412 = vmatprep.subr.bf16.mxu0 %v1973
    %2413 = vmatpush1.bf16.msra.mxu0 %v1972
    %2414 = vmatprep.subr.bf16.mxu0 %v1977
    %2415 = vmatpush1.bf16.msra.mxu0 %v1976
    %2416 = vmatprep.subr.bf16.mxu0 %v1981
    %2417 = vmatpush1.bf16.msra.mxu0 %v1980
    %2418 = vmatprep.mubr.bf16.mxu0 %v743
    %2419 = vmatmul.mubr.bf16.gmra.mrb[0].mxu0 %v742
    %v2420 = vpop.f32.mrb[0].mxu0
    %v2421 = vadd.f32 %v2380, %v2420
    %v2422 = vpop.f32.mrb[0].mxu0
    %v2423 = vadd.f32 %v2382, %v2422
    %v2424 = vpop.f32.mrb[0].mxu0
    %v2425 = vpop.f32.mrb[0].mxu0
    %2426 = vdwg.mxu0
    %2427 = vmatprep.subr.bf16.mxu0 %v1985
    %2428 = vmatpush1.bf16.msra.mxu0 %v1984
    %2429 = vmatprep.subr.bf16.mxu0 %v1989
    %2430 = vmatpush1.bf16.msra.mxu0 %v1988
    %2431 = vmatprep.subr.bf16.mxu0 %v1993
    %2432 = vmatpush1.bf16.msra.mxu0 %v1992
    %2433 = vmatprep.subr.bf16.mxu0 %v1997
    %2434 = vmatpush1.bf16.msra.mxu0 %v1996
    %2435 = vmatprep.subr.bf16.mxu0 %v2001
    %2436 = vmatpush1.bf16.msra.mxu0 %v2000
    %2437 = vmatprep.subr.bf16.mxu0 %v2005
    %2438 = vmatpush1.bf16.msra.mxu0 %v2004
    %2439 = vmatprep.subr.bf16.mxu0 %v2009
    %2440 = vmatpush1.bf16.msra.mxu0 %v2008
    %2441 = vmatprep.subr.bf16.mxu0 %v2013
    %2442 = vmatpush1.bf16.msra.mxu0 %v2012
    %2443 = vmatprep.subr.bf16.mxu0 %v2017
    %2444 = vmatpush1.bf16.msra.mxu0 %v2016
    %2445 = vmatprep.subr.bf16.mxu0 %v2021
    %2446 = vmatpush1.bf16.msra.mxu0 %v2020
    %2447 = vmatprep.subr.bf16.mxu0 %v2025
    %2448 = vmatpush1.bf16.msra.mxu0 %v2024
    %2449 = vmatprep.subr.bf16.mxu0 %v2029
    %2450 = vmatpush1.bf16.msra.mxu0 %v2028
    %2451 = vmatprep.subr.bf16.mxu0 %v2033
    %2452 = vmatpush1.bf16.msra.mxu0 %v2032
    %2453 = vmatprep.subr.bf16.mxu0 %v2037
    %2454 = vmatpush1.bf16.msra.mxu0 %v2036
    %2455 = vmatprep.subr.bf16.mxu0 %v2041
    %2456 = vmatpush1.bf16.msra.mxu0 %v2040
    %2457 = vmatprep.subr.bf16.mxu0 %v2045
    %2458 = vmatpush1.bf16.msra.mxu0 %v2044
    %2459 = vmatprep.mubr.bf16.mxu0 %v745
    %2460 = vmatmul.mubr.bf16.gmra.mrb[0].mxu0 %v744
    %v2461 = vpop.f32.mrb[0].mxu0
    %v2462 = vadd.f32 %v2421, %v2461
    %v2463 = vpop.f32.mrb[0].mxu0
    %v2464 = vadd.f32 %v2423, %v2463
    %v2465 = vpop.f32.mrb[0].mxu0
    %v2466 = vpop.f32.mrb[0].mxu0
    %2467 = vdwg.mxu0
    %2468 = vmatprep.subr.bf16.mxu0 %v1795
    %2469 = vmatpush1.bf16.msra.mxu0 %v1794
    %2470 = vmatprep.subr.bf16.mxu0 %v1799
    %2471 = vmatpush1.bf16.msra.mxu0 %v1798
    %2472 = vmatprep.subr.bf16.mxu0 %v1803
    %2473 = vmatpush1.bf16.msra.mxu0 %v1802
    %2474 = vmatprep.subr.bf16.mxu0 %v1807
    %2475 = vmatpush1.bf16.msra.mxu0 %v1806
    %2476 = vmatprep.subr.bf16.mxu0 %v1811
    %2477 = vmatpush1.bf16.msra.mxu0 %v1810
    %2478 = vmatprep.subr.bf16.mxu0 %v1815
    %2479 = vmatpush1.bf16.msra.mxu0 %v1814
    %2480 = vmatprep.subr.bf16.mxu0 %v1819
    %2481 = vmatpush1.bf16.msra.mxu0 %v1818
    %2482 = vmatprep.subr.bf16.mxu0 %v1823
    %2483 = vmatpush1.bf16.msra.mxu0 %v1822
    %2484 = vmatprep.subr.bf16.mxu0 %v1827
    %2485 = vmatpush1.bf16.msra.mxu0 %v1826
    %2486 = vmatprep.subr.bf16.mxu0 %v1831
    %2487 = vmatpush1.bf16.msra.mxu0 %v1830
    %2488 = vmatprep.subr.bf16.mxu0 %v1835
    %2489 = vmatpush1.bf16.msra.mxu0 %v1834
    %2490 = vmatprep.subr.bf16.mxu0 %v1839
    %2491 = vmatpush1.bf16.msra.mxu0 %v1838
    %2492 = vmatprep.subr.bf16.mxu0 %v1843
    %2493 = vmatpush1.bf16.msra.mxu0 %v1842
    %2494 = vmatprep.subr.bf16.mxu0 %v1847
    %2495 = vmatpush1.bf16.msra.mxu0 %v1846
    %2496 = vmatprep.subr.bf16.mxu0 %v1851
    %2497 = vmatpush1.bf16.msra.mxu0 %v1850
    %2498 = vmatprep.subr.bf16.mxu0 %v1855
    %2499 = vmatpush1.bf16.msra.mxu0 %v1854
    %2500 = vmatprep.mubr.bf16.mxu0 %v739
    %2501 = vmatmul.mubr.bf16.gmra.mrb[0].mxu0 %v738
    %v2502 = vpop.f32.mrb[0].mxu0
    %v2503 = vadd.f32 %v1015, %v2502
    %v2504 = vpop.f32.mrb[0].mxu0
    %v2505 = vadd.f32 %v1019, %v2504
    %v2506 = vpop.f32.mrb[0].mxu0
    %v2507 = vpop.f32.mrb[0].mxu0
    %2508 = vdwg.mxu0
    %2509 = vmatprep.subr.bf16.mxu0 %v1859
    %2510 = vmatpush1.bf16.msra.mxu0 %v1858
    %2511 = vmatprep.subr.bf16.mxu0 %v1863
    %2512 = vmatpush1.bf16.msra.mxu0 %v1862
    %2513 = vmatprep.subr.bf16.mxu0 %v1867
    %2514 = vmatpush1.bf16.msra.mxu0 %v1866
    %2515 = vmatprep.subr.bf16.mxu0 %v1871
    %2516 = vmatpush1.bf16.msra.mxu0 %v1870
    %2517 = vmatprep.subr.bf16.mxu0 %v1875
    %2518 = vmatpush1.bf16.msra.mxu0 %v1874
    %2519 = vmatprep.subr.bf16.mxu0 %v1879
    %2520 = vmatpush1.bf16.msra.mxu0 %v1878
    %2521 = vmatprep.subr.bf16.mxu0 %v1883
    %2522 = vmatpush1.bf16.msra.mxu0 %v1882
    %2523 = vmatprep.subr.bf16.mxu0 %v1887
    %2524 = vmatpush1.bf16.msra.mxu0 %v1886
    %2525 = vmatprep.subr.bf16.mxu0 %v1891
    %2526 = vmatpush1.bf16.msra.mxu0 %v1890
    %2527 = vmatprep.subr.bf16.mxu0 %v1895
    %2528 = vmatpush1.bf16.msra.mxu0 %v1894
    %2529 = vmatprep.subr.bf16.mxu0 %v1899
    %2530 = vmatpush1.bf16.msra.mxu0 %v1898
    %2531 = vmatprep.subr.bf16.mxu0 %v1903
    %2532 = vmatpush1.bf16.msra.mxu0 %v1902
    %2533 = vmatprep.subr.bf16.mxu0 %v1907
    %2534 = vmatpush1.bf16.msra.mxu0 %v1906
    %2535 = vmatprep.subr.bf16.mxu0 %v1911
    %2536 = vmatpush1.bf16.msra.mxu0 %v1910
    %2537 = vmatprep.subr.bf16.mxu0 %v1915
    %2538 = vmatpush1.bf16.msra.mxu0 %v1914
    %2539 = vmatprep.subr.bf16.mxu0 %v1919
    %2540 = vmatpush1.bf16.msra.mxu0 %v1918
    %2541 = vmatprep.mubr.bf16.mxu0 %v741
    %2542 = vmatmul.mubr.bf16.gmra.mrb[0].mxu0 %v740
    %v2543 = vpop.f32.mrb[0].mxu0
    %v2544 = vadd.f32 %v2503, %v2543
    %v2545 = vpop.f32.mrb[0].mxu0
    %v2546 = vadd.f32 %v2505, %v2545
    %v2547 = vpop.f32.mrb[0].mxu0
    %v2548 = vpop.f32.mrb[0].mxu0
    %2549 = vdwg.mxu0
    %2550 = vmatprep.subr.bf16.mxu0 %v1923
    %2551 = vmatpush1.bf16.msra.mxu0 %v1922
    %2552 = vmatprep.subr.bf16.mxu0 %v1927
    %2553 = vmatpush1.bf16.msra.mxu0 %v1926
    %2554 = vmatprep.subr.bf16.mxu0 %v1931
    %2555 = vmatpush1.bf16.msra.mxu0 %v1930
    %2556 = vmatprep.subr.bf16.mxu0 %v1935
    %2557 = vmatpush1.bf16.msra.mxu0 %v1934
    %2558 = vmatprep.subr.bf16.mxu0 %v1939
    %2559 = vmatpush1.bf16.msra.mxu0 %v1938
    %2560 = vmatprep.subr.bf16.mxu0 %v1943
    %2561 = vmatpush1.bf16.msra.mxu0 %v1942
    %2562 = vmatprep.subr.bf16.mxu0 %v1947
    %2563 = vmatpush1.bf16.msra.mxu0 %v1946
    %2564 = vmatprep.subr.bf16.mxu0 %v1951
    %2565 = vmatpush1.bf16.msra.mxu0 %v1950
    %2566 = vmatprep.subr.bf16.mxu0 %v1955
    %2567 = vmatpush1.bf16.msra.mxu0 %v1954
    %2568 = vmatprep.subr.bf16.mxu0 %v1959
    %2569 = vmatpush1.bf16.msra.mxu0 %v1958
    %2570 = vmatprep.subr.bf16.mxu0 %v1963
    %2571 = vmatpush1.bf16.msra.mxu0 %v1962
    %2572 = vmatprep.subr.bf16.mxu0 %v1967
    %2573 = vmatpush1.bf16.msra.mxu0 %v1966
    %2574 = vmatprep.subr.bf16.mxu0 %v1971
    %2575 = vmatpush1.bf16.msra.mxu0 %v1970
    %2576 = vmatprep.subr.bf16.mxu0 %v1975
    %2577 = vmatpush1.bf16.msra.mxu0 %v1974
    %2578 = vmatprep.subr.bf16.mxu0 %v1979
    %2579 = vmatpush1.bf16.msra.mxu0 %v1978
    %2580 = vmatprep.subr.bf16.mxu0 %v1983
    %2581 = vmatpush1.bf16.msra.mxu0 %v1982
    %2582 = vmatprep.mubr.bf16.mxu0 %v743
    %2583 = vmatmul.mubr.bf16.gmra.mrb[0].mxu0 %v742
    %v2584 = vpop.f32.mrb[0].mxu0
    %v2585 = vadd.f32 %v2544, %v2584
    %v2586 = vpop.f32.mrb[0].mxu0
    %v2587 = vadd.f32 %v2546, %v2586
    %v2588 = vpop.f32.mrb[0].mxu0
    %v2589 = vpop.f32.mrb[0].mxu0
    %2590 = vdwg.mxu0
    %2591 = vmatprep.subr.bf16.mxu0 %v1987
    %2592 = vmatpush1.bf16.msra.mxu0 %v1986
    %2593 = vmatprep.subr.bf16.mxu0 %v1991
    %2594 = vmatpush1.bf16.msra.mxu0 %v1990
    %2595 = vmatprep.subr.bf16.mxu0 %v1995
    %2596 = vmatpush1.bf16.msra.mxu0 %v1994
    %2597 = vmatprep.subr.bf16.mxu0 %v1999
    %2598 = vmatpush1.bf16.msra.mxu0 %v1998
    %2599 = vmatprep.subr.bf16.mxu0 %v2003
    %2600 = vmatpush1.bf16.msra.mxu0 %v2002
    %2601 = vmatprep.subr.bf16.mxu0 %v2007
    %2602 = vmatpush1.bf16.msra.mxu0 %v2006
    %2603 = vmatprep.subr.bf16.mxu0 %v2011
    %2604 = vmatpush1.bf16.msra.mxu0 %v2010
    %2605 = vmatprep.subr.bf16.mxu0 %v2015
    %2606 = vmatpush1.bf16.msra.mxu0 %v2014
    %2607 = vmatprep.subr.bf16.mxu0 %v2019
    %2608 = vmatpush1.bf16.msra.mxu0 %v2018
    %2609 = vmatprep.subr.bf16.mxu0 %v2023
    %2610 = vmatpush1.bf16.msra.mxu0 %v2022
    %2611 = vmatprep.subr.bf16.mxu0 %v2027
    %2612 = vmatpush1.bf16.msra.mxu0 %v2026
    %2613 = vmatprep.subr.bf16.mxu0 %v2031
    %2614 = vmatpush1.bf16.msra.mxu0 %v2030
    %2615 = vmatprep.subr.bf16.mxu0 %v2035
    %2616 = vmatpush1.bf16.msra.mxu0 %v2034
    %2617 = vmatprep.subr.bf16.mxu0 %v2039
    %2618 = vmatpush1.bf16.msra.mxu0 %v2038
    %2619 = vmatprep.subr.bf16.mxu0 %v2043
    %2620 = vmatpush1.bf16.msra.mxu0 %v2042
    %2621 = vmatprep.subr.bf16.mxu0 %v2047
    %2622 = vmatpush1.bf16.msra.mxu0 %v2046
    %2623 = vmatprep.mubr.bf16.mxu0 %v745
    %2624 = vmatmul.mubr.bf16.gmra.mrb[0].mxu0 %v744
    %v2625 = vpop.f32.mrb[0].mxu0
    %v2626 = vadd.f32 %v2585, %v2625
    %v2627 = vpop.f32.mrb[0].mxu0
    %v2628 = vadd.f32 %v2587, %v2627
    %v2629 = vpop.f32.mrb[0].mxu0
    %v2630 = vpop.f32.mrb[0].mxu0
    %2631 = vdwg.mxu0
    %v2632 = vld [vmem:[%s1] sm:$0x3]
    %v2633 = vld [vmem:[#allocation10] sm:$0xff]
    %v2634 = vld [vmem:[#allocation10 + $0x8] sm:$0xff]
    %v2635 = vld [vmem:[#allocation10 + $0x10] sm:$0xff]
    %v2636 = vld [vmem:[#allocation10 + $0x18] sm:$0xff]
    %v2637 = vld [vmem:[#allocation10 + $0x20] sm:$0xff]
    %v2638 = vld [vmem:[#allocation10 + $0x28] sm:$0xff]
    %v2639 = vld [vmem:[#allocation10 + $0x30] sm:$0xff]
    %v2640 = vld [vmem:[#allocation10 + $0x38] sm:$0xff]
    %v2641 = vld [vmem:[#allocation10 + $0x40] sm:$0xff]
    %v2642 = vld [vmem:[#allocation10 + $0x48] sm:$0xff]
    %v2643 = vld [vmem:[#allocation10 + $0x50] sm:$0xff]
    %v2644 = vld [vmem:[#allocation10 + $0x58] sm:$0xff]
    %v2645 = vld [vmem:[#allocation10 + $0x60] sm:$0xff]
    %v2646 = vld [vmem:[#allocation10 + $0x68] sm:$0xff]
    %v2647 = vld [vmem:[#allocation10 + $0x70] sm:$0xff]
    %v2648 = vld [vmem:[#allocation10 + $0x78] sm:$0xff]
    %v2649 = vld [vmem:[#allocation10 + $0x80] sm:$0xff]
    %v2650 = vld [vmem:[#allocation10 + $0x88] sm:$0xff]
    %v2651 = vld [vmem:[#allocation10 + $0x90] sm:$0xff]
    %v2652 = vld [vmem:[#allocation10 + $0x98] sm:$0xff]
    %v2653 = vld [vmem:[#allocation10 + $0xa0] sm:$0xff]
    %v2654 = vld [vmem:[#allocation10 + $0xa8] sm:$0xff]
    %v2655 = vld [vmem:[#allocation10 + $0xb0] sm:$0xff]
    %v2656 = vld [vmem:[#allocation10 + $0xb8] sm:$0xff]
    %v2657 = vld [vmem:[#allocation10 + $0xc0] sm:$0xff]
    %v2658 = vld [vmem:[#allocation10 + $0xc8] sm:$0xff]
    %v2659 = vld [vmem:[#allocation10 + $0xd0] sm:$0xff]
    %v2660 = vld [vmem:[#allocation10 + $0xd8] sm:$0xff]
    %v2661 = vld [vmem:[#allocation10 + $0xe0] sm:$0xff]
    %v2662 = vld [vmem:[#allocation10 + $0xe8] sm:$0xff]
    %v2663 = vld [vmem:[#allocation10 + $0xf0] sm:$0xff]
    %v2664 = vld [vmem:[#allocation10 + $0xf8] sm:$0xff]
    %v2665 = vld [vmem:[#allocation10 + $0x100] sm:$0xff]
    %v2666 = vld [vmem:[#allocation10 + $0x108] sm:$0xff]
    %v2667 = vld [vmem:[#allocation10 + $0x110] sm:$0xff]
    %v2668 = vld [vmem:[#allocation10 + $0x118] sm:$0xff]
    %v2669 = vld [vmem:[#allocation10 + $0x120] sm:$0xff]
    %v2670 = vld [vmem:[#allocation10 + $0x128] sm:$0xff]
    %v2671 = vld [vmem:[#allocation10 + $0x130] sm:$0xff]
    %v2672 = vld [vmem:[#allocation10 + $0x138] sm:$0xff]
    %v2673 = vld [vmem:[#allocation10 + $0x140] sm:$0xff]
    %v2674 = vld [vmem:[#allocation10 + $0x148] sm:$0xff]
    %v2675 = vld [vmem:[#allocation10 + $0x150] sm:$0xff]
    %v2676 = vld [vmem:[#allocation10 + $0x158] sm:$0xff]
    %v2677 = vld [vmem:[#allocation10 + $0x160] sm:$0xff]
    %v2678 = vld [vmem:[#allocation10 + $0x168] sm:$0xff]
    %v2679 = vld [vmem:[#allocation10 + $0x170] sm:$0xff]
    %v2680 = vld [vmem:[#allocation10 + $0x178] sm:$0xff]
    %v2681 = vld [vmem:[#allocation10 + $0x180] sm:$0xff]
    %v2682 = vld [vmem:[#allocation10 + $0x188] sm:$0xff]
    %v2683 = vld [vmem:[#allocation10 + $0x190] sm:$0xff]
    %v2684 = vld [vmem:[#allocation10 + $0x198] sm:$0xff]
    %v2685 = vld [vmem:[#allocation10 + $0x1a0] sm:$0xff]
    %v2686 = vld [vmem:[#allocation10 + $0x1a8] sm:$0xff]
    %v2687 = vld [vmem:[#allocation10 + $0x1b0] sm:$0xff]
    %v2688 = vld [vmem:[#allocation10 + $0x1b8] sm:$0xff]
    %v2689 = vld [vmem:[#allocation10 + $0x1c0] sm:$0xff]
    %v2690 = vld [vmem:[#allocation10 + $0x1c8] sm:$0xff]
    %v2691 = vld [vmem:[#allocation10 + $0x1d0] sm:$0xff]
    %v2692 = vld [vmem:[#allocation10 + $0x1d8] sm:$0xff]
    %v2693 = vld [vmem:[#allocation10 + $0x1e0] sm:$0xff]
    %v2694 = vld [vmem:[#allocation10 + $0x1e8] sm:$0xff]
    %v2695 = vld [vmem:[#allocation10 + $0x1f0] sm:$0xff]
    %v2696 = vld [vmem:[#allocation10 + $0x1f8] sm:$0xff]
    %v2697 = vld [vmem:[#allocation11] sm:$0xff]
    %v2699 = vlaneseq
    %v2700 = vshrl.u32 %v2699, 7
    %v2701 = vsub.s32 0, %v2700
    %v2702 = vrot.slane %v2697, %v2701
    %v2703 = vlaneseq
    %v2704 = vshrl.u32 %v2703, 7
    %v2705 = vsub.s32 1, %v2704
    %v2706 = vrot.slane %v2697, %v2705
    %v2707 = vlaneseq
    %v2708 = vshrl.u32 %v2707, 7
    %v2709 = vsub.s32 2, %v2708
    %v2710 = vrot.slane %v2697, %v2709
    %v2711 = vlaneseq
    %v2712 = vshrl.u32 %v2711, 7
    %v2713 = vsub.s32 3, %v2712
    %v2714 = vrot.slane %v2697, %v2713
    %v2715 = vlaneseq
    %v2716 = vshrl.u32 %v2715, 7
    %v2717 = vsub.s32 4, %v2716
    %v2718 = vrot.slane %v2697, %v2717
    %v2719 = vlaneseq
    %v2720 = vshrl.u32 %v2719, 7
    %v2721 = vsub.s32 5, %v2720
    %v2722 = vrot.slane %v2697, %v2721
    %v2723 = vlaneseq
    %v2724 = vshrl.u32 %v2723, 7
    %v2725 = vsub.s32 6, %v2724
    %v2726 = vrot.slane %v2697, %v2725
    %v2727 = vlaneseq
    %v2728 = vshrl.u32 %v2727, 7
    %v2729 = vsub.s32 7, %v2728
    %v2730 = vrot.slane %v2697, %v2729
    %v2803 = vunpack.c.l.b16 %v2633
    %v2804 = vunpack.c.h.b16 %v2633
    %v2805 = vunpack.c.l.b16 %v2634
    %v2806 = vunpack.c.h.b16 %v2634
    %v2807 = vunpack.c.l.b16 %v2635
    %v2808 = vunpack.c.h.b16 %v2635
    %v2809 = vunpack.c.l.b16 %v2636
    %v2810 = vunpack.c.h.b16 %v2636
    %v2811 = vunpack.c.l.b16 %v2637
    %v2812 = vunpack.c.h.b16 %v2637
    %v2813 = vunpack.c.l.b16 %v2638
    %v2814 = vunpack.c.h.b16 %v2638
    %v2815 = vunpack.c.l.b16 %v2639
    %v2816 = vunpack.c.h.b16 %v2639
    %v2817 = vunpack.c.l.b16 %v2640
    %v2818 = vunpack.c.h.b16 %v2640
    %v2819 = vunpack.c.l.b16 %v2641
    %v2820 = vunpack.c.h.b16 %v2641
    %v2821 = vunpack.c.l.b16 %v2642
    %v2822 = vunpack.c.h.b16 %v2642
    %v2823 = vunpack.c.l.b16 %v2643
    %v2824 = vunpack.c.h.b16 %v2643
    %v2825 = vunpack.c.l.b16 %v2644
    %v2826 = vunpack.c.h.b16 %v2644
    %v2827 = vunpack.c.l.b16 %v2645
    %v2828 = vunpack.c.h.b16 %v2645
    %v2829 = vunpack.c.l.b16 %v2646
    %v2830 = vunpack.c.h.b16 %v2646
    %v2831 = vunpack.c.l.b16 %v2647
    %v2832 = vunpack.c.h.b16 %v2647
    %v2833 = vunpack.c.l.b16 %v2648
    %v2834 = vunpack.c.h.b16 %v2648
    %v2835 = vunpack.c.l.b16 %v2649
    %v2836 = vunpack.c.h.b16 %v2649
    %v2837 = vunpack.c.l.b16 %v2650
    %v2838 = vunpack.c.h.b16 %v2650
    %v2839 = vunpack.c.l.b16 %v2651
    %v2840 = vunpack.c.h.b16 %v2651
    %v2841 = vunpack.c.l.b16 %v2652
    %v2842 = vunpack.c.h.b16 %v2652
    %v2843 = vunpack.c.l.b16 %v2653
    %v2844 = vunpack.c.h.b16 %v2653
    %v2845 = vunpack.c.l.b16 %v2654
    %v2846 = vunpack.c.h.b16 %v2654
    %v2847 = vunpack.c.l.b16 %v2655
    %v2848 = vunpack.c.h.b16 %v2655
    %v2849 = vunpack.c.l.b16 %v2656
    %v2850 = vunpack.c.h.b16 %v2656
    %v2851 = vunpack.c.l.b16 %v2657
    %v2852 = vunpack.c.h.b16 %v2657
    %v2853 = vunpack.c.l.b16 %v2658
    %v2854 = vunpack.c.h.b16 %v2658
    %v2855 = vunpack.c.l.b16 %v2659
    %v2856 = vunpack.c.h.b16 %v2659
    %v2857 = vunpack.c.l.b16 %v2660
    %v2858 = vunpack.c.h.b16 %v2660
    %v2859 = vunpack.c.l.b16 %v2661
    %v2860 = vunpack.c.h.b16 %v2661
    %v2861 = vunpack.c.l.b16 %v2662
    %v2862 = vunpack.c.h.b16 %v2662
    %v2863 = vunpack.c.l.b16 %v2663
    %v2864 = vunpack.c.h.b16 %v2663
    %v2865 = vunpack.c.l.b16 %v2664
    %v2866 = vunpack.c.h.b16 %v2664
    %v2867 = vunpack.c.l.b16 %v2665
    %v2868 = vunpack.c.h.b16 %v2665
    %v2869 = vunpack.c.l.b16 %v2666
    %v2870 = vunpack.c.h.b16 %v2666
    %v2871 = vunpack.c.l.b16 %v2667
    %v2872 = vunpack.c.h.b16 %v2667
    %v2873 = vunpack.c.l.b16 %v2668
    %v2874 = vunpack.c.h.b16 %v2668
    %v2875 = vunpack.c.l.b16 %v2669
    %v2876 = vunpack.c.h.b16 %v2669
    %v2877 = vunpack.c.l.b16 %v2670
    %v2878 = vunpack.c.h.b16 %v2670
    %v2879 = vunpack.c.l.b16 %v2671
    %v2880 = vunpack.c.h.b16 %v2671
    %v2881 = vunpack.c.l.b16 %v2672
    %v2882 = vunpack.c.h.b16 %v2672
    %v2883 = vunpack.c.l.b16 %v2673
    %v2884 = vunpack.c.h.b16 %v2673
    %v2885 = vunpack.c.l.b16 %v2674
    %v2886 = vunpack.c.h.b16 %v2674
    %v2887 = vunpack.c.l.b16 %v2675
    %v2888 = vunpack.c.h.b16 %v2675
    %v2889 = vunpack.c.l.b16 %v2676
    %v2890 = vunpack.c.h.b16 %v2676
    %v2891 = vunpack.c.l.b16 %v2677
    %v2892 = vunpack.c.h.b16 %v2677
    %v2893 = vunpack.c.l.b16 %v2678
    %v2894 = vunpack.c.h.b16 %v2678
    %v2895 = vunpack.c.l.b16 %v2679
    %v2896 = vunpack.c.h.b16 %v2679
    %v2897 = vunpack.c.l.b16 %v2680
    %v2898 = vunpack.c.h.b16 %v2680
    %v2899 = vunpack.c.l.b16 %v2681
    %v2900 = vunpack.c.h.b16 %v2681
    %v2901 = vunpack.c.l.b16 %v2682
    %v2902 = vunpack.c.h.b16 %v2682
    %v2903 = vunpack.c.l.b16 %v2683
    %v2904 = vunpack.c.h.b16 %v2683
    %v2905 = vunpack.c.l.b16 %v2684
    %v2906 = vunpack.c.h.b16 %v2684
    %v2907 = vunpack.c.l.b16 %v2685
    %v2908 = vunpack.c.h.b16 %v2685
    %v2909 = vunpack.c.l.b16 %v2686
    %v2910 = vunpack.c.h.b16 %v2686
    %v2911 = vunpack.c.l.b16 %v2687
    %v2912 = vunpack.c.h.b16 %v2687
    %v2913 = vunpack.c.l.b16 %v2688
    %v2914 = vunpack.c.h.b16 %v2688
    %v2915 = vunpack.c.l.b16 %v2689
    %v2916 = vunpack.c.h.b16 %v2689
    %v2917 = vunpack.c.l.b16 %v2690
    %v2918 = vunpack.c.h.b16 %v2690
    %v2919 = vunpack.c.l.b16 %v2691
    %v2920 = vunpack.c.h.b16 %v2691
    %v2921 = vunpack.c.l.b16 %v2692
    %v2922 = vunpack.c.h.b16 %v2692
    %v2923 = vunpack.c.l.b16 %v2693
    %v2924 = vunpack.c.h.b16 %v2693
    %v2925 = vunpack.c.l.b16 %v2694
    %v2926 = vunpack.c.h.b16 %v2694
    %v2927 = vunpack.c.l.b16 %v2695
    %v2928 = vunpack.c.h.b16 %v2695
    %v2929 = vunpack.c.l.b16 %v2696
    %v2930 = vunpack.c.h.b16 %v2696
    %v2931 = vpack.c.b16 %v2811, %v2803
    %v2932 = vpack.c.b16 %v2812, %v2804
    %v2933 = vpack.c.b16 %v2813, %v2805
    %v2934 = vpack.c.b16 %v2814, %v2806
    %v2935 = vpack.c.b16 %v2815, %v2807
    %v2936 = vpack.c.b16 %v2816, %v2808
    %v2937 = vpack.c.b16 %v2817, %v2809
    %v2938 = vpack.c.b16 %v2818, %v2810
    %v2939 = vpack.c.b16 %v2827, %v2819
    %v2940 = vpack.c.b16 %v2828, %v2820
    %v2941 = vpack.c.b16 %v2829, %v2821
    %v2942 = vpack.c.b16 %v2830, %v2822
    %v2943 = vpack.c.b16 %v2831, %v2823
    %v2944 = vpack.c.b16 %v2832, %v2824
    %v2945 = vpack.c.b16 %v2833, %v2825
    %v2946 = vpack.c.b16 %v2834, %v2826
    %v2947 = vpack.c.b16 %v2843, %v2835
    %v2948 = vpack.c.b16 %v2844, %v2836
    %v2949 = vpack.c.b16 %v2845, %v2837
    %v2950 = vpack.c.b16 %v2846, %v2838
    %v2951 = vpack.c.b16 %v2847, %v2839
    %v2952 = vpack.c.b16 %v2848, %v2840
    %v2953 = vpack.c.b16 %v2849, %v2841
    %v2954 = vpack.c.b16 %v2850, %v2842
    %v2955 = vpack.c.b16 %v2859, %v2851
    %v2956 = vpack.c.b16 %v2860, %v2852
    %v2957 = vpack.c.b16 %v2861, %v2853
    %v2958 = vpack.c.b16 %v2862, %v2854
    %v2959 = vpack.c.b16 %v2863, %v2855
    %v2960 = vpack.c.b16 %v2864, %v2856
    %v2961 = vpack.c.b16 %v2865, %v2857
    %v2962 = vpack.c.b16 %v2866, %v2858
    %v2963 = vpack.c.b16 %v2875, %v2867
    %v2964 = vpack.c.b16 %v2876, %v2868
    %v2965 = vpack.c.b16 %v2877, %v2869
    %v2966 = vpack.c.b16 %v2878, %v2870
    %v2967 = vpack.c.b16 %v2879, %v2871
    %v2968 = vpack.c.b16 %v2880, %v2872
    %v2969 = vpack.c.b16 %v2881, %v2873
    %v2970 = vpack.c.b16 %v2882, %v2874
    %v2971 = vpack.c.b16 %v2891, %v2883
    %v2972 = vpack.c.b16 %v2892, %v2884
    %v2973 = vpack.c.b16 %v2893, %v2885
    %v2974 = vpack.c.b16 %v2894, %v2886
    %v2975 = vpack.c.b16 %v2895, %v2887
    %v2976 = vpack.c.b16 %v2896, %v2888
    %v2977 = vpack.c.b16 %v2897, %v2889
    %v2978 = vpack.c.b16 %v2898, %v2890
    %v2979 = vpack.c.b16 %v2907, %v2899
    %v2980 = vpack.c.b16 %v2908, %v2900
    %v2981 = vpack.c.b16 %v2909, %v2901
    %v2982 = vpack.c.b16 %v2910, %v2902
    %v2983 = vpack.c.b16 %v2911, %v2903
    %v2984 = vpack.c.b16 %v2912, %v2904
    %v2985 = vpack.c.b16 %v2913, %v2905
    %v2986 = vpack.c.b16 %v2914, %v2906
    %v2987 = vpack.c.b16 %v2923, %v2915
    %v2988 = vpack.c.b16 %v2924, %v2916
    %v2989 = vpack.c.b16 %v2925, %v2917
    %v2990 = vpack.c.b16 %v2926, %v2918
    %v2991 = vpack.c.b16 %v2927, %v2919
    %v2992 = vpack.c.b16 %v2928, %v2920
    %v2993 = vpack.c.b16 %v2929, %v2921
    %v2994 = vpack.c.b16 %v2930, %v2922
    %3059 = vmatprep.subr.bf16.mxu0 %v2932
    %3060 = vmatpush1.bf16.msra.mxu0 %v2931
    %3061 = vmatprep.subr.bf16.mxu0 %v2940
    %3062 = vmatpush1.bf16.msra.mxu0 %v2939
    %3063 = vmatprep.subr.bf16.mxu0 %v2948
    %3064 = vmatpush1.bf16.msra.mxu0 %v2947
    %3065 = vmatprep.subr.bf16.mxu0 %v2956
    %3066 = vmatpush1.bf16.msra.mxu0 %v2955
    %3067 = vmatprep.subr.bf16.mxu0 %v2964
    %3068 = vmatpush1.bf16.msra.mxu0 %v2963
    %3069 = vmatprep.subr.bf16.mxu0 %v2972
    %3070 = vmatpush1.bf16.msra.mxu0 %v2971
    %3071 = vmatprep.subr.bf16.mxu0 %v2980
    %3072 = vmatpush1.bf16.msra.mxu0 %v2979
    %3073 = vmatprep.subr.bf16.mxu0 %v2988
    %3074 = vmatpush1.bf16.msra.mxu0 %v2987
    %3075 = vmatprep.subr.bf16.mxu0 0
    %3076 = vmatpush1.bf16.msra.mxu0 0
    %3077 = vmatprep.subr.bf16.mxu0 0
    %3078 = vmatpush1.bf16.msra.mxu0 0
    %3079 = vmatprep.subr.bf16.mxu0 0
    %3080 = vmatpush1.bf16.msra.mxu0 0
    %3081 = vmatprep.subr.bf16.mxu0 0
    %3082 = vmatpush1.bf16.msra.mxu0 0
    %3083 = vmatprep.subr.bf16.mxu0 0
    %3084 = vmatpush1.bf16.msra.mxu0 0
    %3085 = vmatprep.subr.bf16.mxu0 0
    %3086 = vmatpush1.bf16.msra.mxu0 0
    %3087 = vmatprep.subr.bf16.mxu0 0
    %3088 = vmatpush1.bf16.msra.mxu0 0
    %3089 = vmatprep.subr.bf16.mxu0 0
    %3090 = vmatpush1.bf16.msra.mxu0 0
    %3091 = vmatprep.mubr.bf16.mxu0 0
    %3092 = vmatmul.mubr.bf16.gmra.mrb[0].mxu0 %v2632
    %v3093 = vpop.f32.mrb[0].mxu0
    %v3094 = vadd.f32 %v2702, %v3093
    %v3095 = vpop.f32.mrb[0].mxu0
    %v3096 = vadd.f32 %v2706, %v3095
    %v3097 = vpop.f32.mrb[0].mxu0
    %v3098 = vpop.f32.mrb[0].mxu0
    %3099 = vdwg.mxu0
    %3100 = vmatprep.subr.bf16.mxu0 %v2934
    %3101 = vmatpush1.bf16.msra.mxu0 %v2933
    %3102 = vmatprep.subr.bf16.mxu0 %v2942
    %3103 = vmatpush1.bf16.msra.mxu0 %v2941
    %3104 = vmatprep.subr.bf16.mxu0 %v2950
    %3105 = vmatpush1.bf16.msra.mxu0 %v2949
    %3106 = vmatprep.subr.bf16.mxu0 %v2958
    %3107 = vmatpush1.bf16.msra.mxu0 %v2957
    %3108 = vmatprep.subr.bf16.mxu0 %v2966
    %3109 = vmatpush1.bf16.msra.mxu0 %v2965
    %3110 = vmatprep.subr.bf16.mxu0 %v2974
    %3111 = vmatpush1.bf16.msra.mxu0 %v2973
    %3112 = vmatprep.subr.bf16.mxu0 %v2982
    %3113 = vmatpush1.bf16.msra.mxu0 %v2981
    %3114 = vmatprep.subr.bf16.mxu0 %v2990
    %3115 = vmatpush1.bf16.msra.mxu0 %v2989
    %3116 = vmatprep.subr.bf16.mxu0 0
    %3117 = vmatpush1.bf16.msra.mxu0 0
    %3118 = vmatprep.subr.bf16.mxu0 0
    %3119 = vmatpush1.bf16.msra.mxu0 0
    %3120 = vmatprep.subr.bf16.mxu0 0
    %3121 = vmatpush1.bf16.msra.mxu0 0
    %3122 = vmatprep.subr.bf16.mxu0 0
    %3123 = vmatpush1.bf16.msra.mxu0 0
    %3124 = vmatprep.subr.bf16.mxu0 0
    %3125 = vmatpush1.bf16.msra.mxu0 0
    %3126 = vmatprep.subr.bf16.mxu0 0
    %3127 = vmatpush1.bf16.msra.mxu0 0
    %3128 = vmatprep.subr.bf16.mxu0 0
    %3129 = vmatpush1.bf16.msra.mxu0 0
    %3130 = vmatprep.subr.bf16.mxu0 0
    %3131 = vmatpush1.bf16.msra.mxu0 0
    %3132 = vmatprep.mubr.bf16.mxu0 0
    %3133 = vmatmul.mubr.bf16.gmra.mrb[0].mxu0 %v2632
    %v3134 = vpop.f32.mrb[0].mxu0
    %v3135 = vadd.f32 %v2710, %v3134
    %v3136 = vpop.f32.mrb[0].mxu0
    %v3137 = vadd.f32 %v2714, %v3136
    %v3138 = vpop.f32.mrb[0].mxu0
    %v3139 = vpop.f32.mrb[0].mxu0
    %3140 = vdwg.mxu0
    %3141 = vmatprep.subr.bf16.mxu0 %v2936
    %3142 = vmatpush1.bf16.msra.mxu0 %v2935
    %3143 = vmatprep.subr.bf16.mxu0 %v2944
    %3144 = vmatpush1.bf16.msra.mxu0 %v2943
    %3145 = vmatprep.subr.bf16.mxu0 %v2952
    %3146 = vmatpush1.bf16.msra.mxu0 %v2951
    %3147 = vmatprep.subr.bf16.mxu0 %v2960
    %3148 = vmatpush1.bf16.msra.mxu0 %v2959
    %3149 = vmatprep.subr.bf16.mxu0 %v2968
    %3150 = vmatpush1.bf16.msra.mxu0 %v2967
    %3151 = vmatprep.subr.bf16.mxu0 %v2976
    %3152 = vmatpush1.bf16.msra.mxu0 %v2975
    %3153 = vmatprep.subr.bf16.mxu0 %v2984
    %3154 = vmatpush1.bf16.msra.mxu0 %v2983
    %3155 = vmatprep.subr.bf16.mxu0 %v2992
    %3156 = vmatpush1.bf16.msra.mxu0 %v2991
    %3157 = vmatprep.subr.bf16.mxu0 0
    %3158 = vmatpush1.bf16.msra.mxu0 0
    %3159 = vmatprep.subr.bf16.mxu0 0
    %3160 = vmatpush1.bf16.msra.mxu0 0
    %3161 = vmatprep.subr.bf16.mxu0 0
    %3162 = vmatpush1.bf16.msra.mxu0 0
    %3163 = vmatprep.subr.bf16.mxu0 0
    %3164 = vmatpush1.bf16.msra.mxu0 0
    %3165 = vmatprep.subr.bf16.mxu0 0
    %3166 = vmatpush1.bf16.msra.mxu0 0
    %3167 = vmatprep.subr.bf16.mxu0 0
    %3168 = vmatpush1.bf16.msra.mxu0 0
    %3169 = vmatprep.subr.bf16.mxu0 0
    %3170 = vmatpush1.bf16.msra.mxu0 0
    %3171 = vmatprep.subr.bf16.mxu0 0
    %3172 = vmatpush1.bf16.msra.mxu0 0
    %3173 = vmatprep.mubr.bf16.mxu0 0
    %3174 = vmatmul.mubr.bf16.gmra.mrb[0].mxu0 %v2632
    %v3175 = vpop.f32.mrb[0].mxu0
    %v3176 = vadd.f32 %v2718, %v3175
    %v3177 = vpop.f32.mrb[0].mxu0
    %v3178 = vadd.f32 %v2722, %v3177
    %v3179 = vpop.f32.mrb[0].mxu0
    %v3180 = vpop.f32.mrb[0].mxu0
    %3181 = vdwg.mxu0
    %3182 = vmatprep.subr.bf16.mxu0 %v2938
    %3183 = vmatpush1.bf16.msra.mxu0 %v2937
    %3184 = vmatprep.subr.bf16.mxu0 %v2946
    %3185 = vmatpush1.bf16.msra.mxu0 %v2945
    %3186 = vmatprep.subr.bf16.mxu0 %v2954
    %3187 = vmatpush1.bf16.msra.mxu0 %v2953
    %3188 = vmatprep.subr.bf16.mxu0 %v2962
    %3189 = vmatpush1.bf16.msra.mxu0 %v2961
    %3190 = vmatprep.subr.bf16.mxu0 %v2970
    %3191 = vmatpush1.bf16.msra.mxu0 %v2969
    %3192 = vmatprep.subr.bf16.mxu0 %v2978
    %3193 = vmatpush1.bf16.msra.mxu0 %v2977
    %3194 = vmatprep.subr.bf16.mxu0 %v2986
    %3195 = vmatpush1.bf16.msra.mxu0 %v2985
    %3196 = vmatprep.subr.bf16.mxu0 %v2994
    %3197 = vmatpush1.bf16.msra.mxu0 %v2993
    %3198 = vmatprep.subr.bf16.mxu0 0
    %3199 = vmatpush1.bf16.msra.mxu0 0
    %3200 = vmatprep.subr.bf16.mxu0 0
    %3201 = vmatpush1.bf16.msra.mxu0 0
    %3202 = vmatprep.subr.bf16.mxu0 0
    %3203 = vmatpush1.bf16.msra.mxu0 0
    %3204 = vmatprep.subr.bf16.mxu0 0
    %3205 = vmatpush1.bf16.msra.mxu0 0
    %3206 = vmatprep.subr.bf16.mxu0 0
    %3207 = vmatpush1.bf16.msra.mxu0 0
    %3208 = vmatprep.subr.bf16.mxu0 0
    %3209 = vmatpush1.bf16.msra.mxu0 0
    %3210 = vmatprep.subr.bf16.mxu0 0
    %3211 = vmatpush1.bf16.msra.mxu0 0
    %3212 = vmatprep.subr.bf16.mxu0 0
    %3213 = vmatpush1.bf16.msra.mxu0 0
    %3214 = vmatprep.mubr.bf16.mxu0 0
    %3215 = vmatmul.mubr.bf16.gmra.mrb[0].mxu0 %v2632
    %v3216 = vpop.f32.mrb[0].mxu0
    %v3217 = vadd.f32 %v2726, %v3216
    %v3218 = vpop.f32.mrb[0].mxu0
    %v3219 = vadd.f32 %v2730, %v3218
    %v3220 = vpop.f32.mrb[0].mxu0
    %v3221 = vpop.f32.mrb[0].mxu0
    %3222 = vdwg.mxu0
    %v3223 = vmax.f32 %v3094, 0.0
    %v3224 = vmax.f32 %v3096, 0.0
    %v3225 = vmax.f32 %v3135, 0.0
    %v3226 = vmax.f32 %v3137, 0.0
    %v3227 = vmax.f32 %v3176, 0.0
    %v3228 = vmax.f32 %v3178, 0.0
    %v3229 = vmax.f32 %v3217, 0.0
    %v3230 = vmax.f32 %v3219, 0.0
    %v3231 = vpack.c.bf16 %v3223, %v3223
    %v3232 = vpack.c.bf16 %v3224, %v3224
    %v3233 = vpack.c.bf16 %v3225, %v3225
    %v3234 = vpack.c.bf16 %v3226, %v3226
    %v3235 = vpack.c.bf16 %v3227, %v3227
    %v3236 = vpack.c.bf16 %v3228, %v3228
    %v3237 = vpack.c.bf16 %v3229, %v3229
    %v3238 = vpack.c.bf16 %v3230, %v3230
    %v3239 = vld [vmem:[#allocation13] sm:$0xff]
    %v3240 = vld [vmem:[#allocation13 + $0x8] sm:$0xff]
    %v3241 = vld [vmem:[#allocation13 + $0x10] sm:$0xff]
    %v3242 = vld [vmem:[#allocation13 + $0x18] sm:$0xff]
    %v3243 = vld [vmem:[#allocation13 + $0x20] sm:$0xff]
    %v3244 = vld [vmem:[#allocation13 + $0x28] sm:$0xff]
    %v3245 = vld [vmem:[#allocation13 + $0x30] sm:$0xff]
    %v3246 = vld [vmem:[#allocation13 + $0x38] sm:$0xff]
    %v3247 = vld [vmem:[#allocation13 + $0x40] sm:$0xff]
    %v3248 = vld [vmem:[#allocation13 + $0x48] sm:$0xff]
    %v3249 = vld [vmem:[#allocation13 + $0x50] sm:$0xff]
    %v3250 = vld [vmem:[#allocation13 + $0x58] sm:$0xff]
    %v3251 = vld [vmem:[#allocation13 + $0x60] sm:$0xff]
    %v3252 = vld [vmem:[#allocation13 + $0x68] sm:$0xff]
    %v3253 = vld [vmem:[#allocation13 + $0x70] sm:$0xff]
    %v3254 = vld [vmem:[#allocation13 + $0x78] sm:$0xff]
    %v3255 = vld [vmem:[#allocation13 + $0x80] sm:$0xff]
    %v3256 = vld [vmem:[#allocation13 + $0x88] sm:$0xff]
    %v3257 = vld [vmem:[#allocation13 + $0x90] sm:$0xff]
    %v3258 = vld [vmem:[#allocation13 + $0x98] sm:$0xff]
    %v3259 = vld [vmem:[#allocation13 + $0xa0] sm:$0xff]
    %v3260 = vld [vmem:[#allocation13 + $0xa8] sm:$0xff]
    %v3261 = vld [vmem:[#allocation13 + $0xb0] sm:$0xff]
    %v3262 = vld [vmem:[#allocation13 + $0xb8] sm:$0xff]
    %v3263 = vld [vmem:[#allocation13 + $0xc0] sm:$0xff]
    %v3264 = vld [vmem:[#allocation13 + $0xc8] sm:$0xff]
    %v3265 = vld [vmem:[#allocation13 + $0xd0] sm:$0xff]
    %v3266 = vld [vmem:[#allocation13 + $0xd8] sm:$0xff]
    %v3267 = vld [vmem:[#allocation13 + $0xe0] sm:$0xff]
    %v3268 = vld [vmem:[#allocation13 + $0xe8] sm:$0xff]
    %v3269 = vld [vmem:[#allocation13 + $0xf0] sm:$0xff]
    %v3270 = vld [vmem:[#allocation13 + $0xf8] sm:$0xff]
    %v3271 = vld [vmem:[#allocation13 + $0x100] sm:$0xff]
    %v3272 = vld [vmem:[#allocation13 + $0x108] sm:$0xff]
    %v3273 = vld [vmem:[#allocation13 + $0x110] sm:$0xff]
    %v3274 = vld [vmem:[#allocation13 + $0x118] sm:$0xff]
    %v3275 = vld [vmem:[#allocation13 + $0x120] sm:$0xff]
    %v3276 = vld [vmem:[#allocation13 + $0x128] sm:$0xff]
    %v3277 = vld [vmem:[#allocation13 + $0x130] sm:$0xff]
    %v3278 = vld [vmem:[#allocation13 + $0x138] sm:$0xff]
    %v3279 = vld [vmem:[#allocation13 + $0x140] sm:$0xff]
    %v3280 = vld [vmem:[#allocation13 + $0x148] sm:$0xff]
    %v3281 = vld [vmem:[#allocation13 + $0x150] sm:$0xff]
    %v3282 = vld [vmem:[#allocation13 + $0x158] sm:$0xff]
    %v3283 = vld [vmem:[#allocation13 + $0x160] sm:$0xff]
    %v3284 = vld [vmem:[#allocation13 + $0x168] sm:$0xff]
    %v3285 = vld [vmem:[#allocation13 + $0x170] sm:$0xff]
    %v3286 = vld [vmem:[#allocation13 + $0x178] sm:$0xff]
    %v3287 = vld [vmem:[#allocation13 + $0x180] sm:$0xff]
    %v3288 = vld [vmem:[#allocation13 + $0x188] sm:$0xff]
    %v3289 = vld [vmem:[#allocation13 + $0x190] sm:$0xff]
    %v3290 = vld [vmem:[#allocation13 + $0x198] sm:$0xff]
    %v3291 = vld [vmem:[#allocation13 + $0x1a0] sm:$0xff]
    %v3292 = vld [vmem:[#allocation13 + $0x1a8] sm:$0xff]
    %v3293 = vld [vmem:[#allocation13 + $0x1b0] sm:$0xff]
    %v3294 = vld [vmem:[#allocation13 + $0x1b8] sm:$0xff]
    %v3295 = vld [vmem:[#allocation13 + $0x1c0] sm:$0xff]
    %v3296 = vld [vmem:[#allocation13 + $0x1c8] sm:$0xff]
    %v3297 = vld [vmem:[#allocation13 + $0x1d0] sm:$0xff]
    %v3298 = vld [vmem:[#allocation13 + $0x1d8] sm:$0xff]
    %v3299 = vld [vmem:[#allocation13 + $0x1e0] sm:$0xff]
    %v3300 = vld [vmem:[#allocation13 + $0x1e8] sm:$0xff]
    %v3301 = vld [vmem:[#allocation13 + $0x1f0] sm:$0xff]
    %v3302 = vld [vmem:[#allocation13 + $0x1f8] sm:$0xff]
    %v3303 = vld [vmem:[#allocation13 + $0x200] sm:$0xff]
    %v3304 = vld [vmem:[#allocation13 + $0x208] sm:$0xff]
    %v3305 = vld [vmem:[#allocation13 + $0x210] sm:$0xff]
    %v3306 = vld [vmem:[#allocation13 + $0x218] sm:$0xff]
    %v3307 = vld [vmem:[#allocation13 + $0x220] sm:$0xff]
    %v3308 = vld [vmem:[#allocation13 + $0x228] sm:$0xff]
    %v3309 = vld [vmem:[#allocation13 + $0x230] sm:$0xff]
    %v3310 = vld [vmem:[#allocation13 + $0x238] sm:$0xff]
    %v3311 = vld [vmem:[#allocation13 + $0x240] sm:$0xff]
    %v3312 = vld [vmem:[#allocation13 + $0x248] sm:$0xff]
    %v3313 = vld [vmem:[#allocation13 + $0x250] sm:$0xff]
    %v3314 = vld [vmem:[#allocation13 + $0x258] sm:$0xff]
    %v3315 = vld [vmem:[#allocation13 + $0x260] sm:$0xff]
    %v3316 = vld [vmem:[#allocation13 + $0x268] sm:$0xff]
    %v3317 = vld [vmem:[#allocation13 + $0x270] sm:$0xff]
    %v3318 = vld [vmem:[#allocation13 + $0x278] sm:$0xff]
    %v3319 = vld [vmem:[#allocation13 + $0x280] sm:$0xff]
    %v3320 = vld [vmem:[#allocation13 + $0x288] sm:$0xff]
    %v3321 = vld [vmem:[#allocation13 + $0x290] sm:$0xff]
    %v3322 = vld [vmem:[#allocation13 + $0x298] sm:$0xff]
    %v3323 = vld [vmem:[#allocation13 + $0x2a0] sm:$0xff]
    %v3324 = vld [vmem:[#allocation13 + $0x2a8] sm:$0xff]
    %v3325 = vld [vmem:[#allocation13 + $0x2b0] sm:$0xff]
    %v3326 = vld [vmem:[#allocation13 + $0x2b8] sm:$0xff]
    %v3327 = vld [vmem:[#allocation13 + $0x2c0] sm:$0xff]
    %v3328 = vld [vmem:[#allocation13 + $0x2c8] sm:$0xff]
    %v3329 = vld [vmem:[#allocation13 + $0x2d0] sm:$0xff]
    %v3330 = vld [vmem:[#allocation13 + $0x2d8] sm:$0xff]
    %v3331 = vld [vmem:[#allocation13 + $0x2e0] sm:$0xff]
    %v3332 = vld [vmem:[#allocation13 + $0x2e8] sm:$0xff]
    %v3333 = vld [vmem:[#allocation13 + $0x2f0] sm:$0xff]
    %v3334 = vld [vmem:[#allocation13 + $0x2f8] sm:$0xff]
    %v3335 = vld [vmem:[#allocation13 + $0x300] sm:$0xff]
    %v3336 = vld [vmem:[#allocation13 + $0x308] sm:$0xff]
    %v3337 = vld [vmem:[#allocation13 + $0x310] sm:$0xff]
    %v3338 = vld [vmem:[#allocation13 + $0x318] sm:$0xff]
    %v3339 = vld [vmem:[#allocation13 + $0x320] sm:$0xff]
    %v3340 = vld [vmem:[#allocation13 + $0x328] sm:$0xff]
    %v3341 = vld [vmem:[#allocation13 + $0x330] sm:$0xff]
    %v3342 = vld [vmem:[#allocation13 + $0x338] sm:$0xff]
    %v3343 = vld [vmem:[#allocation13 + $0x340] sm:$0xff]
    %v3344 = vld [vmem:[#allocation13 + $0x348] sm:$0xff]
    %v3345 = vld [vmem:[#allocation13 + $0x350] sm:$0xff]
    %v3346 = vld [vmem:[#allocation13 + $0x358] sm:$0xff]
    %v3347 = vld [vmem:[#allocation13 + $0x360] sm:$0xff]
    %v3348 = vld [vmem:[#allocation13 + $0x368] sm:$0xff]
    %v3349 = vld [vmem:[#allocation13 + $0x370] sm:$0xff]
    %v3350 = vld [vmem:[#allocation13 + $0x378] sm:$0xff]
    %v3351 = vld [vmem:[#allocation13 + $0x380] sm:$0xff]
    %v3352 = vld [vmem:[#allocation13 + $0x388] sm:$0xff]
    %v3353 = vld [vmem:[#allocation13 + $0x390] sm:$0xff]
    %v3354 = vld [vmem:[#allocation13 + $0x398] sm:$0xff]
    %v3355 = vld [vmem:[#allocation13 + $0x3a0] sm:$0xff]
    %v3356 = vld [vmem:[#allocation13 + $0x3a8] sm:$0xff]
    %v3357 = vld [vmem:[#allocation13 + $0x3b0] sm:$0xff]
    %v3358 = vld [vmem:[#allocation13 + $0x3b8] sm:$0xff]
    %v3359 = vld [vmem:[#allocation13 + $0x3c0] sm:$0xff]
    %v3360 = vld [vmem:[#allocation13 + $0x3c8] sm:$0xff]
    %v3361 = vld [vmem:[#allocation13 + $0x3d0] sm:$0xff]
    %v3362 = vld [vmem:[#allocation13 + $0x3d8] sm:$0xff]
    %v3363 = vld [vmem:[#allocation13 + $0x3e0] sm:$0xff]
    %v3364 = vld [vmem:[#allocation13 + $0x3e8] sm:$0xff]
    %v3365 = vld [vmem:[#allocation13 + $0x3f0] sm:$0xff]
    %v3366 = vld [vmem:[#allocation13 + $0x3f8] sm:$0xff]
    %v3367 = vld [vmem:[#allocation13 + $0x400] sm:$0xff]
    %v3368 = vld [vmem:[#allocation13 + $0x408] sm:$0xff]
    %v3369 = vld [vmem:[#allocation13 + $0x410] sm:$0xff]
    %v3370 = vld [vmem:[#allocation13 + $0x418] sm:$0xff]
    %v3371 = vld [vmem:[#allocation13 + $0x420] sm:$0xff]
    %v3372 = vld [vmem:[#allocation13 + $0x428] sm:$0xff]
    %v3373 = vld [vmem:[#allocation13 + $0x430] sm:$0xff]
    %v3374 = vld [vmem:[#allocation13 + $0x438] sm:$0xff]
    %v3375 = vld [vmem:[#allocation13 + $0x440] sm:$0xff]
    %v3376 = vld [vmem:[#allocation13 + $0x448] sm:$0xff]
    %v3377 = vld [vmem:[#allocation13 + $0x450] sm:$0xff]
    %v3378 = vld [vmem:[#allocation13 + $0x458] sm:$0xff]
    %v3379 = vld [vmem:[#allocation13 + $0x460] sm:$0xff]
    %v3380 = vld [vmem:[#allocation13 + $0x468] sm:$0xff]
    %v3381 = vld [vmem:[#allocation13 + $0x470] sm:$0xff]
    %v3382 = vld [vmem:[#allocation13 + $0x478] sm:$0xff]
    %v3383 = vld [vmem:[#allocation13 + $0x480] sm:$0xff]
    %v3384 = vld [vmem:[#allocation13 + $0x488] sm:$0xff]
    %v3385 = vld [vmem:[#allocation13 + $0x490] sm:$0xff]
    %v3386 = vld [vmem:[#allocation13 + $0x498] sm:$0xff]
    %v3387 = vld [vmem:[#allocation13 + $0x4a0] sm:$0xff]
    %v3388 = vld [vmem:[#allocation13 + $0x4a8] sm:$0xff]
    %v3389 = vld [vmem:[#allocation13 + $0x4b0] sm:$0xff]
    %v3390 = vld [vmem:[#allocation13 + $0x4b8] sm:$0xff]
    %v3391 = vld [vmem:[#allocation13 + $0x4c0] sm:$0xff]
    %v3392 = vld [vmem:[#allocation13 + $0x4c8] sm:$0xff]
    %v3393 = vld [vmem:[#allocation13 + $0x4d0] sm:$0xff]
    %v3394 = vld [vmem:[#allocation13 + $0x4d8] sm:$0xff]
    %v3395 = vld [vmem:[#allocation13 + $0x4e0] sm:$0xff]
    %v3396 = vld [vmem:[#allocation13 + $0x4e8] sm:$0xff]
    %v3397 = vld [vmem:[#allocation13 + $0x4f0] sm:$0xff]
    %v3398 = vld [vmem:[#allocation13 + $0x4f8] sm:$0xff]
    %v3399 = vld [vmem:[#allocation13 + $0x500] sm:$0xff]
    %v3400 = vld [vmem:[#allocation13 + $0x508] sm:$0xff]
    %v3401 = vld [vmem:[#allocation13 + $0x510] sm:$0xff]
    %v3402 = vld [vmem:[#allocation13 + $0x518] sm:$0xff]
    %v3403 = vld [vmem:[#allocation13 + $0x520] sm:$0xff]
    %v3404 = vld [vmem:[#allocation13 + $0x528] sm:$0xff]
    %v3405 = vld [vmem:[#allocation13 + $0x530] sm:$0xff]
    %v3406 = vld [vmem:[#allocation13 + $0x538] sm:$0xff]
    %v3407 = vld [vmem:[#allocation13 + $0x540] sm:$0xff]
    %v3408 = vld [vmem:[#allocation13 + $0x548] sm:$0xff]
    %v3409 = vld [vmem:[#allocation13 + $0x550] sm:$0xff]
    %v3410 = vld [vmem:[#allocation13 + $0x558] sm:$0xff]
    %v3411 = vld [vmem:[#allocation13 + $0x560] sm:$0xff]
    %v3412 = vld [vmem:[#allocation13 + $0x568] sm:$0xff]
    %v3413 = vld [vmem:[#allocation13 + $0x570] sm:$0xff]
    %v3414 = vld [vmem:[#allocation13 + $0x578] sm:$0xff]
    %v3415 = vld [vmem:[#allocation13 + $0x580] sm:$0xff]
    %v3416 = vld [vmem:[#allocation13 + $0x588] sm:$0xff]
    %v3417 = vld [vmem:[#allocation13 + $0x590] sm:$0xff]
    %v3418 = vld [vmem:[#allocation13 + $0x598] sm:$0xff]
    %v3419 = vld [vmem:[#allocation13 + $0x5a0] sm:$0xff]
    %v3420 = vld [vmem:[#allocation13 + $0x5a8] sm:$0xff]
    %v3421 = vld [vmem:[#allocation13 + $0x5b0] sm:$0xff]
    %v3422 = vld [vmem:[#allocation13 + $0x5b8] sm:$0xff]
    %v3423 = vld [vmem:[#allocation13 + $0x5c0] sm:$0xff]
    %v3424 = vld [vmem:[#allocation13 + $0x5c8] sm:$0xff]
    %v3425 = vld [vmem:[#allocation13 + $0x5d0] sm:$0xff]
    %v3426 = vld [vmem:[#allocation13 + $0x5d8] sm:$0xff]
    %v3427 = vld [vmem:[#allocation13 + $0x5e0] sm:$0xff]
    %v3428 = vld [vmem:[#allocation13 + $0x5e8] sm:$0xff]
    %v3429 = vld [vmem:[#allocation13 + $0x5f0] sm:$0xff]
    %v3430 = vld [vmem:[#allocation13 + $0x5f8] sm:$0xff]
    %v3431 = vld [vmem:[#allocation13 + $0x600] sm:$0xff]
    %v3432 = vld [vmem:[#allocation13 + $0x608] sm:$0xff]
    %v3433 = vld [vmem:[#allocation13 + $0x610] sm:$0xff]
    %v3434 = vld [vmem:[#allocation13 + $0x618] sm:$0xff]
    %v3435 = vld [vmem:[#allocation13 + $0x620] sm:$0xff]
    %v3436 = vld [vmem:[#allocation13 + $0x628] sm:$0xff]
    %v3437 = vld [vmem:[#allocation13 + $0x630] sm:$0xff]
    %v3438 = vld [vmem:[#allocation13 + $0x638] sm:$0xff]
    %v3439 = vld [vmem:[#allocation13 + $0x640] sm:$0xff]
    %v3440 = vld [vmem:[#allocation13 + $0x648] sm:$0xff]
    %v3441 = vld [vmem:[#allocation13 + $0x650] sm:$0xff]
    %v3442 = vld [vmem:[#allocation13 + $0x658] sm:$0xff]
    %v3443 = vld [vmem:[#allocation13 + $0x660] sm:$0xff]
    %v3444 = vld [vmem:[#allocation13 + $0x668] sm:$0xff]
    %v3445 = vld [vmem:[#allocation13 + $0x670] sm:$0xff]
    %v3446 = vld [vmem:[#allocation13 + $0x678] sm:$0xff]
    %v3447 = vld [vmem:[#allocation13 + $0x680] sm:$0xff]
    %v3448 = vld [vmem:[#allocation13 + $0x688] sm:$0xff]
    %v3449 = vld [vmem:[#allocation13 + $0x690] sm:$0xff]
    %v3450 = vld [vmem:[#allocation13 + $0x698] sm:$0xff]
    %v3451 = vld [vmem:[#allocation13 + $0x6a0] sm:$0xff]
    %v3452 = vld [vmem:[#allocation13 + $0x6a8] sm:$0xff]
    %v3453 = vld [vmem:[#allocation13 + $0x6b0] sm:$0xff]
    %v3454 = vld [vmem:[#allocation13 + $0x6b8] sm:$0xff]
    %v3455 = vld [vmem:[#allocation13 + $0x6c0] sm:$0xff]
    %v3456 = vld [vmem:[#allocation13 + $0x6c8] sm:$0xff]
    %v3457 = vld [vmem:[#allocation13 + $0x6d0] sm:$0xff]
    %v3458 = vld [vmem:[#allocation13 + $0x6d8] sm:$0xff]
    %v3459 = vld [vmem:[#allocation13 + $0x6e0] sm:$0xff]
    %v3460 = vld [vmem:[#allocation13 + $0x6e8] sm:$0xff]
    %v3461 = vld [vmem:[#allocation13 + $0x6f0] sm:$0xff]
    %v3462 = vld [vmem:[#allocation13 + $0x6f8] sm:$0xff]
    %v3463 = vld [vmem:[#allocation13 + $0x700] sm:$0xff]
    %v3464 = vld [vmem:[#allocation13 + $0x708] sm:$0xff]
    %v3465 = vld [vmem:[#allocation13 + $0x710] sm:$0xff]
    %v3466 = vld [vmem:[#allocation13 + $0x718] sm:$0xff]
    %v3467 = vld [vmem:[#allocation13 + $0x720] sm:$0xff]
    %v3468 = vld [vmem:[#allocation13 + $0x728] sm:$0xff]
    %v3469 = vld [vmem:[#allocation13 + $0x730] sm:$0xff]
    %v3470 = vld [vmem:[#allocation13 + $0x738] sm:$0xff]
    %v3471 = vld [vmem:[#allocation13 + $0x740] sm:$0xff]
    %v3472 = vld [vmem:[#allocation13 + $0x748] sm:$0xff]
    %v3473 = vld [vmem:[#allocation13 + $0x750] sm:$0xff]
    %v3474 = vld [vmem:[#allocation13 + $0x758] sm:$0xff]
    %v3475 = vld [vmem:[#allocation13 + $0x760] sm:$0xff]
    %v3476 = vld [vmem:[#allocation13 + $0x768] sm:$0xff]
    %v3477 = vld [vmem:[#allocation13 + $0x770] sm:$0xff]
    %v3478 = vld [vmem:[#allocation13 + $0x778] sm:$0xff]
    %v3479 = vld [vmem:[#allocation13 + $0x780] sm:$0xff]
    %v3480 = vld [vmem:[#allocation13 + $0x788] sm:$0xff]
    %v3481 = vld [vmem:[#allocation13 + $0x790] sm:$0xff]
    %v3482 = vld [vmem:[#allocation13 + $0x798] sm:$0xff]
    %v3483 = vld [vmem:[#allocation13 + $0x7a0] sm:$0xff]
    %v3484 = vld [vmem:[#allocation13 + $0x7a8] sm:$0xff]
    %v3485 = vld [vmem:[#allocation13 + $0x7b0] sm:$0xff]
    %v3486 = vld [vmem:[#allocation13 + $0x7b8] sm:$0xff]
    %v3487 = vld [vmem:[#allocation13 + $0x7c0] sm:$0xff]
    %v3488 = vld [vmem:[#allocation13 + $0x7c8] sm:$0xff]
    %v3489 = vld [vmem:[#allocation13 + $0x7d0] sm:$0xff]
    %v3490 = vld [vmem:[#allocation13 + $0x7d8] sm:$0xff]
    %v3491 = vld [vmem:[#allocation13 + $0x7e0] sm:$0xff]
    %v3492 = vld [vmem:[#allocation13 + $0x7e8] sm:$0xff]
    %v3493 = vld [vmem:[#allocation13 + $0x7f0] sm:$0xff]
    %v3494 = vld [vmem:[#allocation13 + $0x7f8] sm:$0xff]
    %v3495 = vld [vmem:[%s9] sm:$0xf]
    %v3497 = vlaneseq
    %v3498 = vshrl.u32 %v3497, 7
    %v3499 = vsub.s32 0, %v3498
    %v3500 = vrot.slane %v3495, %v3499
    %v3501 = vlaneseq
    %v3502 = vshrl.u32 %v3501, 7
    %v3503 = vsub.s32 1, %v3502
    %v3504 = vrot.slane %v3495, %v3503
    %v3505 = vlaneseq
    %v3506 = vshrl.u32 %v3505, 7
    %v3507 = vsub.s32 2, %v3506
    %v3508 = vrot.slane %v3495, %v3507
    %v3509 = vlaneseq
    %v3510 = vshrl.u32 %v3509, 7
    %v3511 = vsub.s32 3, %v3510
    %v3512 = vrot.slane %v3495, %v3511
    %v3773 = vunpack.c.l.b16 %v3239
    %v3774 = vunpack.c.h.b16 %v3239
    %v3775 = vunpack.c.l.b16 %v3240
    %v3776 = vunpack.c.h.b16 %v3240
    %v3777 = vunpack.c.l.b16 %v3241
    %v3778 = vunpack.c.h.b16 %v3241
    %v3779 = vunpack.c.l.b16 %v3242
    %v3780 = vunpack.c.h.b16 %v3242
    %v3781 = vunpack.c.l.b16 %v3243
    %v3782 = vunpack.c.h.b16 %v3243
    %v3783 = vunpack.c.l.b16 %v3244
    %v3784 = vunpack.c.h.b16 %v3244
    %v3785 = vunpack.c.l.b16 %v3245
    %v3786 = vunpack.c.h.b16 %v3245
    %v3787 = vunpack.c.l.b16 %v3246
    %v3788 = vunpack.c.h.b16 %v3246
    %v3789 = vunpack.c.l.b16 %v3247
    %v3790 = vunpack.c.h.b16 %v3247
    %v3791 = vunpack.c.l.b16 %v3248
    %v3792 = vunpack.c.h.b16 %v3248
    %v3793 = vunpack.c.l.b16 %v3249
    %v3794 = vunpack.c.h.b16 %v3249
    %v3795 = vunpack.c.l.b16 %v3250
    %v3796 = vunpack.c.h.b16 %v3250
    %v3797 = vunpack.c.l.b16 %v3251
    %v3798 = vunpack.c.h.b16 %v3251
    %v3799 = vunpack.c.l.b16 %v3252
    %v3800 = vunpack.c.h.b16 %v3252
    %v3801 = vunpack.c.l.b16 %v3253
    %v3802 = vunpack.c.h.b16 %v3253
    %v3803 = vunpack.c.l.b16 %v3254
    %v3804 = vunpack.c.h.b16 %v3254
    %v3805 = vunpack.c.l.b16 %v3255
    %v3806 = vunpack.c.h.b16 %v3255
    %v3807 = vunpack.c.l.b16 %v3256
    %v3808 = vunpack.c.h.b16 %v3256
    %v3809 = vunpack.c.l.b16 %v3257
    %v3810 = vunpack.c.h.b16 %v3257
    %v3811 = vunpack.c.l.b16 %v3258
    %v3812 = vunpack.c.h.b16 %v3258
    %v3813 = vunpack.c.l.b16 %v3259
    %v3814 = vunpack.c.h.b16 %v3259
    %v3815 = vunpack.c.l.b16 %v3260
    %v3816 = vunpack.c.h.b16 %v3260
    %v3817 = vunpack.c.l.b16 %v3261
    %v3818 = vunpack.c.h.b16 %v3261
    %v3819 = vunpack.c.l.b16 %v3262
    %v3820 = vunpack.c.h.b16 %v3262
    %v3821 = vunpack.c.l.b16 %v3263
    %v3822 = vunpack.c.h.b16 %v3263
    %v3823 = vunpack.c.l.b16 %v3264
    %v3824 = vunpack.c.h.b16 %v3264
    %v3825 = vunpack.c.l.b16 %v3265
    %v3826 = vunpack.c.h.b16 %v3265
    %v3827 = vunpack.c.l.b16 %v3266
    %v3828 = vunpack.c.h.b16 %v3266
    %v3829 = vunpack.c.l.b16 %v3267
    %v3830 = vunpack.c.h.b16 %v3267
    %v3831 = vunpack.c.l.b16 %v3268
    %v3832 = vunpack.c.h.b16 %v3268
    %v3833 = vunpack.c.l.b16 %v3269
    %v3834 = vunpack.c.h.b16 %v3269
    %v3835 = vunpack.c.l.b16 %v3270
    %v3836 = vunpack.c.h.b16 %v3270
    %v3837 = vunpack.c.l.b16 %v3271
    %v3838 = vunpack.c.h.b16 %v3271
    %v3839 = vunpack.c.l.b16 %v3272
    %v3840 = vunpack.c.h.b16 %v3272
    %v3841 = vunpack.c.l.b16 %v3273
    %v3842 = vunpack.c.h.b16 %v3273
    %v3843 = vunpack.c.l.b16 %v3274
    %v3844 = vunpack.c.h.b16 %v3274
    %v3845 = vunpack.c.l.b16 %v3275
    %v3846 = vunpack.c.h.b16 %v3275
    %v3847 = vunpack.c.l.b16 %v3276
    %v3848 = vunpack.c.h.b16 %v3276
    %v3849 = vunpack.c.l.b16 %v3277
    %v3850 = vunpack.c.h.b16 %v3277
    %v3851 = vunpack.c.l.b16 %v3278
    %v3852 = vunpack.c.h.b16 %v3278
    %v3853 = vunpack.c.l.b16 %v3279
    %v3854 = vunpack.c.h.b16 %v3279
    %v3855 = vunpack.c.l.b16 %v3280
    %v3856 = vunpack.c.h.b16 %v3280
    %v3857 = vunpack.c.l.b16 %v3281
    %v3858 = vunpack.c.h.b16 %v3281
    %v3859 = vunpack.c.l.b16 %v3282
    %v3860 = vunpack.c.h.b16 %v3282
    %v3861 = vunpack.c.l.b16 %v3283
    %v3862 = vunpack.c.h.b16 %v3283
    %v3863 = vunpack.c.l.b16 %v3284
    %v3864 = vunpack.c.h.b16 %v3284
    %v3865 = vunpack.c.l.b16 %v3285
    %v3866 = vunpack.c.h.b16 %v3285
    %v3867 = vunpack.c.l.b16 %v3286
    %v3868 = vunpack.c.h.b16 %v3286
    %v3869 = vunpack.c.l.b16 %v3287
    %v3870 = vunpack.c.h.b16 %v3287
    %v3871 = vunpack.c.l.b16 %v3288
    %v3872 = vunpack.c.h.b16 %v3288
    %v3873 = vunpack.c.l.b16 %v3289
    %v3874 = vunpack.c.h.b16 %v3289
    %v3875 = vunpack.c.l.b16 %v3290
    %v3876 = vunpack.c.h.b16 %v3290
    %v3877 = vunpack.c.l.b16 %v3291
    %v3878 = vunpack.c.h.b16 %v3291
    %v3879 = vunpack.c.l.b16 %v3292
    %v3880 = vunpack.c.h.b16 %v3292
    %v3881 = vunpack.c.l.b16 %v3293
    %v3882 = vunpack.c.h.b16 %v3293
    %v3883 = vunpack.c.l.b16 %v3294
    %v3884 = vunpack.c.h.b16 %v3294
    %v3885 = vunpack.c.l.b16 %v3295
    %v3886 = vunpack.c.h.b16 %v3295
    %v3887 = vunpack.c.l.b16 %v3296
    %v3888 = vunpack.c.h.b16 %v3296
    %v3889 = vunpack.c.l.b16 %v3297
    %v3890 = vunpack.c.h.b16 %v3297
    %v3891 = vunpack.c.l.b16 %v3298
    %v3892 = vunpack.c.h.b16 %v3298
    %v3893 = vunpack.c.l.b16 %v3299
    %v3894 = vunpack.c.h.b16 %v3299
    %v3895 = vunpack.c.l.b16 %v3300
    %v3896 = vunpack.c.h.b16 %v3300
    %v3897 = vunpack.c.l.b16 %v3301
    %v3898 = vunpack.c.h.b16 %v3301
    %v3899 = vunpack.c.l.b16 %v3302
    %v3900 = vunpack.c.h.b16 %v3302
    %v3901 = vunpack.c.l.b16 %v3303
    %v3902 = vunpack.c.h.b16 %v3303
    %v3903 = vunpack.c.l.b16 %v3304
    %v3904 = vunpack.c.h.b16 %v3304
    %v3905 = vunpack.c.l.b16 %v3305
    %v3906 = vunpack.c.h.b16 %v3305
    %v3907 = vunpack.c.l.b16 %v3306
    %v3908 = vunpack.c.h.b16 %v3306
    %v3909 = vunpack.c.l.b16 %v3307
    %v3910 = vunpack.c.h.b16 %v3307
    %v3911 = vunpack.c.l.b16 %v3308
    %v3912 = vunpack.c.h.b16 %v3308
    %v3913 = vunpack.c.l.b16 %v3309
    %v3914 = vunpack.c.h.b16 %v3309
    %v3915 = vunpack.c.l.b16 %v3310
    %v3916 = vunpack.c.h.b16 %v3310
    %v3917 = vunpack.c.l.b16 %v3311
    %v3918 = vunpack.c.h.b16 %v3311
    %v3919 = vunpack.c.l.b16 %v3312
    %v3920 = vunpack.c.h.b16 %v3312
    %v3921 = vunpack.c.l.b16 %v3313
    %v3922 = vunpack.c.h.b16 %v3313
    %v3923 = vunpack.c.l.b16 %v3314
    %v3924 = vunpack.c.h.b16 %v3314
    %v3925 = vunpack.c.l.b16 %v3315
    %v3926 = vunpack.c.h.b16 %v3315
    %v3927 = vunpack.c.l.b16 %v3316
    %v3928 = vunpack.c.h.b16 %v3316
    %v3929 = vunpack.c.l.b16 %v3317
    %v3930 = vunpack.c.h.b16 %v3317
    %v3931 = vunpack.c.l.b16 %v3318
    %v3932 = vunpack.c.h.b16 %v3318
    %v3933 = vunpack.c.l.b16 %v3319
    %v3934 = vunpack.c.h.b16 %v3319
    %v3935 = vunpack.c.l.b16 %v3320
    %v3936 = vunpack.c.h.b16 %v3320
    %v3937 = vunpack.c.l.b16 %v3321
    %v3938 = vunpack.c.h.b16 %v3321
    %v3939 = vunpack.c.l.b16 %v3322
    %v3940 = vunpack.c.h.b16 %v3322
    %v3941 = vunpack.c.l.b16 %v3323
    %v3942 = vunpack.c.h.b16 %v3323
    %v3943 = vunpack.c.l.b16 %v3324
    %v3944 = vunpack.c.h.b16 %v3324
    %v3945 = vunpack.c.l.b16 %v3325
    %v3946 = vunpack.c.h.b16 %v3325
    %v3947 = vunpack.c.l.b16 %v3326
    %v3948 = vunpack.c.h.b16 %v3326
    %v3949 = vunpack.c.l.b16 %v3327
    %v3950 = vunpack.c.h.b16 %v3327
    %v3951 = vunpack.c.l.b16 %v3328
    %v3952 = vunpack.c.h.b16 %v3328
    %v3953 = vunpack.c.l.b16 %v3329
    %v3954 = vunpack.c.h.b16 %v3329
    %v3955 = vunpack.c.l.b16 %v3330
    %v3956 = vunpack.c.h.b16 %v3330
    %v3957 = vunpack.c.l.b16 %v3331
    %v3958 = vunpack.c.h.b16 %v3331
    %v3959 = vunpack.c.l.b16 %v3332
    %v3960 = vunpack.c.h.b16 %v3332
    %v3961 = vunpack.c.l.b16 %v3333
    %v3962 = vunpack.c.h.b16 %v3333
    %v3963 = vunpack.c.l.b16 %v3334
    %v3964 = vunpack.c.h.b16 %v3334
    %v3965 = vunpack.c.l.b16 %v3335
    %v3966 = vunpack.c.h.b16 %v3335
    %v3967 = vunpack.c.l.b16 %v3336
    %v3968 = vunpack.c.h.b16 %v3336
    %v3969 = vunpack.c.l.b16 %v3337
    %v3970 = vunpack.c.h.b16 %v3337
    %v3971 = vunpack.c.l.b16 %v3338
    %v3972 = vunpack.c.h.b16 %v3338
    %v3973 = vunpack.c.l.b16 %v3339
    %v3974 = vunpack.c.h.b16 %v3339
    %v3975 = vunpack.c.l.b16 %v3340
    %v3976 = vunpack.c.h.b16 %v3340
    %v3977 = vunpack.c.l.b16 %v3341
    %v3978 = vunpack.c.h.b16 %v3341
    %v3979 = vunpack.c.l.b16 %v3342
    %v3980 = vunpack.c.h.b16 %v3342
    %v3981 = vunpack.c.l.b16 %v3343
    %v3982 = vunpack.c.h.b16 %v3343
    %v3983 = vunpack.c.l.b16 %v3344
    %v3984 = vunpack.c.h.b16 %v3344
    %v3985 = vunpack.c.l.b16 %v3345
    %v3986 = vunpack.c.h.b16 %v3345
    %v3987 = vunpack.c.l.b16 %v3346
    %v3988 = vunpack.c.h.b16 %v3346
    %v3989 = vunpack.c.l.b16 %v3347
    %v3990 = vunpack.c.h.b16 %v3347
    %v3991 = vunpack.c.l.b16 %v3348
    %v3992 = vunpack.c.h.b16 %v3348
    %v3993 = vunpack.c.l.b16 %v3349
    %v3994 = vunpack.c.h.b16 %v3349
    %v3995 = vunpack.c.l.b16 %v3350
    %v3996 = vunpack.c.h.b16 %v3350
    %v3997 = vunpack.c.l.b16 %v3351
    %v3998 = vunpack.c.h.b16 %v3351
    %v3999 = vunpack.c.l.b16 %v3352
    %v4000 = vunpack.c.h.b16 %v3352
    %v4001 = vunpack.c.l.b16 %v3353
    %v4002 = vunpack.c.h.b16 %v3353
    %v4003 = vunpack.c.l.b16 %v3354
    %v4004 = vunpack.c.h.b16 %v3354
    %v4005 = vunpack.c.l.b16 %v3355
    %v4006 = vunpack.c.h.b16 %v3355
    %v4007 = vunpack.c.l.b16 %v3356
    %v4008 = vunpack.c.h.b16 %v3356
    %v4009 = vunpack.c.l.b16 %v3357
    %v4010 = vunpack.c.h.b16 %v3357
    %v4011 = vunpack.c.l.b16 %v3358
    %v4012 = vunpack.c.h.b16 %v3358
    %v4013 = vunpack.c.l.b16 %v3359
    %v4014 = vunpack.c.h.b16 %v3359
    %v4015 = vunpack.c.l.b16 %v3360
    %v4016 = vunpack.c.h.b16 %v3360
    %v4017 = vunpack.c.l.b16 %v3361
    %v4018 = vunpack.c.h.b16 %v3361
    %v4019 = vunpack.c.l.b16 %v3362
    %v4020 = vunpack.c.h.b16 %v3362
    %v4021 = vunpack.c.l.b16 %v3363
    %v4022 = vunpack.c.h.b16 %v3363
    %v4023 = vunpack.c.l.b16 %v3364
    %v4024 = vunpack.c.h.b16 %v3364
    %v4025 = vunpack.c.l.b16 %v3365
    %v4026 = vunpack.c.h.b16 %v3365
    %v4027 = vunpack.c.l.b16 %v3366
    %v4028 = vunpack.c.h.b16 %v3366
    %v4029 = vunpack.c.l.b16 %v3367
    %v4030 = vunpack.c.h.b16 %v3367
    %v4031 = vunpack.c.l.b16 %v3368
    %v4032 = vunpack.c.h.b16 %v3368
    %v4033 = vunpack.c.l.b16 %v3369
    %v4034 = vunpack.c.h.b16 %v3369
    %v4035 = vunpack.c.l.b16 %v3370
    %v4036 = vunpack.c.h.b16 %v3370
    %v4037 = vunpack.c.l.b16 %v3371
    %v4038 = vunpack.c.h.b16 %v3371
    %v4039 = vunpack.c.l.b16 %v3372
    %v4040 = vunpack.c.h.b16 %v3372
    %v4041 = vunpack.c.l.b16 %v3373
    %v4042 = vunpack.c.h.b16 %v3373
    %v4043 = vunpack.c.l.b16 %v3374
    %v4044 = vunpack.c.h.b16 %v3374
    %v4045 = vunpack.c.l.b16 %v3375
    %v4046 = vunpack.c.h.b16 %v3375
    %v4047 = vunpack.c.l.b16 %v3376
    %v4048 = vunpack.c.h.b16 %v3376
    %v4049 = vunpack.c.l.b16 %v3377
    %v4050 = vunpack.c.h.b16 %v3377
    %v4051 = vunpack.c.l.b16 %v3378
    %v4052 = vunpack.c.h.b16 %v3378
    %v4053 = vunpack.c.l.b16 %v3379
    %v4054 = vunpack.c.h.b16 %v3379
    %v4055 = vunpack.c.l.b16 %v3380
    %v4056 = vunpack.c.h.b16 %v3380
    %v4057 = vunpack.c.l.b16 %v3381
    %v4058 = vunpack.c.h.b16 %v3381
    %v4059 = vunpack.c.l.b16 %v3382
    %v4060 = vunpack.c.h.b16 %v3382
    %v4061 = vunpack.c.l.b16 %v3383
    %v4062 = vunpack.c.h.b16 %v3383
    %v4063 = vunpack.c.l.b16 %v3384
    %v4064 = vunpack.c.h.b16 %v3384
    %v4065 = vunpack.c.l.b16 %v3385
    %v4066 = vunpack.c.h.b16 %v3385
    %v4067 = vunpack.c.l.b16 %v3386
    %v4068 = vunpack.c.h.b16 %v3386
    %v4069 = vunpack.c.l.b16 %v3387
    %v4070 = vunpack.c.h.b16 %v3387
    %v4071 = vunpack.c.l.b16 %v3388
    %v4072 = vunpack.c.h.b16 %v3388
    %v4073 = vunpack.c.l.b16 %v3389
    %v4074 = vunpack.c.h.b16 %v3389
    %v4075 = vunpack.c.l.b16 %v3390
    %v4076 = vunpack.c.h.b16 %v3390
    %v4077 = vunpack.c.l.b16 %v3391
    %v4078 = vunpack.c.h.b16 %v3391
    %v4079 = vunpack.c.l.b16 %v3392
    %v4080 = vunpack.c.h.b16 %v3392
    %v4081 = vunpack.c.l.b16 %v3393
    %v4082 = vunpack.c.h.b16 %v3393
    %v4083 = vunpack.c.l.b16 %v3394
    %v4084 = vunpack.c.h.b16 %v3394
    %v4085 = vunpack.c.l.b16 %v3395
    %v4086 = vunpack.c.h.b16 %v3395
    %v4087 = vunpack.c.l.b16 %v3396
    %v4088 = vunpack.c.h.b16 %v3396
    %v4089 = vunpack.c.l.b16 %v3397
    %v4090 = vunpack.c.h.b16 %v3397
    %v4091 = vunpack.c.l.b16 %v3398
    %v4092 = vunpack.c.h.b16 %v3398
    %v4093 = vunpack.c.l.b16 %v3399
    %v4094 = vunpack.c.h.b16 %v3399
    %v4095 = vunpack.c.l.b16 %v3400
    %v4096 = vunpack.c.h.b16 %v3400
    %v4097 = vunpack.c.l.b16 %v3401
    %v4098 = vunpack.c.h.b16 %v3401
    %v4099 = vunpack.c.l.b16 %v3402
    %v4100 = vunpack.c.h.b16 %v3402
    %v4101 = vunpack.c.l.b16 %v3403
    %v4102 = vunpack.c.h.b16 %v3403
    %v4103 = vunpack.c.l.b16 %v3404
    %v4104 = vunpack.c.h.b16 %v3404
    %v4105 = vunpack.c.l.b16 %v3405
    %v4106 = vunpack.c.h.b16 %v3405
    %v4107 = vunpack.c.l.b16 %v3406
    %v4108 = vunpack.c.h.b16 %v3406
    %v4109 = vunpack.c.l.b16 %v3407
    %v4110 = vunpack.c.h.b16 %v3407
    %v4111 = vunpack.c.l.b16 %v3408
    %v4112 = vunpack.c.h.b16 %v3408
    %v4113 = vunpack.c.l.b16 %v3409
    %v4114 = vunpack.c.h.b16 %v3409
    %v4115 = vunpack.c.l.b16 %v3410
    %v4116 = vunpack.c.h.b16 %v3410
    %v4117 = vunpack.c.l.b16 %v3411
    %v4118 = vunpack.c.h.b16 %v3411
    %v4119 = vunpack.c.l.b16 %v3412
    %v4120 = vunpack.c.h.b16 %v3412
    %v4121 = vunpack.c.l.b16 %v3413
    %v4122 = vunpack.c.h.b16 %v3413
    %v4123 = vunpack.c.l.b16 %v3414
    %v4124 = vunpack.c.h.b16 %v3414
    %v4125 = vunpack.c.l.b16 %v3415
    %v4126 = vunpack.c.h.b16 %v3415
    %v4127 = vunpack.c.l.b16 %v3416
    %v4128 = vunpack.c.h.b16 %v3416
    %v4129 = vunpack.c.l.b16 %v3417
    %v4130 = vunpack.c.h.b16 %v3417
    %v4131 = vunpack.c.l.b16 %v3418
    %v4132 = vunpack.c.h.b16 %v3418
    %v4133 = vunpack.c.l.b16 %v3419
    %v4134 = vunpack.c.h.b16 %v3419
    %v4135 = vunpack.c.l.b16 %v3420
    %v4136 = vunpack.c.h.b16 %v3420
    %v4137 = vunpack.c.l.b16 %v3421
    %v4138 = vunpack.c.h.b16 %v3421
    %v4139 = vunpack.c.l.b16 %v3422
    %v4140 = vunpack.c.h.b16 %v3422
    %v4141 = vunpack.c.l.b16 %v3423
    %v4142 = vunpack.c.h.b16 %v3423
    %v4143 = vunpack.c.l.b16 %v3424
    %v4144 = vunpack.c.h.b16 %v3424
    %v4145 = vunpack.c.l.b16 %v3425
    %v4146 = vunpack.c.h.b16 %v3425
    %v4147 = vunpack.c.l.b16 %v3426
    %v4148 = vunpack.c.h.b16 %v3426
    %v4149 = vunpack.c.l.b16 %v3427
    %v4150 = vunpack.c.h.b16 %v3427
    %v4151 = vunpack.c.l.b16 %v3428
    %v4152 = vunpack.c.h.b16 %v3428
    %v4153 = vunpack.c.l.b16 %v3429
    %v4154 = vunpack.c.h.b16 %v3429
    %v4155 = vunpack.c.l.b16 %v3430
    %v4156 = vunpack.c.h.b16 %v3430
    %v4157 = vunpack.c.l.b16 %v3431
    %v4158 = vunpack.c.h.b16 %v3431
    %v4159 = vunpack.c.l.b16 %v3432
    %v4160 = vunpack.c.h.b16 %v3432
    %v4161 = vunpack.c.l.b16 %v3433
    %v4162 = vunpack.c.h.b16 %v3433
    %v4163 = vunpack.c.l.b16 %v3434
    %v4164 = vunpack.c.h.b16 %v3434
    %v4165 = vunpack.c.l.b16 %v3435
    %v4166 = vunpack.c.h.b16 %v3435
    %v4167 = vunpack.c.l.b16 %v3436
    %v4168 = vunpack.c.h.b16 %v3436
    %v4169 = vunpack.c.l.b16 %v3437
    %v4170 = vunpack.c.h.b16 %v3437
    %v4171 = vunpack.c.l.b16 %v3438
    %v4172 = vunpack.c.h.b16 %v3438
    %v4173 = vunpack.c.l.b16 %v3439
    %v4174 = vunpack.c.h.b16 %v3439
    %v4175 = vunpack.c.l.b16 %v3440
    %v4176 = vunpack.c.h.b16 %v3440
    %v4177 = vunpack.c.l.b16 %v3441
    %v4178 = vunpack.c.h.b16 %v3441
    %v4179 = vunpack.c.l.b16 %v3442
    %v4180 = vunpack.c.h.b16 %v3442
    %v4181 = vunpack.c.l.b16 %v3443
    %v4182 = vunpack.c.h.b16 %v3443
    %v4183 = vunpack.c.l.b16 %v3444
    %v4184 = vunpack.c.h.b16 %v3444
    %v4185 = vunpack.c.l.b16 %v3445
    %v4186 = vunpack.c.h.b16 %v3445
    %v4187 = vunpack.c.l.b16 %v3446
    %v4188 = vunpack.c.h.b16 %v3446
    %v4189 = vunpack.c.l.b16 %v3447
    %v4190 = vunpack.c.h.b16 %v3447
    %v4191 = vunpack.c.l.b16 %v3448
    %v4192 = vunpack.c.h.b16 %v3448
    %v4193 = vunpack.c.l.b16 %v3449
    %v4194 = vunpack.c.h.b16 %v3449
    %v4195 = vunpack.c.l.b16 %v3450
    %v4196 = vunpack.c.h.b16 %v3450
    %v4197 = vunpack.c.l.b16 %v3451
    %v4198 = vunpack.c.h.b16 %v3451
    %v4199 = vunpack.c.l.b16 %v3452
    %v4200 = vunpack.c.h.b16 %v3452
    %v4201 = vunpack.c.l.b16 %v3453
    %v4202 = vunpack.c.h.b16 %v3453
    %v4203 = vunpack.c.l.b16 %v3454
    %v4204 = vunpack.c.h.b16 %v3454
    %v4205 = vunpack.c.l.b16 %v3455
    %v4206 = vunpack.c.h.b16 %v3455
    %v4207 = vunpack.c.l.b16 %v3456
    %v4208 = vunpack.c.h.b16 %v3456
    %v4209 = vunpack.c.l.b16 %v3457
    %v4210 = vunpack.c.h.b16 %v3457
    %v4211 = vunpack.c.l.b16 %v3458
    %v4212 = vunpack.c.h.b16 %v3458
    %v4213 = vunpack.c.l.b16 %v3459
    %v4214 = vunpack.c.h.b16 %v3459
    %v4215 = vunpack.c.l.b16 %v3460
    %v4216 = vunpack.c.h.b16 %v3460
    %v4217 = vunpack.c.l.b16 %v3461
    %v4218 = vunpack.c.h.b16 %v3461
    %v4219 = vunpack.c.l.b16 %v3462
    %v4220 = vunpack.c.h.b16 %v3462
    %v4221 = vunpack.c.l.b16 %v3463
    %v4222 = vunpack.c.h.b16 %v3463
    %v4223 = vunpack.c.l.b16 %v3464
    %v4224 = vunpack.c.h.b16 %v3464
    %v4225 = vunpack.c.l.b16 %v3465
    %v4226 = vunpack.c.h.b16 %v3465
    %v4227 = vunpack.c.l.b16 %v3466
    %v4228 = vunpack.c.h.b16 %v3466
    %v4229 = vunpack.c.l.b16 %v3467
    %v4230 = vunpack.c.h.b16 %v3467
    %v4231 = vunpack.c.l.b16 %v3468
    %v4232 = vunpack.c.h.b16 %v3468
    %v4233 = vunpack.c.l.b16 %v3469
    %v4234 = vunpack.c.h.b16 %v3469
    %v4235 = vunpack.c.l.b16 %v3470
    %v4236 = vunpack.c.h.b16 %v3470
    %v4237 = vunpack.c.l.b16 %v3471
    %v4238 = vunpack.c.h.b16 %v3471
    %v4239 = vunpack.c.l.b16 %v3472
    %v4240 = vunpack.c.h.b16 %v3472
    %v4241 = vunpack.c.l.b16 %v3473
    %v4242 = vunpack.c.h.b16 %v3473
    %v4243 = vunpack.c.l.b16 %v3474
    %v4244 = vunpack.c.h.b16 %v3474
    %v4245 = vunpack.c.l.b16 %v3475
    %v4246 = vunpack.c.h.b16 %v3475
    %v4247 = vunpack.c.l.b16 %v3476
    %v4248 = vunpack.c.h.b16 %v3476
    %v4249 = vunpack.c.l.b16 %v3477
    %v4250 = vunpack.c.h.b16 %v3477
    %v4251 = vunpack.c.l.b16 %v3478
    %v4252 = vunpack.c.h.b16 %v3478
    %v4253 = vunpack.c.l.b16 %v3479
    %v4254 = vunpack.c.h.b16 %v3479
    %v4255 = vunpack.c.l.b16 %v3480
    %v4256 = vunpack.c.h.b16 %v3480
    %v4257 = vunpack.c.l.b16 %v3481
    %v4258 = vunpack.c.h.b16 %v3481
    %v4259 = vunpack.c.l.b16 %v3482
    %v4260 = vunpack.c.h.b16 %v3482
    %v4261 = vunpack.c.l.b16 %v3483
    %v4262 = vunpack.c.h.b16 %v3483
    %v4263 = vunpack.c.l.b16 %v3484
    %v4264 = vunpack.c.h.b16 %v3484
    %v4265 = vunpack.c.l.b16 %v3485
    %v4266 = vunpack.c.h.b16 %v3485
    %v4267 = vunpack.c.l.b16 %v3486
    %v4268 = vunpack.c.h.b16 %v3486
    %v4269 = vunpack.c.l.b16 %v3487
    %v4270 = vunpack.c.h.b16 %v3487
    %v4271 = vunpack.c.l.b16 %v3488
    %v4272 = vunpack.c.h.b16 %v3488
    %v4273 = vunpack.c.l.b16 %v3489
    %v4274 = vunpack.c.h.b16 %v3489
    %v4275 = vunpack.c.l.b16 %v3490
    %v4276 = vunpack.c.h.b16 %v3490
    %v4277 = vunpack.c.l.b16 %v3491
    %v4278 = vunpack.c.h.b16 %v3491
    %v4279 = vunpack.c.l.b16 %v3492
    %v4280 = vunpack.c.h.b16 %v3492
    %v4281 = vunpack.c.l.b16 %v3493
    %v4282 = vunpack.c.h.b16 %v3493
    %v4283 = vunpack.c.l.b16 %v3494
    %v4284 = vunpack.c.h.b16 %v3494
    %v4285 = vpack.c.b16 %v3777, %v3773
    %v4286 = vpack.c.b16 %v3778, %v3774
    %v4287 = vpack.c.b16 %v3779, %v3775
    %v4288 = vpack.c.b16 %v3780, %v3776
    %v4289 = vpack.c.b16 %v3785, %v3781
    %v4290 = vpack.c.b16 %v3786, %v3782
    %v4291 = vpack.c.b16 %v3787, %v3783
    %v4292 = vpack.c.b16 %v3788, %v3784
    %v4293 = vpack.c.b16 %v3793, %v3789
    %v4294 = vpack.c.b16 %v3794, %v3790
    %v4295 = vpack.c.b16 %v3795, %v3791
    %v4296 = vpack.c.b16 %v3796, %v3792
    %v4297 = vpack.c.b16 %v3801, %v3797
    %v4298 = vpack.c.b16 %v3802, %v3798
    %v4299 = vpack.c.b16 %v3803, %v3799
    %v4300 = vpack.c.b16 %v3804, %v3800
    %v4301 = vpack.c.b16 %v3809, %v3805
    %v4302 = vpack.c.b16 %v3810, %v3806
    %v4303 = vpack.c.b16 %v3811, %v3807
    %v4304 = vpack.c.b16 %v3812, %v3808
    %v4305 = vpack.c.b16 %v3817, %v3813
    %v4306 = vpack.c.b16 %v3818, %v3814
    %v4307 = vpack.c.b16 %v3819, %v3815
    %v4308 = vpack.c.b16 %v3820, %v3816
    %v4309 = vpack.c.b16 %v3825, %v3821
    %v4310 = vpack.c.b16 %v3826, %v3822
    %v4311 = vpack.c.b16 %v3827, %v3823
    %v4312 = vpack.c.b16 %v3828, %v3824
    %v4313 = vpack.c.b16 %v3833, %v3829
    %v4314 = vpack.c.b16 %v3834, %v3830
    %v4315 = vpack.c.b16 %v3835, %v3831
    %v4316 = vpack.c.b16 %v3836, %v3832
    %v4317 = vpack.c.b16 %v3841, %v3837
    %v4318 = vpack.c.b16 %v3842, %v3838
    %v4319 = vpack.c.b16 %v3843, %v3839
    %v4320 = vpack.c.b16 %v3844, %v3840
    %v4321 = vpack.c.b16 %v3849, %v3845
    %v4322 = vpack.c.b16 %v3850, %v3846
    %v4323 = vpack.c.b16 %v3851, %v3847
    %v4324 = vpack.c.b16 %v3852, %v3848
    %v4325 = vpack.c.b16 %v3857, %v3853
    %v4326 = vpack.c.b16 %v3858, %v3854
    %v4327 = vpack.c.b16 %v3859, %v3855
    %v4328 = vpack.c.b16 %v3860, %v3856
    %v4329 = vpack.c.b16 %v3865, %v3861
    %v4330 = vpack.c.b16 %v3866, %v3862
    %v4331 = vpack.c.b16 %v3867, %v3863
    %v4332 = vpack.c.b16 %v3868, %v3864
    %v4333 = vpack.c.b16 %v3873, %v3869
    %v4334 = vpack.c.b16 %v3874, %v3870
    %v4335 = vpack.c.b16 %v3875, %v3871
    %v4336 = vpack.c.b16 %v3876, %v3872
    %v4337 = vpack.c.b16 %v3881, %v3877
    %v4338 = vpack.c.b16 %v3882, %v3878
    %v4339 = vpack.c.b16 %v3883, %v3879
    %v4340 = vpack.c.b16 %v3884, %v3880
    %v4341 = vpack.c.b16 %v3889, %v3885
    %v4342 = vpack.c.b16 %v3890, %v3886
    %v4343 = vpack.c.b16 %v3891, %v3887
    %v4344 = vpack.c.b16 %v3892, %v3888
    %v4345 = vpack.c.b16 %v3897, %v3893
    %v4346 = vpack.c.b16 %v3898, %v3894
    %v4347 = vpack.c.b16 %v3899, %v3895
    %v4348 = vpack.c.b16 %v3900, %v3896
    %v4349 = vpack.c.b16 %v3905, %v3901
    %v4350 = vpack.c.b16 %v3906, %v3902
    %v4351 = vpack.c.b16 %v3907, %v3903
    %v4352 = vpack.c.b16 %v3908, %v3904
    %v4353 = vpack.c.b16 %v3913, %v3909
    %v4354 = vpack.c.b16 %v3914, %v3910
    %v4355 = vpack.c.b16 %v3915, %v3911
    %v4356 = vpack.c.b16 %v3916, %v3912
    %v4357 = vpack.c.b16 %v3921, %v3917
    %v4358 = vpack.c.b16 %v3922, %v3918
    %v4359 = vpack.c.b16 %v3923, %v3919
    %v4360 = vpack.c.b16 %v3924, %v3920
    %v4361 = vpack.c.b16 %v3929, %v3925
    %v4362 = vpack.c.b16 %v3930, %v3926
    %v4363 = vpack.c.b16 %v3931, %v3927
    %v4364 = vpack.c.b16 %v3932, %v3928
    %v4365 = vpack.c.b16 %v3937, %v3933
    %v4366 = vpack.c.b16 %v3938, %v3934
    %v4367 = vpack.c.b16 %v3939, %v3935
    %v4368 = vpack.c.b16 %v3940, %v3936
    %v4369 = vpack.c.b16 %v3945, %v3941
    %v4370 = vpack.c.b16 %v3946, %v3942
    %v4371 = vpack.c.b16 %v3947, %v3943
    %v4372 = vpack.c.b16 %v3948, %v3944
    %v4373 = vpack.c.b16 %v3953, %v3949
    %v4374 = vpack.c.b16 %v3954, %v3950
    %v4375 = vpack.c.b16 %v3955, %v3951
    %v4376 = vpack.c.b16 %v3956, %v3952
    %v4377 = vpack.c.b16 %v3961, %v3957
    %v4378 = vpack.c.b16 %v3962, %v3958
    %v4379 = vpack.c.b16 %v3963, %v3959
    %v4380 = vpack.c.b16 %v3964, %v3960
    %v4381 = vpack.c.b16 %v3969, %v3965
    %v4382 = vpack.c.b16 %v3970, %v3966
    %v4383 = vpack.c.b16 %v3971, %v3967
    %v4384 = vpack.c.b16 %v3972, %v3968
    %v4385 = vpack.c.b16 %v3977, %v3973
    %v4386 = vpack.c.b16 %v3978, %v3974
    %v4387 = vpack.c.b16 %v3979, %v3975
    %v4388 = vpack.c.b16 %v3980, %v3976
    %v4389 = vpack.c.b16 %v3985, %v3981
    %v4390 = vpack.c.b16 %v3986, %v3982
    %v4391 = vpack.c.b16 %v3987, %v3983
    %v4392 = vpack.c.b16 %v3988, %v3984
    %v4393 = vpack.c.b16 %v3993, %v3989
    %v4394 = vpack.c.b16 %v3994, %v3990
    %v4395 = vpack.c.b16 %v3995, %v3991
    %v4396 = vpack.c.b16 %v3996, %v3992
    %v4397 = vpack.c.b16 %v4001, %v3997
    %v4398 = vpack.c.b16 %v4002, %v3998
    %v4399 = vpack.c.b16 %v4003, %v3999
    %v4400 = vpack.c.b16 %v4004, %v4000
    %v4401 = vpack.c.b16 %v4009, %v4005
    %v4402 = vpack.c.b16 %v4010, %v4006
    %v4403 = vpack.c.b16 %v4011, %v4007
    %v4404 = vpack.c.b16 %v4012, %v4008
    %v4405 = vpack.c.b16 %v4017, %v4013
    %v4406 = vpack.c.b16 %v4018, %v4014
    %v4407 = vpack.c.b16 %v4019, %v4015
    %v4408 = vpack.c.b16 %v4020, %v4016
    %v4409 = vpack.c.b16 %v4025, %v4021
    %v4410 = vpack.c.b16 %v4026, %v4022
    %v4411 = vpack.c.b16 %v4027, %v4023
    %v4412 = vpack.c.b16 %v4028, %v4024
    %v4413 = vpack.c.b16 %v4033, %v4029
    %v4414 = vpack.c.b16 %v4034, %v4030
    %v4415 = vpack.c.b16 %v4035, %v4031
    %v4416 = vpack.c.b16 %v4036, %v4032
    %v4417 = vpack.c.b16 %v4041, %v4037
    %v4418 = vpack.c.b16 %v4042, %v4038
    %v4419 = vpack.c.b16 %v4043, %v4039
    %v4420 = vpack.c.b16 %v4044, %v4040
    %v4421 = vpack.c.b16 %v4049, %v4045
    %v4422 = vpack.c.b16 %v4050, %v4046
    %v4423 = vpack.c.b16 %v4051, %v4047
    %v4424 = vpack.c.b16 %v4052, %v4048
    %v4425 = vpack.c.b16 %v4057, %v4053
    %v4426 = vpack.c.b16 %v4058, %v4054
    %v4427 = vpack.c.b16 %v4059, %v4055
    %v4428 = vpack.c.b16 %v4060, %v4056
    %v4429 = vpack.c.b16 %v4065, %v4061
    %v4430 = vpack.c.b16 %v4066, %v4062
    %v4431 = vpack.c.b16 %v4067, %v4063
    %v4432 = vpack.c.b16 %v4068, %v4064
    %v4433 = vpack.c.b16 %v4073, %v4069
    %v4434 = vpack.c.b16 %v4074, %v4070
    %v4435 = vpack.c.b16 %v4075, %v4071
    %v4436 = vpack.c.b16 %v4076, %v4072
    %v4437 = vpack.c.b16 %v4081, %v4077
    %v4438 = vpack.c.b16 %v4082, %v4078
    %v4439 = vpack.c.b16 %v4083, %v4079
    %v4440 = vpack.c.b16 %v4084, %v4080
    %v4441 = vpack.c.b16 %v4089, %v4085
    %v4442 = vpack.c.b16 %v4090, %v4086
    %v4443 = vpack.c.b16 %v4091, %v4087
    %v4444 = vpack.c.b16 %v4092, %v4088
    %v4445 = vpack.c.b16 %v4097, %v4093
    %v4446 = vpack.c.b16 %v4098, %v4094
    %v4447 = vpack.c.b16 %v4099, %v4095
    %v4448 = vpack.c.b16 %v4100, %v4096
    %v4449 = vpack.c.b16 %v4105, %v4101
    %v4450 = vpack.c.b16 %v4106, %v4102
    %v4451 = vpack.c.b16 %v4107, %v4103
    %v4452 = vpack.c.b16 %v4108, %v4104
    %v4453 = vpack.c.b16 %v4113, %v4109
    %v4454 = vpack.c.b16 %v4114, %v4110
    %v4455 = vpack.c.b16 %v4115, %v4111
    %v4456 = vpack.c.b16 %v4116, %v4112
    %v4457 = vpack.c.b16 %v4121, %v4117
    %v4458 = vpack.c.b16 %v4122, %v4118
    %v4459 = vpack.c.b16 %v4123, %v4119
    %v4460 = vpack.c.b16 %v4124, %v4120
    %v4461 = vpack.c.b16 %v4129, %v4125
    %v4462 = vpack.c.b16 %v4130, %v4126
    %v4463 = vpack.c.b16 %v4131, %v4127
    %v4464 = vpack.c.b16 %v4132, %v4128
    %v4465 = vpack.c.b16 %v4137, %v4133
    %v4466 = vpack.c.b16 %v4138, %v4134
    %v4467 = vpack.c.b16 %v4139, %v4135
    %v4468 = vpack.c.b16 %v4140, %v4136
    %v4469 = vpack.c.b16 %v4145, %v4141
    %v4470 = vpack.c.b16 %v4146, %v4142
    %v4471 = vpack.c.b16 %v4147, %v4143
    %v4472 = vpack.c.b16 %v4148, %v4144
    %v4473 = vpack.c.b16 %v4153, %v4149
    %v4474 = vpack.c.b16 %v4154, %v4150
    %v4475 = vpack.c.b16 %v4155, %v4151
    %v4476 = vpack.c.b16 %v4156, %v4152
    %v4477 = vpack.c.b16 %v4161, %v4157
    %v4478 = vpack.c.b16 %v4162, %v4158
    %v4479 = vpack.c.b16 %v4163, %v4159
    %v4480 = vpack.c.b16 %v4164, %v4160
    %v4481 = vpack.c.b16 %v4169, %v4165
    %v4482 = vpack.c.b16 %v4170, %v4166
    %v4483 = vpack.c.b16 %v4171, %v4167
    %v4484 = vpack.c.b16 %v4172, %v4168
    %v4485 = vpack.c.b16 %v4177, %v4173
    %v4486 = vpack.c.b16 %v4178, %v4174
    %v4487 = vpack.c.b16 %v4179, %v4175
    %v4488 = vpack.c.b16 %v4180, %v4176
    %v4489 = vpack.c.b16 %v4185, %v4181
    %v4490 = vpack.c.b16 %v4186, %v4182
    %v4491 = vpack.c.b16 %v4187, %v4183
    %v4492 = vpack.c.b16 %v4188, %v4184
    %v4493 = vpack.c.b16 %v4193, %v4189
    %v4494 = vpack.c.b16 %v4194, %v4190
    %v4495 = vpack.c.b16 %v4195, %v4191
    %v4496 = vpack.c.b16 %v4196, %v4192
    %v4497 = vpack.c.b16 %v4201, %v4197
    %v4498 = vpack.c.b16 %v4202, %v4198
    %v4499 = vpack.c.b16 %v4203, %v4199
    %v4500 = vpack.c.b16 %v4204, %v4200
    %v4501 = vpack.c.b16 %v4209, %v4205
    %v4502 = vpack.c.b16 %v4210, %v4206
    %v4503 = vpack.c.b16 %v4211, %v4207
    %v4504 = vpack.c.b16 %v4212, %v4208
    %v4505 = vpack.c.b16 %v4217, %v4213
    %v4506 = vpack.c.b16 %v4218, %v4214
    %v4507 = vpack.c.b16 %v4219, %v4215
    %v4508 = vpack.c.b16 %v4220, %v4216
    %v4509 = vpack.c.b16 %v4225, %v4221
    %v4510 = vpack.c.b16 %v4226, %v4222
    %v4511 = vpack.c.b16 %v4227, %v4223
    %v4512 = vpack.c.b16 %v4228, %v4224
    %v4513 = vpack.c.b16 %v4233, %v4229
    %v4514 = vpack.c.b16 %v4234, %v4230
    %v4515 = vpack.c.b16 %v4235, %v4231
    %v4516 = vpack.c.b16 %v4236, %v4232
    %v4517 = vpack.c.b16 %v4241, %v4237
    %v4518 = vpack.c.b16 %v4242, %v4238
    %v4519 = vpack.c.b16 %v4243, %v4239
    %v4520 = vpack.c.b16 %v4244, %v4240
    %v4521 = vpack.c.b16 %v4249, %v4245
    %v4522 = vpack.c.b16 %v4250, %v4246
    %v4523 = vpack.c.b16 %v4251, %v4247
    %v4524 = vpack.c.b16 %v4252, %v4248
    %v4525 = vpack.c.b16 %v4257, %v4253
    %v4526 = vpack.c.b16 %v4258, %v4254
    %v4527 = vpack.c.b16 %v4259, %v4255
    %v4528 = vpack.c.b16 %v4260, %v4256
    %v4529 = vpack.c.b16 %v4265, %v4261
    %v4530 = vpack.c.b16 %v4266, %v4262
    %v4531 = vpack.c.b16 %v4267, %v4263
    %v4532 = vpack.c.b16 %v4268, %v4264
    %v4533 = vpack.c.b16 %v4273, %v4269
    %v4534 = vpack.c.b16 %v4274, %v4270
    %v4535 = vpack.c.b16 %v4275, %v4271
    %v4536 = vpack.c.b16 %v4276, %v4272
    %v4537 = vpack.c.b16 %v4281, %v4277
    %v4538 = vpack.c.b16 %v4282, %v4278
    %v4539 = vpack.c.b16 %v4283, %v4279
    %v4540 = vpack.c.b16 %v4284, %v4280
    %4797 = vmatprep.subr.bf16.mxu0 %v4286
    %4798 = vmatpush1.bf16.msra.mxu0 %v4285
    %4799 = vmatprep.subr.bf16.mxu0 %v4290
    %4800 = vmatpush1.bf16.msra.mxu0 %v4289
    %4801 = vmatprep.subr.bf16.mxu0 %v4294
    %4802 = vmatpush1.bf16.msra.mxu0 %v4293
    %4803 = vmatprep.subr.bf16.mxu0 %v4298
    %4804 = vmatpush1.bf16.msra.mxu0 %v4297
    %4805 = vmatprep.subr.bf16.mxu0 %v4302
    %4806 = vmatpush1.bf16.msra.mxu0 %v4301
    %4807 = vmatprep.subr.bf16.mxu0 %v4306
    %4808 = vmatpush1.bf16.msra.mxu0 %v4305
    %4809 = vmatprep.subr.bf16.mxu0 %v4310
    %4810 = vmatpush1.bf16.msra.mxu0 %v4309
    %4811 = vmatprep.subr.bf16.mxu0 %v4314
    %4812 = vmatpush1.bf16.msra.mxu0 %v4313
    %4813 = vmatprep.subr.bf16.mxu0 %v4318
    %4814 = vmatpush1.bf16.msra.mxu0 %v4317
    %4815 = vmatprep.subr.bf16.mxu0 %v4322
    %4816 = vmatpush1.bf16.msra.mxu0 %v4321
    %4817 = vmatprep.subr.bf16.mxu0 %v4326
    %4818 = vmatpush1.bf16.msra.mxu0 %v4325
    %4819 = vmatprep.subr.bf16.mxu0 %v4330
    %4820 = vmatpush1.bf16.msra.mxu0 %v4329
    %4821 = vmatprep.subr.bf16.mxu0 %v4334
    %4822 = vmatpush1.bf16.msra.mxu0 %v4333
    %4823 = vmatprep.subr.bf16.mxu0 %v4338
    %4824 = vmatpush1.bf16.msra.mxu0 %v4337
    %4825 = vmatprep.subr.bf16.mxu0 %v4342
    %4826 = vmatpush1.bf16.msra.mxu0 %v4341
    %4827 = vmatprep.subr.bf16.mxu0 %v4346
    %4828 = vmatpush1.bf16.msra.mxu0 %v4345
    %4829 = vmatprep.mubr.bf16.mxu0 %v3232
    %4830 = vmatmul.mubr.bf16.gmra.mrb[0].mxu0 %v3231
    %v4831 = vpop.f32.mrb[0].mxu0
    %v4832 = vadd.f32 %v3500, %v4831
    %v4833 = vpop.f32.mrb[0].mxu0
    %v4834 = vadd.f32 %v3504, %v4833
    %v4835 = vpop.f32.mrb[0].mxu0
    %v4836 = vpop.f32.mrb[0].mxu0
    %4837 = vdwg.mxu0
    %4838 = vmatprep.subr.bf16.mxu0 %v4350
    %4839 = vmatpush1.bf16.msra.mxu0 %v4349
    %4840 = vmatprep.subr.bf16.mxu0 %v4354
    %4841 = vmatpush1.bf16.msra.mxu0 %v4353
    %4842 = vmatprep.subr.bf16.mxu0 %v4358
    %4843 = vmatpush1.bf16.msra.mxu0 %v4357
    %4844 = vmatprep.subr.bf16.mxu0 %v4362
    %4845 = vmatpush1.bf16.msra.mxu0 %v4361
    %4846 = vmatprep.subr.bf16.mxu0 %v4366
    %4847 = vmatpush1.bf16.msra.mxu0 %v4365
    %4848 = vmatprep.subr.bf16.mxu0 %v4370
    %4849 = vmatpush1.bf16.msra.mxu0 %v4369
    %4850 = vmatprep.subr.bf16.mxu0 %v4374
    %4851 = vmatpush1.bf16.msra.mxu0 %v4373
    %4852 = vmatprep.subr.bf16.mxu0 %v4378
    %4853 = vmatpush1.bf16.msra.mxu0 %v4377
    %4854 = vmatprep.subr.bf16.mxu0 %v4382
    %4855 = vmatpush1.bf16.msra.mxu0 %v4381
    %4856 = vmatprep.subr.bf16.mxu0 %v4386
    %4857 = vmatpush1.bf16.msra.mxu0 %v4385
    %4858 = vmatprep.subr.bf16.mxu0 %v4390
    %4859 = vmatpush1.bf16.msra.mxu0 %v4389
    %4860 = vmatprep.subr.bf16.mxu0 %v4394
    %4861 = vmatpush1.bf16.msra.mxu0 %v4393
    %4862 = vmatprep.subr.bf16.mxu0 %v4398
    %4863 = vmatpush1.bf16.msra.mxu0 %v4397
    %4864 = vmatprep.subr.bf16.mxu0 %v4402
    %4865 = vmatpush1.bf16.msra.mxu0 %v4401
    %4866 = vmatprep.subr.bf16.mxu0 %v4406
    %4867 = vmatpush1.bf16.msra.mxu0 %v4405
    %4868 = vmatprep.subr.bf16.mxu0 %v4410
    %4869 = vmatpush1.bf16.msra.mxu0 %v4409
    %4870 = vmatprep.mubr.bf16.mxu0 %v3234
    %4871 = vmatmul.mubr.bf16.gmra.mrb[0].mxu0 %v3233
    %v4872 = vpop.f32.mrb[0].mxu0
    %v4873 = vadd.f32 %v4832, %v4872
    %v4874 = vpop.f32.mrb[0].mxu0
    %v4875 = vadd.f32 %v4834, %v4874
    %v4876 = vpop.f32.mrb[0].mxu0
    %v4877 = vpop.f32.mrb[0].mxu0
    %4878 = vdwg.mxu0
    %4879 = vmatprep.subr.bf16.mxu0 %v4414
    %4880 = vmatpush1.bf16.msra.mxu0 %v4413
    %4881 = vmatprep.subr.bf16.mxu0 %v4418
    %4882 = vmatpush1.bf16.msra.mxu0 %v4417
    %4883 = vmatprep.subr.bf16.mxu0 %v4422
    %4884 = vmatpush1.bf16.msra.mxu0 %v4421
    %4885 = vmatprep.subr.bf16.mxu0 %v4426
    %4886 = vmatpush1.bf16.msra.mxu0 %v4425
    %4887 = vmatprep.subr.bf16.mxu0 %v4430
    %4888 = vmatpush1.bf16.msra.mxu0 %v4429
    %4889 = vmatprep.subr.bf16.mxu0 %v4434
    %4890 = vmatpush1.bf16.msra.mxu0 %v4433
    %4891 = vmatprep.subr.bf16.mxu0 %v4438
    %4892 = vmatpush1.bf16.msra.mxu0 %v4437
    %4893 = vmatprep.subr.bf16.mxu0 %v4442
    %4894 = vmatpush1.bf16.msra.mxu0 %v4441
    %4895 = vmatprep.subr.bf16.mxu0 %v4446
    %4896 = vmatpush1.bf16.msra.mxu0 %v4445
    %4897 = vmatprep.subr.bf16.mxu0 %v4450
    %4898 = vmatpush1.bf16.msra.mxu0 %v4449
    %4899 = vmatprep.subr.bf16.mxu0 %v4454
    %4900 = vmatpush1.bf16.msra.mxu0 %v4453
    %4901 = vmatprep.subr.bf16.mxu0 %v4458
    %4902 = vmatpush1.bf16.msra.mxu0 %v4457
    %4903 = vmatprep.subr.bf16.mxu0 %v4462
    %4904 = vmatpush1.bf16.msra.mxu0 %v4461
    %4905 = vmatprep.subr.bf16.mxu0 %v4466
    %4906 = vmatpush1.bf16.msra.mxu0 %v4465
    %4907 = vmatprep.subr.bf16.mxu0 %v4470
    %4908 = vmatpush1.bf16.msra.mxu0 %v4469
    %4909 = vmatprep.subr.bf16.mxu0 %v4474
    %4910 = vmatpush1.bf16.msra.mxu0 %v4473
    %4911 = vmatprep.mubr.bf16.mxu0 %v3236
    %4912 = vmatmul.mubr.bf16.gmra.mrb[0].mxu0 %v3235
    %v4913 = vpop.f32.mrb[0].mxu0
    %v4914 = vadd.f32 %v4873, %v4913
    %v4915 = vpop.f32.mrb[0].mxu0
    %v4916 = vadd.f32 %v4875, %v4915
    %v4917 = vpop.f32.mrb[0].mxu0
    %v4918 = vpop.f32.mrb[0].mxu0
    %4919 = vdwg.mxu0
    %4920 = vmatprep.subr.bf16.mxu0 %v4478
    %4921 = vmatpush1.bf16.msra.mxu0 %v4477
    %4922 = vmatprep.subr.bf16.mxu0 %v4482
    %4923 = vmatpush1.bf16.msra.mxu0 %v4481
    %4924 = vmatprep.subr.bf16.mxu0 %v4486
    %4925 = vmatpush1.bf16.msra.mxu0 %v4485
    %4926 = vmatprep.subr.bf16.mxu0 %v4490
    %4927 = vmatpush1.bf16.msra.mxu0 %v4489
    %4928 = vmatprep.subr.bf16.mxu0 %v4494
    %4929 = vmatpush1.bf16.msra.mxu0 %v4493
    %4930 = vmatprep.subr.bf16.mxu0 %v4498
    %4931 = vmatpush1.bf16.msra.mxu0 %v4497
    %4932 = vmatprep.subr.bf16.mxu0 %v4502
    %4933 = vmatpush1.bf16.msra.mxu0 %v4501
    %4934 = vmatprep.subr.bf16.mxu0 %v4506
    %4935 = vmatpush1.bf16.msra.mxu0 %v4505
    %4936 = vmatprep.subr.bf16.mxu0 %v4510
    %4937 = vmatpush1.bf16.msra.mxu0 %v4509
    %4938 = vmatprep.subr.bf16.mxu0 %v4514
    %4939 = vmatpush1.bf16.msra.mxu0 %v4513
    %4940 = vmatprep.subr.bf16.mxu0 %v4518
    %4941 = vmatpush1.bf16.msra.mxu0 %v4517
    %4942 = vmatprep.subr.bf16.mxu0 %v4522
    %4943 = vmatpush1.bf16.msra.mxu0 %v4521
    %4944 = vmatprep.subr.bf16.mxu0 %v4526
    %4945 = vmatpush1.bf16.msra.mxu0 %v4525
    %4946 = vmatprep.subr.bf16.mxu0 %v4530
    %4947 = vmatpush1.bf16.msra.mxu0 %v4529
    %4948 = vmatprep.subr.bf16.mxu0 %v4534
    %4949 = vmatpush1.bf16.msra.mxu0 %v4533
    %4950 = vmatprep.subr.bf16.mxu0 %v4538
    %4951 = vmatpush1.bf16.msra.mxu0 %v4537
    %4952 = vmatprep.mubr.bf16.mxu0 %v3238
    %4953 = vmatmul.mubr.bf16.gmra.mrb[0].mxu0 %v3237
    %v4954 = vpop.f32.mrb[0].mxu0
    %v4955 = vadd.f32 %v4914, %v4954
    %v4956 = vpop.f32.mrb[0].mxu0
    %v4957 = vadd.f32 %v4916, %v4956
    %v4958 = vpop.f32.mrb[0].mxu0
    %v4959 = vpop.f32.mrb[0].mxu0
    %4960 = vdwg.mxu0
    %4961 = vmatprep.subr.bf16.mxu0 %v4288
    %4962 = vmatpush1.bf16.msra.mxu0 %v4287
    %4963 = vmatprep.subr.bf16.mxu0 %v4292
    %4964 = vmatpush1.bf16.msra.mxu0 %v4291
    %4965 = vmatprep.subr.bf16.mxu0 %v4296
    %4966 = vmatpush1.bf16.msra.mxu0 %v4295
    %4967 = vmatprep.subr.bf16.mxu0 %v4300
    %4968 = vmatpush1.bf16.msra.mxu0 %v4299
    %4969 = vmatprep.subr.bf16.mxu0 %v4304
    %4970 = vmatpush1.bf16.msra.mxu0 %v4303
    %4971 = vmatprep.subr.bf16.mxu0 %v4308
    %4972 = vmatpush1.bf16.msra.mxu0 %v4307
    %4973 = vmatprep.subr.bf16.mxu0 %v4312
    %4974 = vmatpush1.bf16.msra.mxu0 %v4311
    %4975 = vmatprep.subr.bf16.mxu0 %v4316
    %4976 = vmatpush1.bf16.msra.mxu0 %v4315
    %4977 = vmatprep.subr.bf16.mxu0 %v4320
    %4978 = vmatpush1.bf16.msra.mxu0 %v4319
    %4979 = vmatprep.subr.bf16.mxu0 %v4324
    %4980 = vmatpush1.bf16.msra.mxu0 %v4323
    %4981 = vmatprep.subr.bf16.mxu0 %v4328
    %4982 = vmatpush1.bf16.msra.mxu0 %v4327
    %4983 = vmatprep.subr.bf16.mxu0 %v4332
    %4984 = vmatpush1.bf16.msra.mxu0 %v4331
    %4985 = vmatprep.subr.bf16.mxu0 %v4336
    %4986 = vmatpush1.bf16.msra.mxu0 %v4335
    %4987 = vmatprep.subr.bf16.mxu0 %v4340
    %4988 = vmatpush1.bf16.msra.mxu0 %v4339
    %4989 = vmatprep.subr.bf16.mxu0 %v4344
    %4990 = vmatpush1.bf16.msra.mxu0 %v4343
    %4991 = vmatprep.subr.bf16.mxu0 %v4348
    %4992 = vmatpush1.bf16.msra.mxu0 %v4347
    %4993 = vmatprep.mubr.bf16.mxu0 %v3232
    %4994 = vmatmul.mubr.bf16.gmra.mrb[0].mxu0 %v3231
    %v4995 = vpop.f32.mrb[0].mxu0
    %v4996 = vadd.f32 %v3508, %v4995
    %v4997 = vpop.f32.mrb[0].mxu0
    %v4998 = vadd.f32 %v3512, %v4997
    %v4999 = vpop.f32.mrb[0].mxu0
    %v5000 = vpop.f32.mrb[0].mxu0
    %5001 = vdwg.mxu0
    %5002 = vmatprep.subr.bf16.mxu0 %v4352
    %5003 = vmatpush1.bf16.msra.mxu0 %v4351
    %5004 = vmatprep.subr.bf16.mxu0 %v4356
    %5005 = vmatpush1.bf16.msra.mxu0 %v4355
    %5006 = vmatprep.subr.bf16.mxu0 %v4360
    %5007 = vmatpush1.bf16.msra.mxu0 %v4359
    %5008 = vmatprep.subr.bf16.mxu0 %v4364
    %5009 = vmatpush1.bf16.msra.mxu0 %v4363
    %5010 = vmatprep.subr.bf16.mxu0 %v4368
    %5011 = vmatpush1.bf16.msra.mxu0 %v4367
    %5012 = vmatprep.subr.bf16.mxu0 %v4372
    %5013 = vmatpush1.bf16.msra.mxu0 %v4371
    %5014 = vmatprep.subr.bf16.mxu0 %v4376
    %5015 = vmatpush1.bf16.msra.mxu0 %v4375
    %5016 = vmatprep.subr.bf16.mxu0 %v4380
    %5017 = vmatpush1.bf16.msra.mxu0 %v4379
    %5018 = vmatprep.subr.bf16.mxu0 %v4384
    %5019 = vmatpush1.bf16.msra.mxu0 %v4383
    %5020 = vmatprep.subr.bf16.mxu0 %v4388
    %5021 = vmatpush1.bf16.msra.mxu0 %v4387
    %5022 = vmatprep.subr.bf16.mxu0 %v4392
    %5023 = vmatpush1.bf16.msra.mxu0 %v4391
    %5024 = vmatprep.subr.bf16.mxu0 %v4396
    %5025 = vmatpush1.bf16.msra.mxu0 %v4395
    %5026 = vmatprep.subr.bf16.mxu0 %v4400
    %5027 = vmatpush1.bf16.msra.mxu0 %v4399
    %5028 = vmatprep.subr.bf16.mxu0 %v4404
    %5029 = vmatpush1.bf16.msra.mxu0 %v4403
    %5030 = vmatprep.subr.bf16.mxu0 %v4408
    %5031 = vmatpush1.bf16.msra.mxu0 %v4407
    %5032 = vmatprep.subr.bf16.mxu0 %v4412
    %5033 = vmatpush1.bf16.msra.mxu0 %v4411
    %5034 = vmatprep.mubr.bf16.mxu0 %v3234
    %5035 = vmatmul.mubr.bf16.gmra.mrb[0].mxu0 %v3233
    %v5036 = vpop.f32.mrb[0].mxu0
    %v5037 = vadd.f32 %v4996, %v5036
    %v5038 = vpop.f32.mrb[0].mxu0
    %v5039 = vadd.f32 %v4998, %v5038
    %v5040 = vpop.f32.mrb[0].mxu0
    %v5041 = vpop.f32.mrb[0].mxu0
    %5042 = vdwg.mxu0
    %5043 = vmatprep.subr.bf16.mxu0 %v4416
    %5044 = vmatpush1.bf16.msra.mxu0 %v4415
    %5045 = vmatprep.subr.bf16.mxu0 %v4420
    %5046 = vmatpush1.bf16.msra.mxu0 %v4419
    %5047 = vmatprep.subr.bf16.mxu0 %v4424
    %5048 = vmatpush1.bf16.msra.mxu0 %v4423
    %5049 = vmatprep.subr.bf16.mxu0 %v4428
    %5050 = vmatpush1.bf16.msra.mxu0 %v4427
    %5051 = vmatprep.subr.bf16.mxu0 %v4432
    %5052 = vmatpush1.bf16.msra.mxu0 %v4431
    %5053 = vmatprep.subr.bf16.mxu0 %v4436
    %5054 = vmatpush1.bf16.msra.mxu0 %v4435
    %5055 = vmatprep.subr.bf16.mxu0 %v4440
    %5056 = vmatpush1.bf16.msra.mxu0 %v4439
    %5057 = vmatprep.subr.bf16.mxu0 %v4444
    %5058 = vmatpush1.bf16.msra.mxu0 %v4443
    %5059 = vmatprep.subr.bf16.mxu0 %v4448
    %5060 = vmatpush1.bf16.msra.mxu0 %v4447
    %5061 = vmatprep.subr.bf16.mxu0 %v4452
    %5062 = vmatpush1.bf16.msra.mxu0 %v4451
    %5063 = vmatprep.subr.bf16.mxu0 %v4456
    %5064 = vmatpush1.bf16.msra.mxu0 %v4455
    %5065 = vmatprep.subr.bf16.mxu0 %v4460
    %5066 = vmatpush1.bf16.msra.mxu0 %v4459
    %5067 = vmatprep.subr.bf16.mxu0 %v4464
    %5068 = vmatpush1.bf16.msra.mxu0 %v4463
    %5069 = vmatprep.subr.bf16.mxu0 %v4468
    %5070 = vmatpush1.bf16.msra.mxu0 %v4467
    %5071 = vmatprep.subr.bf16.mxu0 %v4472
    %5072 = vmatpush1.bf16.msra.mxu0 %v4471
    %5073 = vmatprep.subr.bf16.mxu0 %v4476
    %5074 = vmatpush1.bf16.msra.mxu0 %v4475
    %5075 = vmatprep.mubr.bf16.mxu0 %v3236
    %5076 = vmatmul.mubr.bf16.gmra.mrb[0].mxu0 %v3235
    %v5077 = vpop.f32.mrb[0].mxu0
    %v5078 = vadd.f32 %v5037, %v5077
    %v5079 = vpop.f32.mrb[0].mxu0
    %v5080 = vadd.f32 %v5039, %v5079
    %v5081 = vpop.f32.mrb[0].mxu0
    %v5082 = vpop.f32.mrb[0].mxu0
    %5083 = vdwg.mxu0
    %5084 = vmatprep.subr.bf16.mxu0 %v4480
    %5085 = vmatpush1.bf16.msra.mxu0 %v4479
    %5086 = vmatprep.subr.bf16.mxu0 %v4484
    %5087 = vmatpush1.bf16.msra.mxu0 %v4483
    %5088 = vmatprep.subr.bf16.mxu0 %v4488
    %5089 = vmatpush1.bf16.msra.mxu0 %v4487
    %5090 = vmatprep.subr.bf16.mxu0 %v4492
    %5091 = vmatpush1.bf16.msra.mxu0 %v4491
    %5092 = vmatprep.subr.bf16.mxu0 %v4496
    %5093 = vmatpush1.bf16.msra.mxu0 %v4495
    %5094 = vmatprep.subr.bf16.mxu0 %v4500
    %5095 = vmatpush1.bf16.msra.mxu0 %v4499
    %5096 = vmatprep.subr.bf16.mxu0 %v4504
    %5097 = vmatpush1.bf16.msra.mxu0 %v4503
    %5098 = vmatprep.subr.bf16.mxu0 %v4508
    %5099 = vmatpush1.bf16.msra.mxu0 %v4507
    %5100 = vmatprep.subr.bf16.mxu0 %v4512
    %5101 = vmatpush1.bf16.msra.mxu0 %v4511
    %5102 = vmatprep.subr.bf16.mxu0 %v4516
    %5103 = vmatpush1.bf16.msra.mxu0 %v4515
    %5104 = vmatprep.subr.bf16.mxu0 %v4520
    %5105 = vmatpush1.bf16.msra.mxu0 %v4519
    %5106 = vmatprep.subr.bf16.mxu0 %v4524
    %5107 = vmatpush1.bf16.msra.mxu0 %v4523
    %5108 = vmatprep.subr.bf16.mxu0 %v4528
    %5109 = vmatpush1.bf16.msra.mxu0 %v4527
    %5110 = vmatprep.subr.bf16.mxu0 %v4532
    %5111 = vmatpush1.bf16.msra.mxu0 %v4531
    %5112 = vmatprep.subr.bf16.mxu0 %v4536
    %5113 = vmatpush1.bf16.msra.mxu0 %v4535
    %5114 = vmatprep.subr.bf16.mxu0 %v4540
    %5115 = vmatpush1.bf16.msra.mxu0 %v4539
    %5116 = vmatprep.mubr.bf16.mxu0 %v3238
    %5117 = vmatmul.mubr.bf16.gmra.mrb[0].mxu0 %v3237
    %v5118 = vpop.f32.mrb[0].mxu0
    %v5119 = vadd.f32 %v5078, %v5118
    %v5120 = vpop.f32.mrb[0].mxu0
    %v5121 = vadd.f32 %v5080, %v5120
    %v5122 = vpop.f32.mrb[0].mxu0
    %v5123 = vpop.f32.mrb[0].mxu0
    %5124 = vdwg.mxu0
    %v5129 = vcombine.low %v2462, %v2464
    %v5130 = vcombine.low %v2626, %v2628
    %5133 = vst [vmem:[#allocation14] sm:$0xff] %v5129
    %5134 = vst [vmem:[#allocation14 + $0x8] sm:$0xff] %v5130
    %v5139 = vcombine.low %v4955, %v4957
    %v5140 = vcombine.low %v5119, %v5121
    %5143 = vst [vmem:[#allocation15] sm:$0xff] %v5139
    %5144 = vst [vmem:[#allocation15 + $0x8] sm:$0xff] %v5140
    %v5145 = vmul.f32 %v2462, %v2462
    %v5146 = vmul.f32 %v2464, %v2464
    %v5147 = vmul.f32 %v2626, %v2626
    %v5148 = vmul.f32 %v2628, %v2628
    %vm5149 = vcmask 1043456
    %v5150 = vsel %vm5149, %v5145, 0.0
    %v5151 = vsel %vm5149, %v5146, 0.0
    %v5152 = vadd.f32 %v5150, %v5151
    %v5153 = vsel %vm5149, %v5147, 0.0
    %v5154 = vadd.f32 %v5152, %v5153
    %v5155 = vsel %vm5149, %v5148, 0.0
    %v5156 = vadd.f32 %v5154, %v5155
    %5157 = vadd.xlane.f32.xlu0 %v5156
    %v5158 = vpop.xlane.xlu0 %5157
    %v5159 = vmax.f32 %v5158, 1e-24
    %v5160 = vrsqrt.pop %v5159
    %v5161 = vmul.f32 %v2462, %v5160
    %v5162 = vmul.f32 %v2464, %v5160
    %v5163 = vmul.f32 %v2626, %v5160
    %v5164 = vmul.f32 %v2628, %v5160
    %v5165 = vmul.f32 %v4955, %v4955
    %v5166 = vmul.f32 %v4957, %v4957
    %v5167 = vmul.f32 %v5119, %v5119
    %v5168 = vmul.f32 %v5121, %v5121
    %v5169 = vsel %vm5149, %v5165, 0.0
    %v5170 = vsel %vm5149, %v5166, 0.0
    %v5171 = vadd.f32 %v5169, %v5170
    %v5172 = vsel %vm5149, %v5167, 0.0
    %v5173 = vadd.f32 %v5171, %v5172
    %v5174 = vsel %vm5149, %v5168, 0.0
    %v5175 = vadd.f32 %v5173, %v5174
    %5176 = vadd.xlane.f32.xlu0 %v5175
    %v5177 = vpop.xlane.xlu0 %5176
    %v5178 = vmax.f32 %v5177, 1e-24
    %v5179 = vrsqrt.pop %v5178
    %v5180 = vmul.f32 %v4955, %v5179
    %v5181 = vmul.f32 %v4957, %v5179
    %v5182 = vmul.f32 %v5119, %v5179
    %v5183 = vmul.f32 %v5121, %v5179
    %v5184 = vld [vmem:[%s10] sm:$0xff]
    %v5185 = vld [vmem:[%s10 + $0x8] sm:$0xff]
    %v5186 = vld [vmem:[%s11] sm:$0xff]
    %v5187 = vld [vmem:[%s11 + $0x8] sm:$0xff]
    %v5188 = vmul.f32 %v5184, %v5184
    %v5189 = vmul.f32 %v5185, %v5185
    %v5192 = vcombine.high %v5188, %v5188
    %v5193 = vcombine.high %v5189, %v5189
    %v5196 = vsel %vm5149, %v5188, 0.0
    %v5197 = vsel %vm5149, %v5192, 0.0
    %v5198 = vadd.f32 %v5196, %v5197
    %v5199 = vsel %vm5149, %v5189, 0.0
    %v5200 = vadd.f32 %v5198, %v5199
    %v5201 = vsel %vm5149, %v5193, 0.0
    %v5202 = vadd.f32 %v5200, %v5201
    %5203 = vadd.xlane.f32.xlu0 %v5202
    %v5204 = vpop.xlane.xlu0 %5203
    %v5205 = vmax.f32 %v5204, 1e-24
    %v5206 = vrsqrt.pop %v5205
    %v5209 = vunpack.c.l.s4 839922192
    %v5210 = vunpack.c.0.s8 %v5209
    %v5211 = vlaneseq
    %v5212 = vshrl.u32 %v5211, 7
    %v5213 = vsub.s32 %v5210, %v5212
    %v5214 = vrot.slane %v5206, %v5213
    %v5216 = vmul.f32 %v5184, %v5214
    %v5217 = vmul.f32 %v5185, %v5214
    %v5218 = vmul.f32 %v5186, %v5186
    %v5219 = vmul.f32 %v5187, %v5187
    %v5222 = vcombine.high %v5218, %v5218
    %v5223 = vcombine.high %v5219, %v5219
    %v5226 = vsel %vm5149, %v5218, 0.0
    %v5227 = vsel %vm5149, %v5222, 0.0
    %v5228 = vadd.f32 %v5226, %v5227
    %v5229 = vsel %vm5149, %v5219, 0.0
    %v5230 = vadd.f32 %v5228, %v5229
    %v5231 = vsel %vm5149, %v5223, 0.0
    %v5232 = vadd.f32 %v5230, %v5231
    %5233 = vadd.xlane.f32.xlu0 %v5232
    %v5234 = vpop.xlane.xlu0 %5233
    %v5235 = vmax.f32 %v5234, 1e-24
    %v5236 = vrsqrt.pop %v5235
    %v5239 = vunpack.c.l.s4 839922192
    %v5240 = vunpack.c.0.s8 %v5239
    %v5241 = vlaneseq
    %v5242 = vshrl.u32 %v5241, 7
    %v5243 = vsub.s32 %v5240, %v5242
    %v5244 = vrot.slane %v5236, %v5243
    %v5246 = vmul.f32 %v5186, %v5244
    %v5247 = vmul.f32 %v5187, %v5244
    %v5250 = vcombine.high %v5216, %v5216
    %v5251 = vcombine.high %v5217, %v5217
    %v5254 = vsub.f32 %v5161, %v5216
    %v5255 = vsub.f32 %v5162, %v5250
    %v5256 = vsub.f32 %v5163, %v5217
    %v5257 = vsub.f32 %v5164, %v5251
    %v5258 = vmul.f32 %v5254, %v5254
    %v5259 = vmul.f32 %v5255, %v5255
    %v5260 = vmul.f32 %v5256, %v5256
    %v5261 = vmul.f32 %v5257, %v5257
    %v5262 = vsel %vm5149, %v5258, 0.0
    %v5263 = vsel %vm5149, %v5259, 0.0
    %v5264 = vadd.f32 %v5262, %v5263
    %v5265 = vsel %vm5149, %v5260, 0.0
    %v5266 = vadd.f32 %v5264, %v5265
    %v5267 = vsel %vm5149, %v5261, 0.0
    %v5268 = vadd.f32 %v5266, %v5267
    %5269 = vadd.xlane.f32.xlu0 %v5268
    %v5270 = vpop.xlane.xlu0 %5269
    %v5271 = vrot.slane %v5270, 4
    %v5272 = vadd.f32 %v5270, %v5271
    %v5273 = vrot.slane %v5272, 2
    %v5274 = vadd.f32 %v5272, %v5273
    %v5275 = vrot.slane %v5274, 1
    %v5276 = vadd.f32 %v5274, %v5275
    %s5277 = vtos %v5276
    %v5278 = vrcp.pop 2048.0
    %s5279 = vtos %v5278
    %s5280 = smul.f32 %s5277, %s5279
    %v5283 = vcombine.high %v5246, %v5246
    %v5284 = vcombine.high %v5247, %v5247
    %v5287 = vsub.f32 %v5180, %v5246
    %v5288 = vsub.f32 %v5181, %v5283
    %v5289 = vsub.f32 %v5182, %v5247
    %v5290 = vsub.f32 %v5183, %v5284
    %v5291 = vmul.f32 %v5287, %v5287
    %v5292 = vmul.f32 %v5288, %v5288
    %v5293 = vmul.f32 %v5289, %v5289
    %v5294 = vmul.f32 %v5290, %v5290
    %v5295 = vsel %vm5149, %v5291, 0.0
    %v5296 = vsel %vm5149, %v5292, 0.0
    %v5297 = vadd.f32 %v5295, %v5296
    %v5298 = vsel %vm5149, %v5293, 0.0
    %v5299 = vadd.f32 %v5297, %v5298
    %v5300 = vsel %vm5149, %v5294, 0.0
    %v5301 = vadd.f32 %v5299, %v5300
    %5302 = vadd.xlane.f32.xlu0 %v5301
    %v5303 = vpop.xlane.xlu0 %5302
    %v5304 = vrot.slane %v5303, 4
    %v5305 = vadd.f32 %v5303, %v5304
    %v5306 = vrot.slane %v5305, 2
    %v5307 = vadd.f32 %v5305, %v5306
    %v5308 = vrot.slane %v5307, 1
    %v5309 = vadd.f32 %v5307, %v5308
    %s5310 = vtos %v5309
    %v5311 = vrcp.pop 2048.0
    %s5312 = vtos %v5311
    %s5313 = smul.f32 %s5310, %s5312
    %v5314 = vld [vmem:[%s12] sm:$0xf]
    %5315 = vmatprep.subr.mxu0 %v5181
    %5316 = vmatpush1.xpose.msra.mxu0 %v5180
    %5317 = vmatprep.subr.mxu0 0.0
    %5318 = vmatpush1.xpose.msra.mxu0 0.0
    %5319 = vmatprep.subr.mxu0 0.0
    %5320 = vmatpush1.xpose.msra.mxu0 0.0
    %5321 = vmatprep.subr.mxu0 0.0
    %5322 = vmatpush1.xpose.msra.mxu0 0.0
    %5323 = vmatprep.subr.mxu0 0.0
    %5324 = vmatpush1.xpose.msra.mxu0 0.0
    %5325 = vmatprep.subr.mxu0 0.0
    %5326 = vmatpush1.xpose.msra.mxu0 0.0
    %5327 = vmatprep.subr.mxu0 0.0
    %5328 = vmatpush1.xpose.msra.mxu0 0.0
    %5329 = vmatprep.subr.mxu0 0.0
    %5330 = vmatpush1.xpose.msra.mxu0 0.0
    %5331 = vmatprep.subr.mxu0 0.0
    %5332 = vmatpush1.xpose.msra.mxu0 0.0
    %5333 = vmatprep.subr.mxu0 0.0
    %5334 = vmatpush1.xpose.msra.mxu0 0.0
    %5335 = vmatprep.subr.mxu0 0.0
    %5336 = vmatpush1.xpose.msra.mxu0 0.0
    %5337 = vmatprep.subr.mxu0 0.0
    %5338 = vmatpush1.xpose.msra.mxu0 0.0
    %5339 = vmatprep.subr.mxu0 0.0
    %5340 = vmatpush1.xpose.msra.mxu0 0.0
    %5341 = vmatprep.subr.mxu0 0.0
    %5342 = vmatpush1.xpose.msra.mxu0 0.0
    %5343 = vmatprep.subr.mxu0 0.0
    %5344 = vmatpush1.xpose.msra.mxu0 0.0
    %5345 = vmatprep.subr.mxu0 0.0
    %5346 = vmatpush1.xpose.msra.mxu0 0.0
    %5347 = vmatprep.subr.mxu0 0.0
    %5348 = vmatpush1.xpose.msra.mxu0 0.0
    %5349 = vmatprep.subr.mxu0 0.0
    %5350 = vmatpush1.xpose.msra.mxu0 0.0
    %5351 = vmatprep.subr.mxu0 0.0
    %5352 = vmatpush1.xpose.msra.mxu0 0.0
    %5353 = vmatprep.subr.mxu0 0.0
    %5354 = vmatpush1.xpose.msra.mxu0 0.0
    %5355 = vmatprep.subr.mxu0 0.0
    %5356 = vmatpush1.xpose.msra.mxu0 0.0
    %5357 = vmatprep.subr.mxu0 0.0
    %5358 = vmatpush1.xpose.msra.mxu0 0.0
    %5359 = vmatprep.subr.mxu0 0.0
    %5360 = vmatpush1.xpose.msra.mxu0 0.0
    %5361 = vmatprep.subr.mxu0 0.0
    %5362 = vmatpush1.xpose.msra.mxu0 0.0
    %5363 = vmatprep.subr.mxu0 0.0
    %5364 = vmatpush1.xpose.msra.mxu0 0.0
    %5365 = vmatprep.subr.mxu0 0.0
    %5366 = vmatpush1.xpose.msra.mxu0 0.0
    %5367 = vmatprep.subr.mxu0 0.0
    %5368 = vmatpush1.xpose.msra.mxu0 0.0
    %5369 = vmatprep.subr.mxu0 0.0
    %5370 = vmatpush1.xpose.msra.mxu0 0.0
    %5371 = vmatprep.subr.mxu0 0.0
    %5372 = vmatpush1.xpose.msra.mxu0 0.0
    %5373 = vmatprep.subr.mxu0 0.0
    %5374 = vmatpush1.xpose.msra.mxu0 0.0
    %5375 = vmatprep.subr.mxu0 0.0
    %5376 = vmatpush1.xpose.msra.mxu0 0.0
    %5377 = vmatprep.subr.mxu0 0.0
    %5378 = vmatpush1.xpose.msra.mxu0 0.0
    %5379 = vmatprep.mubr.f32.mxu0 %v5162
    %5380 = vmatmul.mubr.f32.gmra.mrb[0].mxu0 %v5161
    %v5381 = vpop.f32.mrb[0].mxu0
    %v5382 = vadd.f32 0.0, %v5381
    %v5383 = vpop.f32.mrb[0].mxu0
    %5384 = vdwg.mxu0
    %5385 = vmatprep.subr.mxu0 %v5183
    %5386 = vmatpush1.xpose.msra.mxu0 %v5182
    %5387 = vmatprep.subr.mxu0 0.0
    %5388 = vmatpush1.xpose.msra.mxu0 0.0
    %5389 = vmatprep.subr.mxu0 0.0
    %5390 = vmatpush1.xpose.msra.mxu0 0.0
    %5391 = vmatprep.subr.mxu0 0.0
    %5392 = vmatpush1.xpose.msra.mxu0 0.0
    %5393 = vmatprep.subr.mxu0 0.0
    %5394 = vmatpush1.xpose.msra.mxu0 0.0
    %5395 = vmatprep.subr.mxu0 0.0
    %5396 = vmatpush1.xpose.msra.mxu0 0.0
    %5397 = vmatprep.subr.mxu0 0.0
    %5398 = vmatpush1.xpose.msra.mxu0 0.0
    %5399 = vmatprep.subr.mxu0 0.0
    %5400 = vmatpush1.xpose.msra.mxu0 0.0
    %5401 = vmatprep.subr.mxu0 0.0
    %5402 = vmatpush1.xpose.msra.mxu0 0.0
    %5403 = vmatprep.subr.mxu0 0.0
    %5404 = vmatpush1.xpose.msra.mxu0 0.0
    %5405 = vmatprep.subr.mxu0 0.0
    %5406 = vmatpush1.xpose.msra.mxu0 0.0
    %5407 = vmatprep.subr.mxu0 0.0
    %5408 = vmatpush1.xpose.msra.mxu0 0.0
    %5409 = vmatprep.subr.mxu0 0.0
    %5410 = vmatpush1.xpose.msra.mxu0 0.0
    %5411 = vmatprep.subr.mxu0 0.0
    %5412 = vmatpush1.xpose.msra.mxu0 0.0
    %5413 = vmatprep.subr.mxu0 0.0
    %5414 = vmatpush1.xpose.msra.mxu0 0.0
    %5415 = vmatprep.subr.mxu0 0.0
    %5416 = vmatpush1.xpose.msra.mxu0 0.0
    %5417 = vmatprep.subr.mxu0 0.0
    %5418 = vmatpush1.xpose.msra.mxu0 0.0
    %5419 = vmatprep.subr.mxu0 0.0
    %5420 = vmatpush1.xpose.msra.mxu0 0.0
    %5421 = vmatprep.subr.mxu0 0.0
    %5422 = vmatpush1.xpose.msra.mxu0 0.0
    %5423 = vmatprep.subr.mxu0 0.0
    %5424 = vmatpush1.xpose.msra.mxu0 0.0
    %5425 = vmatprep.subr.mxu0 0.0
    %5426 = vmatpush1.xpose.msra.mxu0 0.0
    %5427 = vmatprep.subr.mxu0 0.0
    %5428 = vmatpush1.xpose.msra.mxu0 0.0
    %5429 = vmatprep.subr.mxu0 0.0
    %5430 = vmatpush1.xpose.msra.mxu0 0.0
    %5431 = vmatprep.subr.mxu0 0.0
    %5432 = vmatpush1.xpose.msra.mxu0 0.0
    %5433 = vmatprep.subr.mxu0 0.0
    %5434 = vmatpush1.xpose.msra.mxu0 0.0
    %5435 = vmatprep.subr.mxu0 0.0
    %5436 = vmatpush1.xpose.msra.mxu0 0.0
    %5437 = vmatprep.subr.mxu0 0.0
    %5438 = vmatpush1.xpose.msra.mxu0 0.0
    %5439 = vmatprep.subr.mxu0 0.0
    %5440 = vmatpush1.xpose.msra.mxu0 0.0
    %5441 = vmatprep.subr.mxu0 0.0
    %5442 = vmatpush1.xpose.msra.mxu0 0.0
    %5443 = vmatprep.subr.mxu0 0.0
    %5444 = vmatpush1.xpose.msra.mxu0 0.0
    %5445 = vmatprep.subr.mxu0 0.0
    %5446 = vmatpush1.xpose.msra.mxu0 0.0
    %5447 = vmatprep.subr.mxu0 0.0
    %5448 = vmatpush1.xpose.msra.mxu0 0.0
    %5449 = vmatprep.mubr.f32.mxu0 %v5164
    %5450 = vmatmul.mubr.f32.gmra.mrb[0].mxu0 %v5163
    %v5451 = vpop.f32.mrb[0].mxu0
    %v5452 = vadd.f32 %v5382, %v5451
    %v5453 = vpop.f32.mrb[0].mxu0
    %5454 = vdwg.mxu0
    %v5455 = vmul.f32 %v5452, 25.0
    %v5456 = vmul.f32 %v5314, 0.25
    %vm5457 = vcmask 27648
    %v5458 = vsel %vm5457, %v5455, -inf
    %5459 = vmax.xlane.f32.xlu0 %v5458
    %v5460 = vpop.xlane.xlu0 %5459
    %v5461 = vsub.f32 %v5455, %v5460
    %v5462 = vmul.f32 %v5461, 1.442695
    %v5463 = vpow.pop %v5462
    %v5464 = vsel %vm5457, %v5463, 0.0
    %5465 = vadd.xlane.f32.xlu0 %v5464
    %v5466 = vpop.xlane.xlu0 %5465
    %v5467 = vlog2.pop %v5466
    %v5468 = vmul.f32 %v5467, 0.6931472
    %v5469 = vsub.f32 %v5461, %v5468
    %v5470 = vsel %vm5457, %v5456, -inf
    %5471 = vmax.xlane.f32.xlu0 %v5470
    %v5472 = vpop.xlane.xlu0 %5471
    %v5473 = vsub.f32 %v5456, %v5472
    %v5474 = vmul.f32 %v5473, 1.442695
    %v5475 = vpow.pop %v5474
    %v5476 = vsel %vm5457, %v5475, 0.0
    %5477 = vadd.xlane.f32.xlu0 %v5476
    %v5478 = vpop.xlane.xlu0 %5477
    %v5479 = vlog2.pop %v5478
    %v5480 = vmul.f32 %v5479, 0.6931472
    %v5481 = vsub.f32 %v5473, %v5480
    %v5482 = vmul.f32 %v5481, 1.442695
    %v5483 = vpow.pop %v5482
    %v5484 = vsub.f32 %v5481, %v5469
    %v5485 = vmul.f32 %v5483, %v5484
    %v5486 = vsel %vm5457, %v5485, 0.0
    %5487 = vadd.xlane.f32.xlu0 %v5486
    %v5488 = vpop.xlane.xlu0 %5487
    %v5489 = vrot.slane %v5488, 4
    %v5490 = vadd.f32 %v5488, %v5489
    %v5491 = vrot.slane %v5490, 2
    %v5492 = vadd.f32 %v5490, %v5491
    %v5493 = vrot.slane %v5492, 1
    %v5494 = vadd.f32 %v5492, %v5493
    %s5495 = vtos %v5494
    %s5496 = smul.f32 %s5495, 4.0
    %v5497 = vlaneseq
    %v5498 = vand.u32 %v5497, 127
    %vm5499 = vcmp.eq.s32.totalorder %v5498, 0
    %v5500 = vstv %s5280
    %v5501 = vsel %vm5499, %v5500, 0.0
    %vm5502 = vcmp.eq.s32.totalorder %v5498, 1
    %v5503 = vstv %s5313
    %v5504 = vsel %vm5502, %v5503, 0.0
    %v5505 = vadd.f32 %v5501, %v5504
    %vm5506 = vcmp.eq.s32.totalorder %v5498, 2
    %v5507 = vstv %s5496
    %v5508 = vsel %vm5506, %v5507, 0.0
    %v5509 = vadd.f32 %v5505, %v5508
    %5510 = vst [vmem:[%s15] sm:$0x1] %v5509
    // Predicated region
    $region82: #{fused_kd_losses.1} parent=1 // pred_check
      _
    $region83: #{fused_kd_losses.1} parent=1 // pred_check_branch
      %5512 = sbr.rel (0) target = $region85
    $region84: #{fused_kd_losses.1} parent=1 // pred_region
      %s5514 = ssub.s32 256, 256
      %5515 = vsyncadd [#allocation4], %s5514
      %s5517 = sshll.u32 [#allocation14], 4
      %s5518 = int_to_ptr.vmem [resolvable:$true] %s5517
      %5520 = dma.vmem_to_hbm [thread:$0]  %s5518, 256, %s13, [#allocation4]
    $region85: #{fused_kd_losses.1} parent=1 // pred_fallthru
      _
    // Predicated region
    $region86: #{fused_kd_losses.1} parent=1 // pred_check
      _
    $region87: #{fused_kd_losses.1} parent=1 // pred_check_branch
      %5522 = sbr.rel (0) target = $region89
    $region88: #{fused_kd_losses.1} parent=1 // pred_region
      %s5524 = ssub.s32 256, 256
      %5525 = vsyncadd [#allocation16], %s5524
      %s5527 = sshll.u32 [#allocation15], 4
      %s5528 = int_to_ptr.vmem [resolvable:$true] %s5527
      %5530 = dma.vmem_to_hbm [thread:$0]  %s5528, 256, %s14, [#allocation16]
    $region89: #{fused_kd_losses.1} parent=1 // pred_fallthru
      _
    // Predicated region
    $region90: #{fused_kd_losses.1} parent=1 // pred_check
      _
    $region91: #{fused_kd_losses.1} parent=1 // pred_check_branch
      %5532 = sbr.rel (0) target = $region93
    $region92: #{fused_kd_losses.1} parent=1 // pred_region
      _
    $region93: #{fused_kd_losses.1} parent=1 // pred_fallthru
      _
    // Predicated region
    $region94: #{fused_kd_losses.1} parent=1 // pred_check
      _
    $region95: #{fused_kd_losses.1} parent=1 // pred_check_branch
      %5534 = sbr.rel (0) target = $region97
    $region96: #{fused_kd_losses.1} parent=1 // pred_region
      %5535 = dma.done [#allocation4], 256
    $region97: #{fused_kd_losses.1} parent=1 // pred_fallthru
      _
    // Predicated region
    $region98: #{fused_kd_losses.1} parent=1 // pred_check
      _
    $region99: #{fused_kd_losses.1} parent=1 // pred_check_branch
      %5537 = sbr.rel (0) target = $region101
    $region100: #{fused_kd_losses.1} parent=1 // pred_region
      %5538 = dma.done [#allocation16], 256
    $region101: #{fused_kd_losses.1} parent=1 // pred_fallthru
      _
    // Predicated region
    $region102: #{fused_kd_losses.1} parent=1 // pred_check
      _
    $region103: #{fused_kd_losses.1} parent=1 // pred_check_branch
      %5540 = sbr.rel (0) target = $region105
    $region104: #{fused_kd_losses.1} parent=1 // pred_region
      _
    $region105: #{fused_kd_losses.1} parent=1 // pred_fallthru
      _
    %5541 = vsyncpa [#allocation3], 1
    %5542 = vsyncpa [#allocation6], 1
    %5543 = vsyncpa [#allocation9], 1
    %5544 = vsyncpa [#allocation12], 1
    %5545 = vsyncpa [#allocation4], 1
    %5546 = vsyncpa [#allocation16], 1

</llo_original>
